<compile_context>
chip_gen: v5e
topology: v5e:2x2
jax: 0.10.0
libtpu: 0.0.40
codegen_flags: <defaults>
</compile_context>

<pallas_src>
import functools

import jax
import jax.numpy as jnp
from jax.experimental import pallas as pl
from jax.experimental.pallas import tpu as pltpu


def _sdpa_dropout_kernel(seed_ref, q_ref, k_ref, v_ref, o_ref, *,
                         scale, dropout_p, use_hw_prng):
    # Blocks are (G, S, D): G heads processed per grid step.
    G, S, D = q_ref.shape

    q = q_ref[...]
    if scale is not None:
        # Fold the scale into q (G*S*D elements) instead of the (G,S,S) scores.
        q = q * jnp.float32(scale)
    qb = q.astype(jnp.bfloat16)
    kb = k_ref[...].astype(jnp.bfloat16)

    # scores: batched q @ k^T on the MXU, bf16 operands, f32 accumulation;
    # contraction over the last dims so no explicit transpose of k.
    s = jnp.einsum("gqd,gkd->gqk", qb, kb, preferred_element_type=jnp.float32)

    # Numerically-stable *unnormalized* softmax; the 1/denom (and the dropout
    # 1/(1-p)) are applied once on the (G,S,D) output instead of the (G,S,S)
    # score block.
    m = jnp.max(s, axis=-1, keepdims=True)
    e = jnp.exp(s - m)                       # (G, S, S), values in [0, 1]
    denom = jnp.sum(e, axis=-1, keepdims=True)

    if dropout_p > 0.0:
        # keep-probability = 1 - p : uniform signed int32 >= thresh, with
        # thresh = round(p * 2^32) - 2^31.
        thresh = int(round(dropout_p * 4294967296.0)) - 2147483648
        thresh = max(-2147483648, min(2147483647, thresh))
        if use_hw_prng:
            # Hardware PRNG: one instruction per vreg of bits (VALU stays free).
            pltpu.prng_seed(seed_ref[0] + pl.program_id(0))
            bits = pltpu.prng_random_bits(e.shape)
            if bits.dtype != jnp.int32:
                bits = pltpu.bitcast(bits, jnp.int32)
        else:
            # Portable stateless counter-hash fallback (interpret / non-TPU).
            base = pl.program_id(0) * G
            gi = jax.lax.broadcasted_iota(jnp.int32, e.shape, 0) + base
            ri = jax.lax.broadcasted_iota(jnp.int32, e.shape, 1)
            ci = jax.lax.broadcasted_iota(jnp.int32, e.shape, 2)
            x = (((gi * S + ri) * S + ci) * jnp.int32(0x27D4EB2D)
                 + seed_ref[0] * jnp.int32(0x68E31DA5))
            x = x ^ ((x >> 15) & jnp.int32(0x0001FFFF))
            x = x * jnp.int32(0x7FEB352D)
            x = x ^ ((x >> 16) & jnp.int32(0x0000FFFF))
            bits = x
        keep = bits >= jnp.int32(thresh)
        e = jnp.where(keep, e, jnp.float32(0.0))

    # Second matmul also with bf16 operands, f32 accumulation.
    out = jnp.einsum("gqk,gkd->gqd", e.astype(jnp.bfloat16),
                     v_ref[...].astype(jnp.bfloat16),
                     preferred_element_type=jnp.float32)

    # Deferred normalization: one multiply on the (G,S,D) output.
    # NOTE: approx reciprocal -> softmax rows don't sum to exactly 1 (error
    # well inside the test tolerance).
    scale_vec = pl.reciprocal(denom, approx=True)            # (G, S, 1)
    if dropout_p > 0.0:
        scale_vec = scale_vec * jnp.float32(1.0 / (1.0 - dropout_p))
    o_ref[...] = (out * scale_vec).astype(o_ref.dtype)


def _on_tpu():
    try:
        return jax.devices()[0].platform == "tpu"
    except Exception:
        return False


def _default_heads_per_step(bh):
    """v5e/v6e (1 TensorCore): one grid step for the whole batch*heads.
    v7x (2 TensorCores): keep >=2 grid steps so both cores get work."""
    try:
        kind = jax.devices()[0].device_kind.lower()
    except Exception:
        kind = ""
    n_tc = 2 if "v7" in kind else 1
    return max(1, bh // n_tc)


def _pick_group(bh, max_g):
    g = max(1, min(bh, max_g))
    while bh % g:
        g -= 1
    return g


def sdpa_dropout(q, k, v, scale_factor=None, dropout_p=0.1, seed=0,
                 heads_per_step=None):
    """Matches Model.forward(q, k, v, scale_factor).  Dropout is training-mode
    (F.dropout default): Bernoulli(1-p) mask scaled by 1/(1-p); the random
    stream differs from torch's (and depends on the head grouping)."""
    B, H, S, D = q.shape
    BH = B * H

    if dropout_p >= 1.0:          # F.dropout(p=1.0) zeroes everything
        return jnp.zeros_like(q)

    qf = q.reshape(BH, S, D)
    kf = k.reshape(BH, S, D)
    vf = v.reshape(BH, S, D)

    if heads_per_step is None:
        heads_per_step = _default_heads_per_step(BH)
    G = _pick_group(BH, heads_per_step)
    n_steps = BH // G

    kernel = functools.partial(_sdpa_dropout_kernel,
                               scale=scale_factor,
                               dropout_p=float(dropout_p),
                               use_hw_prng=_on_tpu())

    blk = lambda i, seed_ref: (i, 0, 0)

    itemsize = jnp.dtype(q.dtype).itemsize
    cost = pl.CostEstimate(
        flops=4 * BH * S * S * D,                 # two matmuls
        transcendentals=BH * S * S,               # exp in softmax
        bytes_accessed=4 * BH * S * D * itemsize, # q, k, v, out
    )

    out = pl.pallas_call(
        kernel,
        out_shape=jax.ShapeDtypeStruct((BH, S, D), q.dtype),
        grid_spec=pltpu.PrefetchScalarGridSpec(
            num_scalar_prefetch=1,
            grid=(n_steps,),
            in_specs=[pl.BlockSpec((G, S, D), blk),
                      pl.BlockSpec((G, S, D), blk),
                      pl.BlockSpec((G, S, D), blk)],
            out_specs=pl.BlockSpec((G, S, D), blk),
        ),
        compiler_params=pltpu.CompilerParams(
            # >1 step only happens on multi-TC chips; steps are independent
            # (per-step re-seeded PRNG), so let them shard across cores.
            dimension_semantics=("parallel",) if n_steps > 1 else ("arbitrary",)),
        cost_estimate=cost,
    )(jnp.array([seed], jnp.int32), qf, kf, vf)

    return out.reshape(B, H, S, D)


def _reference_no_dropout(q, k, v, scale_factor=None):
    # Reference with the same bf16-operand / f32-accumulate rounding as the
    # kernel, so the comparison isolates kernel bugs rather than bf16 rounding.
    if scale_factor is not None:
        q = q * scale_factor
    s = jnp.einsum("bhqd,bhkd->bhqk",
                   q.astype(jnp.bfloat16), k.astype(jnp.bfloat16),
                   preferred_element_type=jnp.float32)
    p = jax.nn.softmax(s, axis=-1)
    return jnp.einsum("bhqk,bhkd->bhqd",
                      p.astype(jnp.bfloat16), v.astype(jnp.bfloat16),
                      preferred_element_type=jnp.float32)


if __name__ == "__main__":
    # Shapes taken from the module spec: q, k, v = (1, 16, 64, 64).
    B, H, S, D = 1, 16, 64, 64
    key = jax.random.PRNGKey(0)
    kq, kk, kv = jax.random.split(key, 3)
    q = jax.random.normal(kq, (B, H, S, D), dtype=jnp.float32)
    k = jax.random.normal(kk, (B, H, S, D), dtype=jnp.float32)
    v = jax.random.normal(kv, (B, H, S, D), dtype=jnp.float32)

    # Deterministic correctness checks (dropout disabled), with and without a
    # scale factor.  Tolerance accounts for approx-reciprocal + deferred
    # normalization order (operand rounding is matched in the reference).
    out_nodrop = sdpa_dropout(q, k, v, scale_factor=None, dropout_p=0.0)
    ref = _reference_no_dropout(q, k, v, scale_factor=None)
    jax.block_until_ready(out_nodrop)
    assert jnp.allclose(out_nodrop, ref, atol=2e-2, rtol=2e-2), \
        "mismatch vs reference (no scale)"

    sc = 1.0 / (D ** 0.5)
    out_scaled = sdpa_dropout(q, k, v, scale_factor=sc, dropout_p=0.0)
    ref_scaled = _reference_no_dropout(q, k, v, scale_factor=sc)
    jax.block_until_ready(out_scaled)
    assert jnp.allclose(out_scaled, ref_scaled, atol=2e-2, rtol=2e-2), \
        "mismatch vs reference (scaled)"

    # Full forward pass with dropout_p=0.1 (training-mode dropout semantics).
    out = sdpa_dropout(q, k, v, scale_factor=None, dropout_p=0.1, seed=42)
    out = jax.block_until_ready(out)
    assert out.shape == (B, H, S, D)
    assert bool(jnp.all(jnp.isfinite(out)))

    print("KERNEL_OK")
</pallas_src>

<mosaic_0001>
module attributes {stable_mosaic.version = 11 : i64} {
  func.func @_sdpa_dropout_kernel(%arg0: i32, %arg1: memref<1xi32, #tpu.memory_space<smem>>, %arg2: memref<16x64x64xf32, #tpu.memory_space<vmem>>, %arg3: memref<16x64x64xf32, #tpu.memory_space<vmem>>, %arg4: memref<16x64x64xf32, #tpu.memory_space<vmem>>, %arg5: memref<16x64x64xf32, #tpu.memory_space<vmem>>) attributes {dimension_semantics = [#tpu.dimension_semantics<arbitrary>], iteration_bounds = array<i64: 1>, scalar_prefetch = 1 : i64, scratch_operands = 0 : i64, tpu.core_type = #tpu.core_type<tc>, window_params = [{transform_indices = @transform_0, window_bounds = array<i64: 16, 64, 64>}, {transform_indices = @transform_1, window_bounds = array<i64: 16, 64, 64>}, {transform_indices = @transform_2, window_bounds = array<i64: 16, 64, 64>}, {transform_indices = @transform_3, window_bounds = array<i64: 16, 64, 64>}]} {
    %c0 = arith.constant 0 : index
    %c0_0 = arith.constant 0 : index
    %c0_1 = arith.constant 0 : index
    %0 = vector.load %arg2[%c0, %c0_0, %c0_1] : memref<16x64x64xf32, #tpu.memory_space<vmem>>, vector<16x64x64xf32>
    %1 = arith.truncf %0 : vector<16x64x64xf32> to vector<16x64x64xbf16>
    %c0_2 = arith.constant 0 : index
    %c0_3 = arith.constant 0 : index
    %c0_4 = arith.constant 0 : index
    %2 = vector.load %arg3[%c0_2, %c0_3, %c0_4] : memref<16x64x64xf32, #tpu.memory_space<vmem>>, vector<16x64x64xf32>
    %3 = arith.truncf %2 : vector<16x64x64xf32> to vector<16x64x64xbf16>
    "tpu.trace_start"() <{level = 10 : i32, message = "gqd,gkd->gqk"}> : () -> ()
    %cst = arith.constant dense<0.000000e+00> : vector<16x64x64xf32>
    %4 = tpu.matmul %1, %3, %cst {dimension_numbers = #tpu.dot_dimension_numbers<[2], [2], [1], [1], [0, 0, 0, 1, 1, 1], [0], [0]>} : vector<16x64x64xbf16>, vector<16x64x64xbf16>, vector<16x64x64xf32> -> vector<16x64x64xf32>
    "tpu.trace_stop"() : () -> ()
    %cst_5 = arith.constant dense<0xFF800000> : vector<16x64xf32>
    %5 = vector.multi_reduction <maximumf>, %4, %cst_5 [2] : vector<16x64x64xf32> to vector<16x64xf32>
    %6 = vector.shape_cast %5 : vector<16x64xf32> to vector<16x64x1xf32>
    %7 = vector.broadcast %6 : vector<16x64x1xf32> to vector<16x64x64xf32>
    %8 = arith.subf %4, %7 : vector<16x64x64xf32>
    %9 = math.exp %8 : vector<16x64x64xf32>
    %cst_6 = arith.constant dense<0.000000e+00> : vector<16x64xf32>
    %10 = vector.multi_reduction <add>, %9, %cst_6 [2] : vector<16x64x64xf32> to vector<16x64xf32>
    %11 = vector.shape_cast %10 : vector<16x64xf32> to vector<16x64x1xf32>
    %12 = arith.truncf %9 : vector<16x64x64xf32> to vector<16x64x64xbf16>
    %c0_7 = arith.constant 0 : index
    %c0_8 = arith.constant 0 : index
    %c0_9 = arith.constant 0 : index
    %13 = vector.load %arg4[%c0_7, %c0_8, %c0_9] : memref<16x64x64xf32, #tpu.memory_space<vmem>>, vector<16x64x64xf32>
    %14 = arith.truncf %13 : vector<16x64x64xf32> to vector<16x64x64xbf16>
    "tpu.trace_start"() <{level = 10 : i32, message = "gqk,gkd->gqd"}> : () -> ()
    %cst_10 = arith.constant dense<0.000000e+00> : vector<16x64x64xf32>
    %15 = tpu.matmul %12, %14, %cst_10 {dimension_numbers = #tpu.dot_dimension_numbers<[2], [1], [1], [2], [0, 0, 0, 1, 1, 2], [0], [0]>} : vector<16x64x64xbf16>, vector<16x64x64xbf16>, vector<16x64x64xf32> -> vector<16x64x64xf32>
    "tpu.trace_stop"() : () -> ()
    %16 = tpu.reciprocal %11 {approx = true} : vector<16x64x1xf32> -> vector<16x64x1xf32>
    %17 = vector.broadcast %16 : vector<16x64x1xf32> to vector<16x64x64xf32>
    %18 = arith.mulf %15, %17 : vector<16x64x64xf32>
    %c0_11 = arith.constant 0 : index
    %c0_12 = arith.constant 0 : index
    %c0_13 = arith.constant 0 : index
    %19 = vector.load %arg5[%c0_11, %c0_12, %c0_13] : memref<16x64x64xf32, #tpu.memory_space<vmem>>, vector<16x64x64xf32>
    tpu.vector_store %arg5[%c0_11, %c0_12, %c0_13], %18 {strides = array<i32>} : memref<16x64x64xf32, #tpu.memory_space<vmem>>, vector<16x64x64xf32>,
    return
  }
  func.func @transform_0(%arg0: i32, %arg1: memref<1xi32, #tpu.memory_space<smem>>) -> (i32, i32, i32) {
    %c0_i32 = arith.constant 0 : i32
    %c0_i32_0 = arith.constant 0 : i32
    %c0_i32_1 = arith.constant 0 : i32
    return %arg0, %c0_i32, %c0_i32_0 : i32, i32, i32
  }
  func.func @transform_1(%arg0: i32, %arg1: memref<1xi32, #tpu.memory_space<smem>>) -> (i32, i32, i32) {
    %c0_i32 = arith.constant 0 : i32
    %c0_i32_0 = arith.constant 0 : i32
    %c0_i32_1 = arith.constant 0 : i32
    return %arg0, %c0_i32, %c0_i32_0 : i32, i32, i32
  }
  func.func @transform_2(%arg0: i32, %arg1: memref<1xi32, #tpu.memory_space<smem>>) -> (i32, i32, i32) {
    %c0_i32 = arith.constant 0 : i32
    %c0_i32_0 = arith.constant 0 : i32
    %c0_i32_1 = arith.constant 0 : i32
    return %arg0, %c0_i32, %c0_i32_0 : i32, i32, i32
  }
  func.func @transform_3(%arg0: i32, %arg1: memref<1xi32, #tpu.memory_space<smem>>) -> (i32, i32, i32) {
    %c0_i32 = arith.constant 0 : i32
    %c0_i32_0 = arith.constant 0 : i32
    %c0_i32_1 = arith.constant 0 : i32
    return %arg0, %c0_i32, %c0_i32_0 : i32, i32, i32
  }
}

</mosaic_0001>

<llo_original>
// kernel: tpu_custom_call.1
$region0: #{tpu_custom_call.1}
  #allocation0 [shape = 'u32[]', space=smem, size = 0x4, offset = 0x4, fixed_abs, tag = 'smem constant byte address 0x4 - core index']
  #allocation1 [shape = 'u32[72,128]{1,0:T(1,128)}', space=vmem, size = 0x9000, scoped, tag = 'internal scratch']
  #allocation2 [shape = 's32[1]{0}', space=sflag, size = 0x4, scoped, tag = 'scoped memory for tpu_custom_call.1']
  #allocation3 [shape = 's32[1]{0:T(128)S(6)}', space=smem, size = 0x200, scoped, tag = 'prefetched SMEM operand 0']
  %s0 = inlined_call_operand.<no memory space> [shape: s32[1], index: 0, kind: input, shape index: {}]
  %s1 = inlined_call_operand.hbm [shape: f32[16,64,64], index: 1, kind: input, shape index: {}]
  %s2 = inlined_call_operand.hbm [shape: f32[16,64,64], index: 2, kind: input, shape index: {}]
  %s3 = inlined_call_operand.hbm [shape: f32[16,64,64], index: 3, kind: input, shape index: {}]
  %s4 = inlined_call_operand.hbm [shape: f32[16,64,64], index: 4, kind: output, shape index: {}]
  %s5 = sld [smem:[#allocation0]]
  $region34: #{tpu_custom_call.1} parent=0
    _
  %s7 = ssub.s32 1, %s5
  %s8 = scalar_select 0, %s7, %s5
  %9 = sst [smem:[#allocation3]] %s0
  $region1: #{tpu_custom_call.1} parent=0
    #allocation4 [shape = 'u8[524288]{0}', space=vmem, size = 0x80000, scoped, tag = 'input window, operand 1, single buffered']
    #allocation5 [shape = 's32[1]{0}', space=sflag, size = 0x4, scoped, tag = 'scoped memory for tpu_custom_call.1']
    #allocation6 [shape = 's32[1]{0}', space=sflag, size = 0x4, scoped, tag = 'scoped memory for tpu_custom_call.1']
    #allocation7 [shape = 'u8[524288]{0}', space=vmem, size = 0x80000, scoped, tag = 'input window, operand 2, single buffered']
    #allocation8 [shape = 's32[1]{0}', space=sflag, size = 0x4, scoped, tag = 'scoped memory for tpu_custom_call.1']
    #allocation9 [shape = 'u8[524288]{0}', space=vmem, size = 0x80000, scoped, tag = 'input window, operand 3, single buffered']
    #allocation10 [shape = 'u8[524288]{0}', space=vmem, size = 0x80000, scoped, tag = 'output window, operand 0, single buffered']
    %10 = vsyncpa [#allocation5], 0
    %11 = vsyncpa [#allocation8], 0
    %12 = vsyncpa [#allocation6], 0
    // Predicated region
    $region2: #{tpu_custom_call.1} parent=1 // pred_check
      _
    $region3: #{tpu_custom_call.1} parent=1 // pred_check_branch
      %14 = sbr.rel (0) target = $region5
    $region4: #{tpu_custom_call.1} parent=1 // pred_region
      %16 = vsyncadd [#allocation5], 0
      %s17 = sshll.u32 %s1, 4
      %s18 = int_to_ptr.hbm [resolvable:$true] %s17
      %s19 = sshll.u32 [#allocation4], 4
      %s20 = int_to_ptr.vmem [resolvable:$true] %s19
      %25 = dma.hbm_to_vmem [thread:$0]  %s18, 16384, %s20, [#allocation5], 128, 128, 8
    $region5: #{tpu_custom_call.1} parent=1 // pred_fallthru
      _
    // Predicated region
    $region6: #{tpu_custom_call.1} parent=1 // pred_check
      _
    $region7: #{tpu_custom_call.1} parent=1 // pred_check_branch
      %27 = sbr.rel (0) target = $region9
    $region8: #{tpu_custom_call.1} parent=1 // pred_region
      %29 = vsyncadd [#allocation8], 0
      %s30 = sshll.u32 %s2, 4
      %s31 = int_to_ptr.hbm [resolvable:$true] %s30
      %s32 = sshll.u32 [#allocation7], 4
      %s33 = int_to_ptr.vmem [resolvable:$true] %s32
      %38 = dma.hbm_to_vmem [thread:$0]  %s31, 16384, %s33, [#allocation8], 128, 128, 8
    $region9: #{tpu_custom_call.1} parent=1 // pred_fallthru
      _
    // Predicated region
    $region10: #{tpu_custom_call.1} parent=1 // pred_check
      _
    $region11: #{tpu_custom_call.1} parent=1 // pred_check_branch
      %40 = sbr.rel (0) target = $region13
    $region12: #{tpu_custom_call.1} parent=1 // pred_region
      %42 = vsyncadd [#allocation8], 0
      %s43 = sshll.u32 %s3, 4
      %s44 = int_to_ptr.hbm [resolvable:$true] %s43
      %s45 = sshll.u32 [#allocation9], 4
      %s46 = int_to_ptr.vmem [resolvable:$true] %s45
      %51 = dma.hbm_to_vmem [thread:$0]  %s44, 16384, %s46, [#allocation8], 128, 128, 8
    $region13: #{tpu_custom_call.1} parent=1 // pred_fallthru
      _
    // Predicated region
    $region14: #{tpu_custom_call.1} parent=1 // pred_check
      _
    $region15: #{tpu_custom_call.1} parent=1 // pred_check_branch
      %53 = sbr.rel (0) target = $region17
    $region16: #{tpu_custom_call.1} parent=1 // pred_region
      %55 = dma.done [#allocation5], 16384
    $region17: #{tpu_custom_call.1} parent=1 // pred_fallthru
      _
    // Predicated region
    $region18: #{tpu_custom_call.1} parent=1 // pred_check
      _
    $region19: #{tpu_custom_call.1} parent=1 // pred_check_branch
      %57 = sbr.rel (0) target = $region21
    $region20: #{tpu_custom_call.1} parent=1 // pred_region
      %59 = dma.done [#allocation8], 16384
    $region21: #{tpu_custom_call.1} parent=1 // pred_fallthru
      _
    // Predicated region
    $region22: #{tpu_custom_call.1} parent=1 // pred_check
      _
    $region23: #{tpu_custom_call.1} parent=1 // pred_check_branch
      %61 = sbr.rel (0) target = $region25
    $region24: #{tpu_custom_call.1} parent=1 // pred_region
      %63 = dma.done [#allocation8], 16384
    $region25: #{tpu_custom_call.1} parent=1 // pred_fallthru
      _
    %v65 = vld [vmem:[#allocation4] sm:$0xff]
    %v66 = vld [vmem:[#allocation4 + $0x8] sm:$0xff]
    %v67 = vld [vmem:[#allocation4 + $0x10] sm:$0xff]
    %v68 = vld [vmem:[#allocation4 + $0x18] sm:$0xff]
    %v69 = vld [vmem:[#allocation4 + $0x20] sm:$0xff]
    %v70 = vld [vmem:[#allocation4 + $0x28] sm:$0xff]
    %v71 = vld [vmem:[#allocation4 + $0x30] sm:$0xff]
    %v72 = vld [vmem:[#allocation4 + $0x38] sm:$0xff]
    %v73 = vld [vmem:[#allocation4 + $0x40] sm:$0xff]
    %v74 = vld [vmem:[#allocation4 + $0x48] sm:$0xff]
    %v75 = vld [vmem:[#allocation4 + $0x50] sm:$0xff]
    %v76 = vld [vmem:[#allocation4 + $0x58] sm:$0xff]
    %v77 = vld [vmem:[#allocation4 + $0x60] sm:$0xff]
    %v78 = vld [vmem:[#allocation4 + $0x68] sm:$0xff]
    %v79 = vld [vmem:[#allocation4 + $0x70] sm:$0xff]
    %v80 = vld [vmem:[#allocation4 + $0x78] sm:$0xff]
    %v81 = vld [vmem:[#allocation4 + $0x80] sm:$0xff]
    %v82 = vld [vmem:[#allocation4 + $0x88] sm:$0xff]
    %v83 = vld [vmem:[#allocation4 + $0x90] sm:$0xff]
    %v84 = vld [vmem:[#allocation4 + $0x98] sm:$0xff]
    %v85 = vld [vmem:[#allocation4 + $0xa0] sm:$0xff]
    %v86 = vld [vmem:[#allocation4 + $0xa8] sm:$0xff]
    %v87 = vld [vmem:[#allocation4 + $0xb0] sm:$0xff]
    %v88 = vld [vmem:[#allocation4 + $0xb8] sm:$0xff]
    %v89 = vld [vmem:[#allocation4 + $0xc0] sm:$0xff]
    %v90 = vld [vmem:[#allocation4 + $0xc8] sm:$0xff]
    %v91 = vld [vmem:[#allocation4 + $0xd0] sm:$0xff]
    %v92 = vld [vmem:[#allocation4 + $0xd8] sm:$0xff]
    %v93 = vld [vmem:[#allocation4 + $0xe0] sm:$0xff]
    %v94 = vld [vmem:[#allocation4 + $0xe8] sm:$0xff]
    %v95 = vld [vmem:[#allocation4 + $0xf0] sm:$0xff]
    %v96 = vld [vmem:[#allocation4 + $0xf8] sm:$0xff]
    %v97 = vld [vmem:[#allocation4 + $0x100] sm:$0xff]
    %v98 = vld [vmem:[#allocation4 + $0x108] sm:$0xff]
    %v99 = vld [vmem:[#allocation4 + $0x110] sm:$0xff]
    %v100 = vld [vmem:[#allocation4 + $0x118] sm:$0xff]
    %v101 = vld [vmem:[#allocation4 + $0x120] sm:$0xff]
    %v102 = vld [vmem:[#allocation4 + $0x128] sm:$0xff]
    %v103 = vld [vmem:[#allocation4 + $0x130] sm:$0xff]
    %v104 = vld [vmem:[#allocation4 + $0x138] sm:$0xff]
    %v105 = vld [vmem:[#allocation4 + $0x140] sm:$0xff]
    %v106 = vld [vmem:[#allocation4 + $0x148] sm:$0xff]
    %v107 = vld [vmem:[#allocation4 + $0x150] sm:$0xff]
    %v108 = vld [vmem:[#allocation4 + $0x158] sm:$0xff]
    %v109 = vld [vmem:[#allocation4 + $0x160] sm:$0xff]
    %v110 = vld [vmem:[#allocation4 + $0x168] sm:$0xff]
    %v111 = vld [vmem:[#allocation4 + $0x170] sm:$0xff]
    %v112 = vld [vmem:[#allocation4 + $0x178] sm:$0xff]
    %v113 = vld [vmem:[#allocation4 + $0x180] sm:$0xff]
    %v114 = vld [vmem:[#allocation4 + $0x188] sm:$0xff]
    %v115 = vld [vmem:[#allocation4 + $0x190] sm:$0xff]
    %v116 = vld [vmem:[#allocation4 + $0x198] sm:$0xff]
    %v117 = vld [vmem:[#allocation4 + $0x1a0] sm:$0xff]
    %v118 = vld [vmem:[#allocation4 + $0x1a8] sm:$0xff]
    %v119 = vld [vmem:[#allocation4 + $0x1b0] sm:$0xff]
    %v120 = vld [vmem:[#allocation4 + $0x1b8] sm:$0xff]
    %v121 = vld [vmem:[#allocation4 + $0x1c0] sm:$0xff]
    %v122 = vld [vmem:[#allocation4 + $0x1c8] sm:$0xff]
    %v123 = vld [vmem:[#allocation4 + $0x1d0] sm:$0xff]
    %v124 = vld [vmem:[#allocation4 + $0x1d8] sm:$0xff]
    %v125 = vld [vmem:[#allocation4 + $0x1e0] sm:$0xff]
    %v126 = vld [vmem:[#allocation4 + $0x1e8] sm:$0xff]
    %v127 = vld [vmem:[#allocation4 + $0x1f0] sm:$0xff]
    %v128 = vld [vmem:[#allocation4 + $0x1f8] sm:$0xff]
    %v129 = vld [vmem:[#allocation4 + $0x200] sm:$0xff]
    %v130 = vld [vmem:[#allocation4 + $0x208] sm:$0xff]
    %v131 = vld [vmem:[#allocation4 + $0x210] sm:$0xff]
    %v132 = vld [vmem:[#allocation4 + $0x218] sm:$0xff]
    %v133 = vld [vmem:[#allocation4 + $0x220] sm:$0xff]
    %v134 = vld [vmem:[#allocation4 + $0x228] sm:$0xff]
    %v135 = vld [vmem:[#allocation4 + $0x230] sm:$0xff]
    %v136 = vld [vmem:[#allocation4 + $0x238] sm:$0xff]
    %v137 = vld [vmem:[#allocation4 + $0x240] sm:$0xff]
    %v138 = vld [vmem:[#allocation4 + $0x248] sm:$0xff]
    %v139 = vld [vmem:[#allocation4 + $0x250] sm:$0xff]
    %v140 = vld [vmem:[#allocation4 + $0x258] sm:$0xff]
    %v141 = vld [vmem:[#allocation4 + $0x260] sm:$0xff]
    %v142 = vld [vmem:[#allocation4 + $0x268] sm:$0xff]
    %v143 = vld [vmem:[#allocation4 + $0x270] sm:$0xff]
    %v144 = vld [vmem:[#allocation4 + $0x278] sm:$0xff]
    %v145 = vld [vmem:[#allocation4 + $0x280] sm:$0xff]
    %v146 = vld [vmem:[#allocation4 + $0x288] sm:$0xff]
    %v147 = vld [vmem:[#allocation4 + $0x290] sm:$0xff]
    %v148 = vld [vmem:[#allocation4 + $0x298] sm:$0xff]
    %v149 = vld [vmem:[#allocation4 + $0x2a0] sm:$0xff]
    %v150 = vld [vmem:[#allocation4 + $0x2a8] sm:$0xff]
    %v151 = vld [vmem:[#allocation4 + $0x2b0] sm:$0xff]
    %v152 = vld [vmem:[#allocation4 + $0x2b8] sm:$0xff]
    %v153 = vld [vmem:[#allocation4 + $0x2c0] sm:$0xff]
    %v154 = vld [vmem:[#allocation4 + $0x2c8] sm:$0xff]
    %v155 = vld [vmem:[#allocation4 + $0x2d0] sm:$0xff]
    %v156 = vld [vmem:[#allocation4 + $0x2d8] sm:$0xff]
    %v157 = vld [vmem:[#allocation4 + $0x2e0] sm:$0xff]
    %v158 = vld [vmem:[#allocation4 + $0x2e8] sm:$0xff]
    %v159 = vld [vmem:[#allocation4 + $0x2f0] sm:$0xff]
    %v160 = vld [vmem:[#allocation4 + $0x2f8] sm:$0xff]
    %v161 = vld [vmem:[#allocation4 + $0x300] sm:$0xff]
    %v162 = vld [vmem:[#allocation4 + $0x308] sm:$0xff]
    %v163 = vld [vmem:[#allocation4 + $0x310] sm:$0xff]
    %v164 = vld [vmem:[#allocation4 + $0x318] sm:$0xff]
    %v165 = vld [vmem:[#allocation4 + $0x320] sm:$0xff]
    %v166 = vld [vmem:[#allocation4 + $0x328] sm:$0xff]
    %v167 = vld [vmem:[#allocation4 + $0x330] sm:$0xff]
    %v168 = vld [vmem:[#allocation4 + $0x338] sm:$0xff]
    %v169 = vld [vmem:[#allocation4 + $0x340] sm:$0xff]
    %v170 = vld [vmem:[#allocation4 + $0x348] sm:$0xff]
    %v171 = vld [vmem:[#allocation4 + $0x350] sm:$0xff]
    %v172 = vld [vmem:[#allocation4 + $0x358] sm:$0xff]
    %v173 = vld [vmem:[#allocation4 + $0x360] sm:$0xff]
    %v174 = vld [vmem:[#allocation4 + $0x368] sm:$0xff]
    %v175 = vld [vmem:[#allocation4 + $0x370] sm:$0xff]
    %v176 = vld [vmem:[#allocation4 + $0x378] sm:$0xff]
    %v177 = vld [vmem:[#allocation4 + $0x380] sm:$0xff]
    %v178 = vld [vmem:[#allocation4 + $0x388] sm:$0xff]
    %v179 = vld [vmem:[#allocation4 + $0x390] sm:$0xff]
    %v180 = vld [vmem:[#allocation4 + $0x398] sm:$0xff]
    %v181 = vld [vmem:[#allocation4 + $0x3a0] sm:$0xff]
    %v182 = vld [vmem:[#allocation4 + $0x3a8] sm:$0xff]
    %v183 = vld [vmem:[#allocation4 + $0x3b0] sm:$0xff]
    %v184 = vld [vmem:[#allocation4 + $0x3b8] sm:$0xff]
    %v185 = vld [vmem:[#allocation4 + $0x3c0] sm:$0xff]
    %v186 = vld [vmem:[#allocation4 + $0x3c8] sm:$0xff]
    %v187 = vld [vmem:[#allocation4 + $0x3d0] sm:$0xff]
    %v188 = vld [vmem:[#allocation4 + $0x3d8] sm:$0xff]
    %v189 = vld [vmem:[#allocation4 + $0x3e0] sm:$0xff]
    %v190 = vld [vmem:[#allocation4 + $0x3e8] sm:$0xff]
    %v191 = vld [vmem:[#allocation4 + $0x3f0] sm:$0xff]
    %v192 = vld [vmem:[#allocation4 + $0x3f8] sm:$0xff]
    %v193 = vpack.c.bf16 %v65, %v65
    %v194 = vpack.c.bf16 %v66, %v66
    %v195 = vpack.c.bf16 %v67, %v67
    %v196 = vpack.c.bf16 %v68, %v68
    %v197 = vpack.c.bf16 %v69, %v69
    %v198 = vpack.c.bf16 %v70, %v70
    %v199 = vpack.c.bf16 %v71, %v71
    %v200 = vpack.c.bf16 %v72, %v72
    %v201 = vpack.c.bf16 %v73, %v73
    %v202 = vpack.c.bf16 %v74, %v74
    %v203 = vpack.c.bf16 %v75, %v75
    %v204 = vpack.c.bf16 %v76, %v76
    %v205 = vpack.c.bf16 %v77, %v77
    %v206 = vpack.c.bf16 %v78, %v78
    %v207 = vpack.c.bf16 %v79, %v79
    %v208 = vpack.c.bf16 %v80, %v80
    %v209 = vpack.c.bf16 %v81, %v81
    %v210 = vpack.c.bf16 %v82, %v82
    %v211 = vpack.c.bf16 %v83, %v83
    %v212 = vpack.c.bf16 %v84, %v84
    %v213 = vpack.c.bf16 %v85, %v85
    %v214 = vpack.c.bf16 %v86, %v86
    %v215 = vpack.c.bf16 %v87, %v87
    %v216 = vpack.c.bf16 %v88, %v88
    %v217 = vpack.c.bf16 %v89, %v89
    %v218 = vpack.c.bf16 %v90, %v90
    %v219 = vpack.c.bf16 %v91, %v91
    %v220 = vpack.c.bf16 %v92, %v92
    %v221 = vpack.c.bf16 %v93, %v93
    %v222 = vpack.c.bf16 %v94, %v94
    %v223 = vpack.c.bf16 %v95, %v95
    %v224 = vpack.c.bf16 %v96, %v96
    %v225 = vpack.c.bf16 %v97, %v97
    %v226 = vpack.c.bf16 %v98, %v98
    %v227 = vpack.c.bf16 %v99, %v99
    %v228 = vpack.c.bf16 %v100, %v100
    %v229 = vpack.c.bf16 %v101, %v101
    %v230 = vpack.c.bf16 %v102, %v102
    %v231 = vpack.c.bf16 %v103, %v103
    %v232 = vpack.c.bf16 %v104, %v104
    %v233 = vpack.c.bf16 %v105, %v105
    %v234 = vpack.c.bf16 %v106, %v106
    %v235 = vpack.c.bf16 %v107, %v107
    %v236 = vpack.c.bf16 %v108, %v108
    %v237 = vpack.c.bf16 %v109, %v109
    %v238 = vpack.c.bf16 %v110, %v110
    %v239 = vpack.c.bf16 %v111, %v111
    %v240 = vpack.c.bf16 %v112, %v112
    %v241 = vpack.c.bf16 %v113, %v113
    %v242 = vpack.c.bf16 %v114, %v114
    %v243 = vpack.c.bf16 %v115, %v115
    %v244 = vpack.c.bf16 %v116, %v116
    %v245 = vpack.c.bf16 %v117, %v117
    %v246 = vpack.c.bf16 %v118, %v118
    %v247 = vpack.c.bf16 %v119, %v119
    %v248 = vpack.c.bf16 %v120, %v120
    %v249 = vpack.c.bf16 %v121, %v121
    %v250 = vpack.c.bf16 %v122, %v122
    %v251 = vpack.c.bf16 %v123, %v123
    %v252 = vpack.c.bf16 %v124, %v124
    %v253 = vpack.c.bf16 %v125, %v125
    %v254 = vpack.c.bf16 %v126, %v126
    %v255 = vpack.c.bf16 %v127, %v127
    %v256 = vpack.c.bf16 %v128, %v128
    %v257 = vpack.c.bf16 %v129, %v129
    %v258 = vpack.c.bf16 %v130, %v130
    %v259 = vpack.c.bf16 %v131, %v131
    %v260 = vpack.c.bf16 %v132, %v132
    %v261 = vpack.c.bf16 %v133, %v133
    %v262 = vpack.c.bf16 %v134, %v134
    %v263 = vpack.c.bf16 %v135, %v135
    %v264 = vpack.c.bf16 %v136, %v136
    %v265 = vpack.c.bf16 %v137, %v137
    %v266 = vpack.c.bf16 %v138, %v138
    %v267 = vpack.c.bf16 %v139, %v139
    %v268 = vpack.c.bf16 %v140, %v140
    %v269 = vpack.c.bf16 %v141, %v141
    %v270 = vpack.c.bf16 %v142, %v142
    %v271 = vpack.c.bf16 %v143, %v143
    %v272 = vpack.c.bf16 %v144, %v144
    %v273 = vpack.c.bf16 %v145, %v145
    %v274 = vpack.c.bf16 %v146, %v146
    %v275 = vpack.c.bf16 %v147, %v147
    %v276 = vpack.c.bf16 %v148, %v148
    %v277 = vpack.c.bf16 %v149, %v149
    %v278 = vpack.c.bf16 %v150, %v150
    %v279 = vpack.c.bf16 %v151, %v151
    %v280 = vpack.c.bf16 %v152, %v152
    %v281 = vpack.c.bf16 %v153, %v153
    %v282 = vpack.c.bf16 %v154, %v154
    %v283 = vpack.c.bf16 %v155, %v155
    %v284 = vpack.c.bf16 %v156, %v156
    %v285 = vpack.c.bf16 %v157, %v157
    %v286 = vpack.c.bf16 %v158, %v158
    %v287 = vpack.c.bf16 %v159, %v159
    %v288 = vpack.c.bf16 %v160, %v160
    %v289 = vpack.c.bf16 %v161, %v161
    %v290 = vpack.c.bf16 %v162, %v162
    %v291 = vpack.c.bf16 %v163, %v163
    %v292 = vpack.c.bf16 %v164, %v164
    %v293 = vpack.c.bf16 %v165, %v165
    %v294 = vpack.c.bf16 %v166, %v166
    %v295 = vpack.c.bf16 %v167, %v167
    %v296 = vpack.c.bf16 %v168, %v168
    %v297 = vpack.c.bf16 %v169, %v169
    %v298 = vpack.c.bf16 %v170, %v170
    %v299 = vpack.c.bf16 %v171, %v171
    %v300 = vpack.c.bf16 %v172, %v172
    %v301 = vpack.c.bf16 %v173, %v173
    %v302 = vpack.c.bf16 %v174, %v174
    %v303 = vpack.c.bf16 %v175, %v175
    %v304 = vpack.c.bf16 %v176, %v176
    %v305 = vpack.c.bf16 %v177, %v177
    %v306 = vpack.c.bf16 %v178, %v178
    %v307 = vpack.c.bf16 %v179, %v179
    %v308 = vpack.c.bf16 %v180, %v180
    %v309 = vpack.c.bf16 %v181, %v181
    %v310 = vpack.c.bf16 %v182, %v182
    %v311 = vpack.c.bf16 %v183, %v183
    %v312 = vpack.c.bf16 %v184, %v184
    %v313 = vpack.c.bf16 %v185, %v185
    %v314 = vpack.c.bf16 %v186, %v186
    %v315 = vpack.c.bf16 %v187, %v187
    %v316 = vpack.c.bf16 %v188, %v188
    %v317 = vpack.c.bf16 %v189, %v189
    %v318 = vpack.c.bf16 %v190, %v190
    %v319 = vpack.c.bf16 %v191, %v191
    %v320 = vpack.c.bf16 %v192, %v192
    %v321 = vld [vmem:[#allocation7] sm:$0xff]
    %v322 = vld [vmem:[#allocation7 + $0x8] sm:$0xff]
    %v323 = vld [vmem:[#allocation7 + $0x10] sm:$0xff]
    %v324 = vld [vmem:[#allocation7 + $0x18] sm:$0xff]
    %v325 = vld [vmem:[#allocation7 + $0x20] sm:$0xff]
    %v326 = vld [vmem:[#allocation7 + $0x28] sm:$0xff]
    %v327 = vld [vmem:[#allocation7 + $0x30] sm:$0xff]
    %v328 = vld [vmem:[#allocation7 + $0x38] sm:$0xff]
    %v329 = vld [vmem:[#allocation7 + $0x40] sm:$0xff]
    %v330 = vld [vmem:[#allocation7 + $0x48] sm:$0xff]
    %v331 = vld [vmem:[#allocation7 + $0x50] sm:$0xff]
    %v332 = vld [vmem:[#allocation7 + $0x58] sm:$0xff]
    %v333 = vld [vmem:[#allocation7 + $0x60] sm:$0xff]
    %v334 = vld [vmem:[#allocation7 + $0x68] sm:$0xff]
    %v335 = vld [vmem:[#allocation7 + $0x70] sm:$0xff]
    %v336 = vld [vmem:[#allocation7 + $0x78] sm:$0xff]
    %v337 = vld [vmem:[#allocation7 + $0x80] sm:$0xff]
    %v338 = vld [vmem:[#allocation7 + $0x88] sm:$0xff]
    %v339 = vld [vmem:[#allocation7 + $0x90] sm:$0xff]
    %v340 = vld [vmem:[#allocation7 + $0x98] sm:$0xff]
    %v341 = vld [vmem:[#allocation7 + $0xa0] sm:$0xff]
    %v342 = vld [vmem:[#allocation7 + $0xa8] sm:$0xff]
    %v343 = vld [vmem:[#allocation7 + $0xb0] sm:$0xff]
    %v344 = vld [vmem:[#allocation7 + $0xb8] sm:$0xff]
    %v345 = vld [vmem:[#allocation7 + $0xc0] sm:$0xff]
    %v346 = vld [vmem:[#allocation7 + $0xc8] sm:$0xff]
    %v347 = vld [vmem:[#allocation7 + $0xd0] sm:$0xff]
    %v348 = vld [vmem:[#allocation7 + $0xd8] sm:$0xff]
    %v349 = vld [vmem:[#allocation7 + $0xe0] sm:$0xff]
    %v350 = vld [vmem:[#allocation7 + $0xe8] sm:$0xff]
    %v351 = vld [vmem:[#allocation7 + $0xf0] sm:$0xff]
    %v352 = vld [vmem:[#allocation7 + $0xf8] sm:$0xff]
    %v353 = vld [vmem:[#allocation7 + $0x100] sm:$0xff]
    %v354 = vld [vmem:[#allocation7 + $0x108] sm:$0xff]
    %v355 = vld [vmem:[#allocation7 + $0x110] sm:$0xff]
    %v356 = vld [vmem:[#allocation7 + $0x118] sm:$0xff]
    %v357 = vld [vmem:[#allocation7 + $0x120] sm:$0xff]
    %v358 = vld [vmem:[#allocation7 + $0x128] sm:$0xff]
    %v359 = vld [vmem:[#allocation7 + $0x130] sm:$0xff]
    %v360 = vld [vmem:[#allocation7 + $0x138] sm:$0xff]
    %v361 = vld [vmem:[#allocation7 + $0x140] sm:$0xff]
    %v362 = vld [vmem:[#allocation7 + $0x148] sm:$0xff]
    %v363 = vld [vmem:[#allocation7 + $0x150] sm:$0xff]
    %v364 = vld [vmem:[#allocation7 + $0x158] sm:$0xff]
    %v365 = vld [vmem:[#allocation7 + $0x160] sm:$0xff]
    %v366 = vld [vmem:[#allocation7 + $0x168] sm:$0xff]
    %v367 = vld [vmem:[#allocation7 + $0x170] sm:$0xff]
    %v368 = vld [vmem:[#allocation7 + $0x178] sm:$0xff]
    %v369 = vld [vmem:[#allocation7 + $0x180] sm:$0xff]
    %v370 = vld [vmem:[#allocation7 + $0x188] sm:$0xff]
    %v371 = vld [vmem:[#allocation7 + $0x190] sm:$0xff]
    %v372 = vld [vmem:[#allocation7 + $0x198] sm:$0xff]
    %v373 = vld [vmem:[#allocation7 + $0x1a0] sm:$0xff]
    %v374 = vld [vmem:[#allocation7 + $0x1a8] sm:$0xff]
    %v375 = vld [vmem:[#allocation7 + $0x1b0] sm:$0xff]
    %v376 = vld [vmem:[#allocation7 + $0x1b8] sm:$0xff]
    %v377 = vld [vmem:[#allocation7 + $0x1c0] sm:$0xff]
    %v378 = vld [vmem:[#allocation7 + $0x1c8] sm:$0xff]
    %v379 = vld [vmem:[#allocation7 + $0x1d0] sm:$0xff]
    %v380 = vld [vmem:[#allocation7 + $0x1d8] sm:$0xff]
    %v381 = vld [vmem:[#allocation7 + $0x1e0] sm:$0xff]
    %v382 = vld [vmem:[#allocation7 + $0x1e8] sm:$0xff]
    %v383 = vld [vmem:[#allocation7 + $0x1f0] sm:$0xff]
    %v384 = vld [vmem:[#allocation7 + $0x1f8] sm:$0xff]
    %v385 = vld [vmem:[#allocation7 + $0x200] sm:$0xff]
    %v386 = vld [vmem:[#allocation7 + $0x208] sm:$0xff]
    %v387 = vld [vmem:[#allocation7 + $0x210] sm:$0xff]
    %v388 = vld [vmem:[#allocation7 + $0x218] sm:$0xff]
    %v389 = vld [vmem:[#allocation7 + $0x220] sm:$0xff]
    %v390 = vld [vmem:[#allocation7 + $0x228] sm:$0xff]
    %v391 = vld [vmem:[#allocation7 + $0x230] sm:$0xff]
    %v392 = vld [vmem:[#allocation7 + $0x238] sm:$0xff]
    %v393 = vld [vmem:[#allocation7 + $0x240] sm:$0xff]
    %v394 = vld [vmem:[#allocation7 + $0x248] sm:$0xff]
    %v395 = vld [vmem:[#allocation7 + $0x250] sm:$0xff]
    %v396 = vld [vmem:[#allocation7 + $0x258] sm:$0xff]
    %v397 = vld [vmem:[#allocation7 + $0x260] sm:$0xff]
    %v398 = vld [vmem:[#allocation7 + $0x268] sm:$0xff]
    %v399 = vld [vmem:[#allocation7 + $0x270] sm:$0xff]
    %v400 = vld [vmem:[#allocation7 + $0x278] sm:$0xff]
    %v401 = vld [vmem:[#allocation7 + $0x280] sm:$0xff]
    %v402 = vld [vmem:[#allocation7 + $0x288] sm:$0xff]
    %v403 = vld [vmem:[#allocation7 + $0x290] sm:$0xff]
    %v404 = vld [vmem:[#allocation7 + $0x298] sm:$0xff]
    %v405 = vld [vmem:[#allocation7 + $0x2a0] sm:$0xff]
    %v406 = vld [vmem:[#allocation7 + $0x2a8] sm:$0xff]
    %v407 = vld [vmem:[#allocation7 + $0x2b0] sm:$0xff]
    %v408 = vld [vmem:[#allocation7 + $0x2b8] sm:$0xff]
    %v409 = vld [vmem:[#allocation7 + $0x2c0] sm:$0xff]
    %v410 = vld [vmem:[#allocation7 + $0x2c8] sm:$0xff]
    %v411 = vld [vmem:[#allocation7 + $0x2d0] sm:$0xff]
    %v412 = vld [vmem:[#allocation7 + $0x2d8] sm:$0xff]
    %v413 = vld [vmem:[#allocation7 + $0x2e0] sm:$0xff]
    %v414 = vld [vmem:[#allocation7 + $0x2e8] sm:$0xff]
    %v415 = vld [vmem:[#allocation7 + $0x2f0] sm:$0xff]
    %v416 = vld [vmem:[#allocation7 + $0x2f8] sm:$0xff]
    %v417 = vld [vmem:[#allocation7 + $0x300] sm:$0xff]
    %v418 = vld [vmem:[#allocation7 + $0x308] sm:$0xff]
    %v419 = vld [vmem:[#allocation7 + $0x310] sm:$0xff]
    %v420 = vld [vmem:[#allocation7 + $0x318] sm:$0xff]
    %v421 = vld [vmem:[#allocation7 + $0x320] sm:$0xff]
    %v422 = vld [vmem:[#allocation7 + $0x328] sm:$0xff]
    %v423 = vld [vmem:[#allocation7 + $0x330] sm:$0xff]
    %v424 = vld [vmem:[#allocation7 + $0x338] sm:$0xff]
    %v425 = vld [vmem:[#allocation7 + $0x340] sm:$0xff]
    %v426 = vld [vmem:[#allocation7 + $0x348] sm:$0xff]
    %v427 = vld [vmem:[#allocation7 + $0x350] sm:$0xff]
    %v428 = vld [vmem:[#allocation7 + $0x358] sm:$0xff]
    %v429 = vld [vmem:[#allocation7 + $0x360] sm:$0xff]
    %v430 = vld [vmem:[#allocation7 + $0x368] sm:$0xff]
    %v431 = vld [vmem:[#allocation7 + $0x370] sm:$0xff]
    %v432 = vld [vmem:[#allocation7 + $0x378] sm:$0xff]
    %v433 = vld [vmem:[#allocation7 + $0x380] sm:$0xff]
    %v434 = vld [vmem:[#allocation7 + $0x388] sm:$0xff]
    %v435 = vld [vmem:[#allocation7 + $0x390] sm:$0xff]
    %v436 = vld [vmem:[#allocation7 + $0x398] sm:$0xff]
    %v437 = vld [vmem:[#allocation7 + $0x3a0] sm:$0xff]
    %v438 = vld [vmem:[#allocation7 + $0x3a8] sm:$0xff]
    %v439 = vld [vmem:[#allocation7 + $0x3b0] sm:$0xff]
    %v440 = vld [vmem:[#allocation7 + $0x3b8] sm:$0xff]
    %v441 = vld [vmem:[#allocation7 + $0x3c0] sm:$0xff]
    %v442 = vld [vmem:[#allocation7 + $0x3c8] sm:$0xff]
    %v443 = vld [vmem:[#allocation7 + $0x3d0] sm:$0xff]
    %v444 = vld [vmem:[#allocation7 + $0x3d8] sm:$0xff]
    %v445 = vld [vmem:[#allocation7 + $0x3e0] sm:$0xff]
    %v446 = vld [vmem:[#allocation7 + $0x3e8] sm:$0xff]
    %v447 = vld [vmem:[#allocation7 + $0x3f0] sm:$0xff]
    %v448 = vld [vmem:[#allocation7 + $0x3f8] sm:$0xff]
    %v449 = vpack.c.bf16 %v321, %v321
    %v450 = vpack.c.bf16 %v322, %v322
    %v451 = vpack.c.bf16 %v323, %v323
    %v452 = vpack.c.bf16 %v324, %v324
    %v453 = vpack.c.bf16 %v325, %v325
    %v454 = vpack.c.bf16 %v326, %v326
    %v455 = vpack.c.bf16 %v327, %v327
    %v456 = vpack.c.bf16 %v328, %v328
    %v457 = vpack.c.bf16 %v329, %v329
    %v458 = vpack.c.bf16 %v330, %v330
    %v459 = vpack.c.bf16 %v331, %v331
    %v460 = vpack.c.bf16 %v332, %v332
    %v461 = vpack.c.bf16 %v333, %v333
    %v462 = vpack.c.bf16 %v334, %v334
    %v463 = vpack.c.bf16 %v335, %v335
    %v464 = vpack.c.bf16 %v336, %v336
    %v465 = vpack.c.bf16 %v337, %v337
    %v466 = vpack.c.bf16 %v338, %v338
    %v467 = vpack.c.bf16 %v339, %v339
    %v468 = vpack.c.bf16 %v340, %v340
    %v469 = vpack.c.bf16 %v341, %v341
    %v470 = vpack.c.bf16 %v342, %v342
    %v471 = vpack.c.bf16 %v343, %v343
    %v472 = vpack.c.bf16 %v344, %v344
    %v473 = vpack.c.bf16 %v345, %v345
    %v474 = vpack.c.bf16 %v346, %v346
    %v475 = vpack.c.bf16 %v347, %v347
    %v476 = vpack.c.bf16 %v348, %v348
    %v477 = vpack.c.bf16 %v349, %v349
    %v478 = vpack.c.bf16 %v350, %v350
    %v479 = vpack.c.bf16 %v351, %v351
    %v480 = vpack.c.bf16 %v352, %v352
    %v481 = vpack.c.bf16 %v353, %v353
    %v482 = vpack.c.bf16 %v354, %v354
    %v483 = vpack.c.bf16 %v355, %v355
    %v484 = vpack.c.bf16 %v356, %v356
    %v485 = vpack.c.bf16 %v357, %v357
    %v486 = vpack.c.bf16 %v358, %v358
    %v487 = vpack.c.bf16 %v359, %v359
    %v488 = vpack.c.bf16 %v360, %v360
    %v489 = vpack.c.bf16 %v361, %v361
    %v490 = vpack.c.bf16 %v362, %v362
    %v491 = vpack.c.bf16 %v363, %v363
    %v492 = vpack.c.bf16 %v364, %v364
    %v493 = vpack.c.bf16 %v365, %v365
    %v494 = vpack.c.bf16 %v366, %v366
    %v495 = vpack.c.bf16 %v367, %v367
    %v496 = vpack.c.bf16 %v368, %v368
    %v497 = vpack.c.bf16 %v369, %v369
    %v498 = vpack.c.bf16 %v370, %v370
    %v499 = vpack.c.bf16 %v371, %v371
    %v500 = vpack.c.bf16 %v372, %v372
    %v501 = vpack.c.bf16 %v373, %v373
    %v502 = vpack.c.bf16 %v374, %v374
    %v503 = vpack.c.bf16 %v375, %v375
    %v504 = vpack.c.bf16 %v376, %v376
    %v505 = vpack.c.bf16 %v377, %v377
    %v506 = vpack.c.bf16 %v378, %v378
    %v507 = vpack.c.bf16 %v379, %v379
    %v508 = vpack.c.bf16 %v380, %v380
    %v509 = vpack.c.bf16 %v381, %v381
    %v510 = vpack.c.bf16 %v382, %v382
    %v511 = vpack.c.bf16 %v383, %v383
    %v512 = vpack.c.bf16 %v384, %v384
    %v513 = vpack.c.bf16 %v385, %v385
    %v514 = vpack.c.bf16 %v386, %v386
    %v515 = vpack.c.bf16 %v387, %v387
    %v516 = vpack.c.bf16 %v388, %v388
    %v517 = vpack.c.bf16 %v389, %v389
    %v518 = vpack.c.bf16 %v390, %v390
    %v519 = vpack.c.bf16 %v391, %v391
    %v520 = vpack.c.bf16 %v392, %v392
    %v521 = vpack.c.bf16 %v393, %v393
    %v522 = vpack.c.bf16 %v394, %v394
    %v523 = vpack.c.bf16 %v395, %v395
    %v524 = vpack.c.bf16 %v396, %v396
    %v525 = vpack.c.bf16 %v397, %v397
    %v526 = vpack.c.bf16 %v398, %v398
    %v527 = vpack.c.bf16 %v399, %v399
    %v528 = vpack.c.bf16 %v400, %v400
    %v529 = vpack.c.bf16 %v401, %v401
    %v530 = vpack.c.bf16 %v402, %v402
    %v531 = vpack.c.bf16 %v403, %v403
    %v532 = vpack.c.bf16 %v404, %v404
    %v533 = vpack.c.bf16 %v405, %v405
    %v534 = vpack.c.bf16 %v406, %v406
    %v535 = vpack.c.bf16 %v407, %v407
    %v536 = vpack.c.bf16 %v408, %v408
    %v537 = vpack.c.bf16 %v409, %v409
    %v538 = vpack.c.bf16 %v410, %v410
    %v539 = vpack.c.bf16 %v411, %v411
    %v540 = vpack.c.bf16 %v412, %v412
    %v541 = vpack.c.bf16 %v413, %v413
    %v542 = vpack.c.bf16 %v414, %v414
    %v543 = vpack.c.bf16 %v415, %v415
    %v544 = vpack.c.bf16 %v416, %v416
    %v545 = vpack.c.bf16 %v417, %v417
    %v546 = vpack.c.bf16 %v418, %v418
    %v547 = vpack.c.bf16 %v419, %v419
    %v548 = vpack.c.bf16 %v420, %v420
    %v549 = vpack.c.bf16 %v421, %v421
    %v550 = vpack.c.bf16 %v422, %v422
    %v551 = vpack.c.bf16 %v423, %v423
    %v552 = vpack.c.bf16 %v424, %v424
    %v553 = vpack.c.bf16 %v425, %v425
    %v554 = vpack.c.bf16 %v426, %v426
    %v555 = vpack.c.bf16 %v427, %v427
    %v556 = vpack.c.bf16 %v428, %v428
    %v557 = vpack.c.bf16 %v429, %v429
    %v558 = vpack.c.bf16 %v430, %v430
    %v559 = vpack.c.bf16 %v431, %v431
    %v560 = vpack.c.bf16 %v432, %v432
    %v561 = vpack.c.bf16 %v433, %v433
    %v562 = vpack.c.bf16 %v434, %v434
    %v563 = vpack.c.bf16 %v435, %v435
    %v564 = vpack.c.bf16 %v436, %v436
    %v565 = vpack.c.bf16 %v437, %v437
    %v566 = vpack.c.bf16 %v438, %v438
    %v567 = vpack.c.bf16 %v439, %v439
    %v568 = vpack.c.bf16 %v440, %v440
    %v569 = vpack.c.bf16 %v441, %v441
    %v570 = vpack.c.bf16 %v442, %v442
    %v571 = vpack.c.bf16 %v443, %v443
    %v572 = vpack.c.bf16 %v444, %v444
    %v573 = vpack.c.bf16 %v445, %v445
    %v574 = vpack.c.bf16 %v446, %v446
    %v575 = vpack.c.bf16 %v447, %v447
    %v576 = vpack.c.bf16 %v448, %v448
    %v585 = vunpack.c.l.b16 %v193
    %v586 = vunpack.c.l.b16 %v194
    %v587 = vunpack.c.l.b16 %v195
    %v588 = vunpack.c.l.b16 %v196
    %v589 = vunpack.c.l.b16 %v197
    %v590 = vunpack.c.l.b16 %v198
    %v591 = vunpack.c.l.b16 %v199
    %v592 = vunpack.c.l.b16 %v200
    %v593 = vpack.c.b16 %v586, %v585
    %v594 = vpack.c.b16 %v588, %v587
    %v595 = vpack.c.b16 %v590, %v589
    %v596 = vpack.c.b16 %v592, %v591
    %v605 = vunpack.c.l.b16 %v449
    %v606 = vunpack.c.l.b16 %v450
    %v607 = vunpack.c.l.b16 %v451
    %v608 = vunpack.c.l.b16 %v452
    %v609 = vunpack.c.l.b16 %v453
    %v610 = vunpack.c.l.b16 %v454
    %v611 = vunpack.c.l.b16 %v455
    %v612 = vunpack.c.l.b16 %v456
    %v613 = vpack.c.b16 %v606, %v605
    %v614 = vpack.c.b16 %v608, %v607
    %v615 = vpack.c.b16 %v610, %v609
    %v616 = vpack.c.b16 %v612, %v611
    %vm617 = vcmask 523264
    %v619 = vsel %vm617, %v593, 0
    %v622 = vsel %vm617, %v594, 0
    %v625 = vsel %vm617, %v595, 0
    %v628 = vsel %vm617, %v596, 0
    %v631 = vsel %vm617, %v613, 0
    %v634 = vsel %vm617, %v614, 0
    %v637 = vsel %vm617, %v615, 0
    %v640 = vsel %vm617, %v616, 0
    %642 = vmatpush.bf16.xpose.msra.mxu0 0
    %643 = vmatpush.bf16.xpose.msra.mxu0 0
    %644 = vmatpush.bf16.xpose.msra.mxu0 0
    %645 = vmatpush.bf16.xpose.msra.mxu0 0
    %646 = vmatpush.bf16.xpose.msra.mxu0 %v640
    %647 = vmatpush.bf16.xpose.msra.mxu0 %v637
    %648 = vmatpush.bf16.xpose.msra.mxu0 %v634
    %649 = vmatpush.bf16.xpose.msra.mxu0 %v631
    %650 = vmatmul.bf16.gmra.mxu0 %v619
    %v651 = vpop.f32.mrf.mxu0
    %v652 = vadd.f32 0.0, %v651
    %v653 = vpop.f32.mrf.mxu0
    %v654 = vadd.f32 0.0, %v653
    %655 = vmatmul.bf16.gmra.mxu0 %v622
    %v656 = vpop.f32.mrf.mxu0
    %v657 = vadd.f32 0.0, %v656
    %v658 = vpop.f32.mrf.mxu0
    %v659 = vadd.f32 0.0, %v658
    %660 = vmatmul.bf16.gmra.mxu0 %v625
    %v661 = vpop.f32.mrf.mxu0
    %v662 = vadd.f32 0.0, %v661
    %v663 = vpop.f32.mrf.mxu0
    %v664 = vadd.f32 0.0, %v663
    %665 = vmatmul.bf16.gmra.mxu0 %v628
    %v666 = vpop.f32.mrf.mxu0
    %v667 = vadd.f32 0.0, %v666
    %v668 = vpop.f32.mrf.mxu0
    %v669 = vadd.f32 0.0, %v668
    %670 = vdwg.mxu0
    %v679 = vunpack.c.l.b16 %v201
    %v680 = vunpack.c.l.b16 %v202
    %v681 = vunpack.c.l.b16 %v203
    %v682 = vunpack.c.l.b16 %v204
    %v683 = vunpack.c.l.b16 %v205
    %v684 = vunpack.c.l.b16 %v206
    %v685 = vunpack.c.l.b16 %v207
    %v686 = vunpack.c.l.b16 %v208
    %v687 = vpack.c.b16 %v680, %v679
    %v688 = vpack.c.b16 %v682, %v681
    %v689 = vpack.c.b16 %v684, %v683
    %v690 = vpack.c.b16 %v686, %v685
    %v699 = vunpack.c.l.b16 %v457
    %v700 = vunpack.c.l.b16 %v458
    %v701 = vunpack.c.l.b16 %v459
    %v702 = vunpack.c.l.b16 %v460
    %v703 = vunpack.c.l.b16 %v461
    %v704 = vunpack.c.l.b16 %v462
    %v705 = vunpack.c.l.b16 %v463
    %v706 = vunpack.c.l.b16 %v464
    %v707 = vpack.c.b16 %v700, %v699
    %v708 = vpack.c.b16 %v702, %v701
    %v709 = vpack.c.b16 %v704, %v703
    %v710 = vpack.c.b16 %v706, %v705
    %v712 = vsel %vm617, %v687, 0
    %v715 = vsel %vm617, %v688, 0
    %v718 = vsel %vm617, %v689, 0
    %v721 = vsel %vm617, %v690, 0
    %v724 = vsel %vm617, %v707, 0
    %v727 = vsel %vm617, %v708, 0
    %v730 = vsel %vm617, %v709, 0
    %v733 = vsel %vm617, %v710, 0
    %735 = vmatpush.bf16.xpose.msra.mxu0 0
    %736 = vmatpush.bf16.xpose.msra.mxu0 0
    %737 = vmatpush.bf16.xpose.msra.mxu0 0
    %738 = vmatpush.bf16.xpose.msra.mxu0 0
    %739 = vmatpush.bf16.xpose.msra.mxu0 %v733
    %740 = vmatpush.bf16.xpose.msra.mxu0 %v730
    %741 = vmatpush.bf16.xpose.msra.mxu0 %v727
    %742 = vmatpush.bf16.xpose.msra.mxu0 %v724
    %743 = vmatmul.bf16.gmra.mxu0 %v712
    %v744 = vpop.f32.mrf.mxu0
    %v745 = vadd.f32 0.0, %v744
    %v746 = vpop.f32.mrf.mxu0
    %v747 = vadd.f32 0.0, %v746
    %748 = vmatmul.bf16.gmra.mxu0 %v715
    %v749 = vpop.f32.mrf.mxu0
    %v750 = vadd.f32 0.0, %v749
    %v751 = vpop.f32.mrf.mxu0
    %v752 = vadd.f32 0.0, %v751
    %753 = vmatmul.bf16.gmra.mxu0 %v718
    %v754 = vpop.f32.mrf.mxu0
    %v755 = vadd.f32 0.0, %v754
    %v756 = vpop.f32.mrf.mxu0
    %v757 = vadd.f32 0.0, %v756
    %758 = vmatmul.bf16.gmra.mxu0 %v721
    %v759 = vpop.f32.mrf.mxu0
    %v760 = vadd.f32 0.0, %v759
    %v761 = vpop.f32.mrf.mxu0
    %v762 = vadd.f32 0.0, %v761
    %763 = vdwg.mxu0
    %v772 = vunpack.c.l.b16 %v209
    %v773 = vunpack.c.l.b16 %v210
    %v774 = vunpack.c.l.b16 %v211
    %v775 = vunpack.c.l.b16 %v212
    %v776 = vunpack.c.l.b16 %v213
    %v777 = vunpack.c.l.b16 %v214
    %v778 = vunpack.c.l.b16 %v215
    %v779 = vunpack.c.l.b16 %v216
    %v780 = vpack.c.b16 %v773, %v772
    %v781 = vpack.c.b16 %v775, %v774
    %v782 = vpack.c.b16 %v777, %v776
    %v783 = vpack.c.b16 %v779, %v778
    %v792 = vunpack.c.l.b16 %v465
    %v793 = vunpack.c.l.b16 %v466
    %v794 = vunpack.c.l.b16 %v467
    %v795 = vunpack.c.l.b16 %v468
    %v796 = vunpack.c.l.b16 %v469
    %v797 = vunpack.c.l.b16 %v470
    %v798 = vunpack.c.l.b16 %v471
    %v799 = vunpack.c.l.b16 %v472
    %v800 = vpack.c.b16 %v793, %v792
    %v801 = vpack.c.b16 %v795, %v794
    %v802 = vpack.c.b16 %v797, %v796
    %v803 = vpack.c.b16 %v799, %v798
    %v805 = vsel %vm617, %v780, 0
    %v808 = vsel %vm617, %v781, 0
    %v811 = vsel %vm617, %v782, 0
    %v814 = vsel %vm617, %v783, 0
    %v817 = vsel %vm617, %v800, 0
    %v820 = vsel %vm617, %v801, 0
    %v823 = vsel %vm617, %v802, 0
    %v826 = vsel %vm617, %v803, 0
    %828 = vmatpush.bf16.xpose.msra.mxu0 0
    %829 = vmatpush.bf16.xpose.msra.mxu0 0
    %830 = vmatpush.bf16.xpose.msra.mxu0 0
    %831 = vmatpush.bf16.xpose.msra.mxu0 0
    %832 = vmatpush.bf16.xpose.msra.mxu0 %v826
    %833 = vmatpush.bf16.xpose.msra.mxu0 %v823
    %834 = vmatpush.bf16.xpose.msra.mxu0 %v820
    %835 = vmatpush.bf16.xpose.msra.mxu0 %v817
    %836 = vmatmul.bf16.gmra.mxu0 %v805
    %v837 = vpop.f32.mrf.mxu0
    %v838 = vadd.f32 0.0, %v837
    %v839 = vpop.f32.mrf.mxu0
    %v840 = vadd.f32 0.0, %v839
    %841 = vmatmul.bf16.gmra.mxu0 %v808
    %v842 = vpop.f32.mrf.mxu0
    %v843 = vadd.f32 0.0, %v842
    %v844 = vpop.f32.mrf.mxu0
    %v845 = vadd.f32 0.0, %v844
    %846 = vmatmul.bf16.gmra.mxu0 %v811
    %v847 = vpop.f32.mrf.mxu0
    %v848 = vadd.f32 0.0, %v847
    %v849 = vpop.f32.mrf.mxu0
    %v850 = vadd.f32 0.0, %v849
    %851 = vmatmul.bf16.gmra.mxu0 %v814
    %v852 = vpop.f32.mrf.mxu0
    %v853 = vadd.f32 0.0, %v852
    %v854 = vpop.f32.mrf.mxu0
    %v855 = vadd.f32 0.0, %v854
    %856 = vdwg.mxu0
    %v865 = vunpack.c.l.b16 %v217
    %v866 = vunpack.c.l.b16 %v218
    %v867 = vunpack.c.l.b16 %v219
    %v868 = vunpack.c.l.b16 %v220
    %v869 = vunpack.c.l.b16 %v221
    %v870 = vunpack.c.l.b16 %v222
    %v871 = vunpack.c.l.b16 %v223
    %v872 = vunpack.c.l.b16 %v224
    %v873 = vpack.c.b16 %v866, %v865
    %v874 = vpack.c.b16 %v868, %v867
    %v875 = vpack.c.b16 %v870, %v869
    %v876 = vpack.c.b16 %v872, %v871
    %v885 = vunpack.c.l.b16 %v473
    %v886 = vunpack.c.l.b16 %v474
    %v887 = vunpack.c.l.b16 %v475
    %v888 = vunpack.c.l.b16 %v476
    %v889 = vunpack.c.l.b16 %v477
    %v890 = vunpack.c.l.b16 %v478
    %v891 = vunpack.c.l.b16 %v479
    %v892 = vunpack.c.l.b16 %v480
    %v893 = vpack.c.b16 %v886, %v885
    %v894 = vpack.c.b16 %v888, %v887
    %v895 = vpack.c.b16 %v890, %v889
    %v896 = vpack.c.b16 %v892, %v891
    %v898 = vsel %vm617, %v873, 0
    %v901 = vsel %vm617, %v874, 0
    %v904 = vsel %vm617, %v875, 0
    %v907 = vsel %vm617, %v876, 0
    %v910 = vsel %vm617, %v893, 0
    %v913 = vsel %vm617, %v894, 0
    %v916 = vsel %vm617, %v895, 0
    %v919 = vsel %vm617, %v896, 0
    %921 = vmatpush.bf16.xpose.msra.mxu0 0
    %922 = vmatpush.bf16.xpose.msra.mxu0 0
    %923 = vmatpush.bf16.xpose.msra.mxu0 0
    %924 = vmatpush.bf16.xpose.msra.mxu0 0
    %925 = vmatpush.bf16.xpose.msra.mxu0 %v919
    %926 = vmatpush.bf16.xpose.msra.mxu0 %v916
    %927 = vmatpush.bf16.xpose.msra.mxu0 %v913
    %928 = vmatpush.bf16.xpose.msra.mxu0 %v910
    %929 = vmatmul.bf16.gmra.mxu0 %v898
    %v930 = vpop.f32.mrf.mxu0
    %v931 = vadd.f32 0.0, %v930
    %v932 = vpop.f32.mrf.mxu0
    %v933 = vadd.f32 0.0, %v932
    %934 = vmatmul.bf16.gmra.mxu0 %v901
    %v935 = vpop.f32.mrf.mxu0
    %v936 = vadd.f32 0.0, %v935
    %v937 = vpop.f32.mrf.mxu0
    %v938 = vadd.f32 0.0, %v937
    %939 = vmatmul.bf16.gmra.mxu0 %v904
    %v940 = vpop.f32.mrf.mxu0
    %v941 = vadd.f32 0.0, %v940
    %v942 = vpop.f32.mrf.mxu0
    %v943 = vadd.f32 0.0, %v942
    %944 = vmatmul.bf16.gmra.mxu0 %v907
    %v945 = vpop.f32.mrf.mxu0
    %v946 = vadd.f32 0.0, %v945
    %v947 = vpop.f32.mrf.mxu0
    %v948 = vadd.f32 0.0, %v947
    %949 = vdwg.mxu0
    %v958 = vunpack.c.l.b16 %v225
    %v959 = vunpack.c.l.b16 %v226
    %v960 = vunpack.c.l.b16 %v227
    %v961 = vunpack.c.l.b16 %v228
    %v962 = vunpack.c.l.b16 %v229
    %v963 = vunpack.c.l.b16 %v230
    %v964 = vunpack.c.l.b16 %v231
    %v965 = vunpack.c.l.b16 %v232
    %v966 = vpack.c.b16 %v959, %v958
    %v967 = vpack.c.b16 %v961, %v960
    %v968 = vpack.c.b16 %v963, %v962
    %v969 = vpack.c.b16 %v965, %v964
    %v978 = vunpack.c.l.b16 %v481
    %v979 = vunpack.c.l.b16 %v482
    %v980 = vunpack.c.l.b16 %v483
    %v981 = vunpack.c.l.b16 %v484
    %v982 = vunpack.c.l.b16 %v485
    %v983 = vunpack.c.l.b16 %v486
    %v984 = vunpack.c.l.b16 %v487
    %v985 = vunpack.c.l.b16 %v488
    %v986 = vpack.c.b16 %v979, %v978
    %v987 = vpack.c.b16 %v981, %v980
    %v988 = vpack.c.b16 %v983, %v982
    %v989 = vpack.c.b16 %v985, %v984
    %v991 = vsel %vm617, %v966, 0
    %v994 = vsel %vm617, %v967, 0
    %v997 = vsel %vm617, %v968, 0
    %v1000 = vsel %vm617, %v969, 0
    %v1003 = vsel %vm617, %v986, 0
    %v1006 = vsel %vm617, %v987, 0
    %v1009 = vsel %vm617, %v988, 0
    %v1012 = vsel %vm617, %v989, 0
    %1014 = vmatpush.bf16.xpose.msra.mxu0 0
    %1015 = vmatpush.bf16.xpose.msra.mxu0 0
    %1016 = vmatpush.bf16.xpose.msra.mxu0 0
    %1017 = vmatpush.bf16.xpose.msra.mxu0 0
    %1018 = vmatpush.bf16.xpose.msra.mxu0 %v1012
    %1019 = vmatpush.bf16.xpose.msra.mxu0 %v1009
    %1020 = vmatpush.bf16.xpose.msra.mxu0 %v1006
    %1021 = vmatpush.bf16.xpose.msra.mxu0 %v1003
    %1022 = vmatmul.bf16.gmra.mxu0 %v991
    %v1023 = vpop.f32.mrf.mxu0
    %v1024 = vadd.f32 0.0, %v1023
    %v1025 = vpop.f32.mrf.mxu0
    %v1026 = vadd.f32 0.0, %v1025
    %1027 = vmatmul.bf16.gmra.mxu0 %v994
    %v1028 = vpop.f32.mrf.mxu0
    %v1029 = vadd.f32 0.0, %v1028
    %v1030 = vpop.f32.mrf.mxu0
    %v1031 = vadd.f32 0.0, %v1030
    %1032 = vmatmul.bf16.gmra.mxu0 %v997
    %v1033 = vpop.f32.mrf.mxu0
    %v1034 = vadd.f32 0.0, %v1033
    %v1035 = vpop.f32.mrf.mxu0
    %v1036 = vadd.f32 0.0, %v1035
    %1037 = vmatmul.bf16.gmra.mxu0 %v1000
    %v1038 = vpop.f32.mrf.mxu0
    %v1039 = vadd.f32 0.0, %v1038
    %v1040 = vpop.f32.mrf.mxu0
    %v1041 = vadd.f32 0.0, %v1040
    %1042 = vdwg.mxu0
    %v1051 = vunpack.c.l.b16 %v233
    %v1052 = vunpack.c.l.b16 %v234
    %v1053 = vunpack.c.l.b16 %v235
    %v1054 = vunpack.c.l.b16 %v236
    %v1055 = vunpack.c.l.b16 %v237
    %v1056 = vunpack.c.l.b16 %v238
    %v1057 = vunpack.c.l.b16 %v239
    %v1058 = vunpack.c.l.b16 %v240
    %v1059 = vpack.c.b16 %v1052, %v1051
    %v1060 = vpack.c.b16 %v1054, %v1053
    %v1061 = vpack.c.b16 %v1056, %v1055
    %v1062 = vpack.c.b16 %v1058, %v1057
    %v1071 = vunpack.c.l.b16 %v489
    %v1072 = vunpack.c.l.b16 %v490
    %v1073 = vunpack.c.l.b16 %v491
    %v1074 = vunpack.c.l.b16 %v492
    %v1075 = vunpack.c.l.b16 %v493
    %v1076 = vunpack.c.l.b16 %v494
    %v1077 = vunpack.c.l.b16 %v495
    %v1078 = vunpack.c.l.b16 %v496
    %v1079 = vpack.c.b16 %v1072, %v1071
    %v1080 = vpack.c.b16 %v1074, %v1073
    %v1081 = vpack.c.b16 %v1076, %v1075
    %v1082 = vpack.c.b16 %v1078, %v1077
    %v1084 = vsel %vm617, %v1059, 0
    %v1087 = vsel %vm617, %v1060, 0
    %v1090 = vsel %vm617, %v1061, 0
    %v1093 = vsel %vm617, %v1062, 0
    %v1096 = vsel %vm617, %v1079, 0
    %v1099 = vsel %vm617, %v1080, 0
    %v1102 = vsel %vm617, %v1081, 0
    %v1105 = vsel %vm617, %v1082, 0
    %1107 = vmatpush.bf16.xpose.msra.mxu0 0
    %1108 = vmatpush.bf16.xpose.msra.mxu0 0
    %1109 = vmatpush.bf16.xpose.msra.mxu0 0
    %1110 = vmatpush.bf16.xpose.msra.mxu0 0
    %1111 = vmatpush.bf16.xpose.msra.mxu0 %v1105
    %1112 = vmatpush.bf16.xpose.msra.mxu0 %v1102
    %1113 = vmatpush.bf16.xpose.msra.mxu0 %v1099
    %1114 = vmatpush.bf16.xpose.msra.mxu0 %v1096
    %1115 = vmatmul.bf16.gmra.mxu0 %v1084
    %v1116 = vpop.f32.mrf.mxu0
    %v1117 = vadd.f32 0.0, %v1116
    %v1118 = vpop.f32.mrf.mxu0
    %v1119 = vadd.f32 0.0, %v1118
    %1120 = vmatmul.bf16.gmra.mxu0 %v1087
    %v1121 = vpop.f32.mrf.mxu0
    %v1122 = vadd.f32 0.0, %v1121
    %v1123 = vpop.f32.mrf.mxu0
    %v1124 = vadd.f32 0.0, %v1123
    %1125 = vmatmul.bf16.gmra.mxu0 %v1090
    %v1126 = vpop.f32.mrf.mxu0
    %v1127 = vadd.f32 0.0, %v1126
    %v1128 = vpop.f32.mrf.mxu0
    %v1129 = vadd.f32 0.0, %v1128
    %1130 = vmatmul.bf16.gmra.mxu0 %v1093
    %v1131 = vpop.f32.mrf.mxu0
    %v1132 = vadd.f32 0.0, %v1131
    %v1133 = vpop.f32.mrf.mxu0
    %v1134 = vadd.f32 0.0, %v1133
    %1135 = vdwg.mxu0
    %v1144 = vunpack.c.l.b16 %v241
    %v1145 = vunpack.c.l.b16 %v242
    %v1146 = vunpack.c.l.b16 %v243
    %v1147 = vunpack.c.l.b16 %v244
    %v1148 = vunpack.c.l.b16 %v245
    %v1149 = vunpack.c.l.b16 %v246
    %v1150 = vunpack.c.l.b16 %v247
    %v1151 = vunpack.c.l.b16 %v248
    %v1152 = vpack.c.b16 %v1145, %v1144
    %v1153 = vpack.c.b16 %v1147, %v1146
    %v1154 = vpack.c.b16 %v1149, %v1148
    %v1155 = vpack.c.b16 %v1151, %v1150
    %v1164 = vunpack.c.l.b16 %v497
    %v1165 = vunpack.c.l.b16 %v498
    %v1166 = vunpack.c.l.b16 %v499
    %v1167 = vunpack.c.l.b16 %v500
    %v1168 = vunpack.c.l.b16 %v501
    %v1169 = vunpack.c.l.b16 %v502
    %v1170 = vunpack.c.l.b16 %v503
    %v1171 = vunpack.c.l.b16 %v504
    %v1172 = vpack.c.b16 %v1165, %v1164
    %v1173 = vpack.c.b16 %v1167, %v1166
    %v1174 = vpack.c.b16 %v1169, %v1168
    %v1175 = vpack.c.b16 %v1171, %v1170
    %v1177 = vsel %vm617, %v1152, 0
    %v1180 = vsel %vm617, %v1153, 0
    %v1183 = vsel %vm617, %v1154, 0
    %v1186 = vsel %vm617, %v1155, 0
    %v1189 = vsel %vm617, %v1172, 0
    %v1192 = vsel %vm617, %v1173, 0
    %v1195 = vsel %vm617, %v1174, 0
    %v1198 = vsel %vm617, %v1175, 0
    %1200 = vmatpush.bf16.xpose.msra.mxu0 0
    %1201 = vmatpush.bf16.xpose.msra.mxu0 0
    %1202 = vmatpush.bf16.xpose.msra.mxu0 0
    %1203 = vmatpush.bf16.xpose.msra.mxu0 0
    %1204 = vmatpush.bf16.xpose.msra.mxu0 %v1198
    %1205 = vmatpush.bf16.xpose.msra.mxu0 %v1195
    %1206 = vmatpush.bf16.xpose.msra.mxu0 %v1192
    %1207 = vmatpush.bf16.xpose.msra.mxu0 %v1189
    %1208 = vmatmul.bf16.gmra.mxu0 %v1177
    %v1209 = vpop.f32.mrf.mxu0
    %v1210 = vadd.f32 0.0, %v1209
    %v1211 = vpop.f32.mrf.mxu0
    %v1212 = vadd.f32 0.0, %v1211
    %1213 = vmatmul.bf16.gmra.mxu0 %v1180
    %v1214 = vpop.f32.mrf.mxu0
    %v1215 = vadd.f32 0.0, %v1214
    %v1216 = vpop.f32.mrf.mxu0
    %v1217 = vadd.f32 0.0, %v1216
    %1218 = vmatmul.bf16.gmra.mxu0 %v1183
    %v1219 = vpop.f32.mrf.mxu0
    %v1220 = vadd.f32 0.0, %v1219
    %v1221 = vpop.f32.mrf.mxu0
    %v1222 = vadd.f32 0.0, %v1221
    %1223 = vmatmul.bf16.gmra.mxu0 %v1186
    %v1224 = vpop.f32.mrf.mxu0
    %v1225 = vadd.f32 0.0, %v1224
    %v1226 = vpop.f32.mrf.mxu0
    %v1227 = vadd.f32 0.0, %v1226
    %1228 = vdwg.mxu0
    %v1237 = vunpack.c.l.b16 %v249
    %v1238 = vunpack.c.l.b16 %v250
    %v1239 = vunpack.c.l.b16 %v251
    %v1240 = vunpack.c.l.b16 %v252
    %v1241 = vunpack.c.l.b16 %v253
    %v1242 = vunpack.c.l.b16 %v254
    %v1243 = vunpack.c.l.b16 %v255
    %v1244 = vunpack.c.l.b16 %v256
    %v1245 = vpack.c.b16 %v1238, %v1237
    %v1246 = vpack.c.b16 %v1240, %v1239
    %v1247 = vpack.c.b16 %v1242, %v1241
    %v1248 = vpack.c.b16 %v1244, %v1243
    %v1257 = vunpack.c.l.b16 %v505
    %v1258 = vunpack.c.l.b16 %v506
    %v1259 = vunpack.c.l.b16 %v507
    %v1260 = vunpack.c.l.b16 %v508
    %v1261 = vunpack.c.l.b16 %v509
    %v1262 = vunpack.c.l.b16 %v510
    %v1263 = vunpack.c.l.b16 %v511
    %v1264 = vunpack.c.l.b16 %v512
    %v1265 = vpack.c.b16 %v1258, %v1257
    %v1266 = vpack.c.b16 %v1260, %v1259
    %v1267 = vpack.c.b16 %v1262, %v1261
    %v1268 = vpack.c.b16 %v1264, %v1263
    %v1270 = vsel %vm617, %v1245, 0
    %v1273 = vsel %vm617, %v1246, 0
    %v1276 = vsel %vm617, %v1247, 0
    %v1279 = vsel %vm617, %v1248, 0
    %v1282 = vsel %vm617, %v1265, 0
    %v1285 = vsel %vm617, %v1266, 0
    %v1288 = vsel %vm617, %v1267, 0
    %v1291 = vsel %vm617, %v1268, 0
    %1293 = vmatpush.bf16.xpose.msra.mxu0 0
    %1294 = vmatpush.bf16.xpose.msra.mxu0 0
    %1295 = vmatpush.bf16.xpose.msra.mxu0 0
    %1296 = vmatpush.bf16.xpose.msra.mxu0 0
    %1297 = vmatpush.bf16.xpose.msra.mxu0 %v1291
    %1298 = vmatpush.bf16.xpose.msra.mxu0 %v1288
    %1299 = vmatpush.bf16.xpose.msra.mxu0 %v1285
    %1300 = vmatpush.bf16.xpose.msra.mxu0 %v1282
    %1301 = vmatmul.bf16.gmra.mxu0 %v1270
    %v1302 = vpop.f32.mrf.mxu0
    %v1303 = vadd.f32 0.0, %v1302
    %v1304 = vpop.f32.mrf.mxu0
    %v1305 = vadd.f32 0.0, %v1304
    %1306 = vmatmul.bf16.gmra.mxu0 %v1273
    %v1307 = vpop.f32.mrf.mxu0
    %v1308 = vadd.f32 0.0, %v1307
    %v1309 = vpop.f32.mrf.mxu0
    %v1310 = vadd.f32 0.0, %v1309
    %1311 = vmatmul.bf16.gmra.mxu0 %v1276
    %v1312 = vpop.f32.mrf.mxu0
    %v1313 = vadd.f32 0.0, %v1312
    %v1314 = vpop.f32.mrf.mxu0
    %v1315 = vadd.f32 0.0, %v1314
    %1316 = vmatmul.bf16.gmra.mxu0 %v1279
    %v1317 = vpop.f32.mrf.mxu0
    %v1318 = vadd.f32 0.0, %v1317
    %v1319 = vpop.f32.mrf.mxu0
    %v1320 = vadd.f32 0.0, %v1319
    %1321 = vdwg.mxu0
    %v1330 = vunpack.c.l.b16 %v257
    %v1331 = vunpack.c.l.b16 %v258
    %v1332 = vunpack.c.l.b16 %v259
    %v1333 = vunpack.c.l.b16 %v260
    %v1334 = vunpack.c.l.b16 %v261
    %v1335 = vunpack.c.l.b16 %v262
    %v1336 = vunpack.c.l.b16 %v263
    %v1337 = vunpack.c.l.b16 %v264
    %v1338 = vpack.c.b16 %v1331, %v1330
    %v1339 = vpack.c.b16 %v1333, %v1332
    %v1340 = vpack.c.b16 %v1335, %v1334
    %v1341 = vpack.c.b16 %v1337, %v1336
    %v1350 = vunpack.c.l.b16 %v513
    %v1351 = vunpack.c.l.b16 %v514
    %v1352 = vunpack.c.l.b16 %v515
    %v1353 = vunpack.c.l.b16 %v516
    %v1354 = vunpack.c.l.b16 %v517
    %v1355 = vunpack.c.l.b16 %v518
    %v1356 = vunpack.c.l.b16 %v519
    %v1357 = vunpack.c.l.b16 %v520
    %v1358 = vpack.c.b16 %v1351, %v1350
    %v1359 = vpack.c.b16 %v1353, %v1352
    %v1360 = vpack.c.b16 %v1355, %v1354
    %v1361 = vpack.c.b16 %v1357, %v1356
    %v1363 = vsel %vm617, %v1338, 0
    %v1366 = vsel %vm617, %v1339, 0
    %v1369 = vsel %vm617, %v1340, 0
    %v1372 = vsel %vm617, %v1341, 0
    %v1375 = vsel %vm617, %v1358, 0
    %v1378 = vsel %vm617, %v1359, 0
    %v1381 = vsel %vm617, %v1360, 0
    %v1384 = vsel %vm617, %v1361, 0
    %1386 = vmatpush.bf16.xpose.msra.mxu0 0
    %1387 = vmatpush.bf16.xpose.msra.mxu0 0
    %1388 = vmatpush.bf16.xpose.msra.mxu0 0
    %1389 = vmatpush.bf16.xpose.msra.mxu0 0
    %1390 = vmatpush.bf16.xpose.msra.mxu0 %v1384
    %1391 = vmatpush.bf16.xpose.msra.mxu0 %v1381
    %1392 = vmatpush.bf16.xpose.msra.mxu0 %v1378
    %1393 = vmatpush.bf16.xpose.msra.mxu0 %v1375
    %1394 = vmatmul.bf16.gmra.mxu0 %v1363
    %v1395 = vpop.f32.mrf.mxu0
    %v1396 = vadd.f32 0.0, %v1395
    %v1397 = vpop.f32.mrf.mxu0
    %v1398 = vadd.f32 0.0, %v1397
    %1399 = vmatmul.bf16.gmra.mxu0 %v1366
    %v1400 = vpop.f32.mrf.mxu0
    %v1401 = vadd.f32 0.0, %v1400
    %v1402 = vpop.f32.mrf.mxu0
    %v1403 = vadd.f32 0.0, %v1402
    %1404 = vmatmul.bf16.gmra.mxu0 %v1369
    %v1405 = vpop.f32.mrf.mxu0
    %v1406 = vadd.f32 0.0, %v1405
    %v1407 = vpop.f32.mrf.mxu0
    %v1408 = vadd.f32 0.0, %v1407
    %1409 = vmatmul.bf16.gmra.mxu0 %v1372
    %v1410 = vpop.f32.mrf.mxu0
    %v1411 = vadd.f32 0.0, %v1410
    %v1412 = vpop.f32.mrf.mxu0
    %v1413 = vadd.f32 0.0, %v1412
    %1414 = vdwg.mxu0
    %v1423 = vunpack.c.l.b16 %v265
    %v1424 = vunpack.c.l.b16 %v266
    %v1425 = vunpack.c.l.b16 %v267
    %v1426 = vunpack.c.l.b16 %v268
    %v1427 = vunpack.c.l.b16 %v269
    %v1428 = vunpack.c.l.b16 %v270
    %v1429 = vunpack.c.l.b16 %v271
    %v1430 = vunpack.c.l.b16 %v272
    %v1431 = vpack.c.b16 %v1424, %v1423
    %v1432 = vpack.c.b16 %v1426, %v1425
    %v1433 = vpack.c.b16 %v1428, %v1427
    %v1434 = vpack.c.b16 %v1430, %v1429
    %v1443 = vunpack.c.l.b16 %v521
    %v1444 = vunpack.c.l.b16 %v522
    %v1445 = vunpack.c.l.b16 %v523
    %v1446 = vunpack.c.l.b16 %v524
    %v1447 = vunpack.c.l.b16 %v525
    %v1448 = vunpack.c.l.b16 %v526
    %v1449 = vunpack.c.l.b16 %v527
    %v1450 = vunpack.c.l.b16 %v528
    %v1451 = vpack.c.b16 %v1444, %v1443
    %v1452 = vpack.c.b16 %v1446, %v1445
    %v1453 = vpack.c.b16 %v1448, %v1447
    %v1454 = vpack.c.b16 %v1450, %v1449
    %v1456 = vsel %vm617, %v1431, 0
    %v1459 = vsel %vm617, %v1432, 0
    %v1462 = vsel %vm617, %v1433, 0
    %v1465 = vsel %vm617, %v1434, 0
    %v1468 = vsel %vm617, %v1451, 0
    %v1471 = vsel %vm617, %v1452, 0
    %v1474 = vsel %vm617, %v1453, 0
    %v1477 = vsel %vm617, %v1454, 0
    %1479 = vmatpush.bf16.xpose.msra.mxu0 0
    %1480 = vmatpush.bf16.xpose.msra.mxu0 0
    %1481 = vmatpush.bf16.xpose.msra.mxu0 0
    %1482 = vmatpush.bf16.xpose.msra.mxu0 0
    %1483 = vmatpush.bf16.xpose.msra.mxu0 %v1477
    %1484 = vmatpush.bf16.xpose.msra.mxu0 %v1474
    %1485 = vmatpush.bf16.xpose.msra.mxu0 %v1471
    %1486 = vmatpush.bf16.xpose.msra.mxu0 %v1468
    %1487 = vmatmul.bf16.gmra.mxu0 %v1456
    %v1488 = vpop.f32.mrf.mxu0
    %v1489 = vadd.f32 0.0, %v1488
    %v1490 = vpop.f32.mrf.mxu0
    %v1491 = vadd.f32 0.0, %v1490
    %1492 = vmatmul.bf16.gmra.mxu0 %v1459
    %v1493 = vpop.f32.mrf.mxu0
    %v1494 = vadd.f32 0.0, %v1493
    %v1495 = vpop.f32.mrf.mxu0
    %v1496 = vadd.f32 0.0, %v1495
    %1497 = vmatmul.bf16.gmra.mxu0 %v1462
    %v1498 = vpop.f32.mrf.mxu0
    %v1499 = vadd.f32 0.0, %v1498
    %v1500 = vpop.f32.mrf.mxu0
    %v1501 = vadd.f32 0.0, %v1500
    %1502 = vmatmul.bf16.gmra.mxu0 %v1465
    %v1503 = vpop.f32.mrf.mxu0
    %v1504 = vadd.f32 0.0, %v1503
    %v1505 = vpop.f32.mrf.mxu0
    %v1506 = vadd.f32 0.0, %v1505
    %1507 = vdwg.mxu0
    %v1516 = vunpack.c.l.b16 %v273
    %v1517 = vunpack.c.l.b16 %v274
    %v1518 = vunpack.c.l.b16 %v275
    %v1519 = vunpack.c.l.b16 %v276
    %v1520 = vunpack.c.l.b16 %v277
    %v1521 = vunpack.c.l.b16 %v278
    %v1522 = vunpack.c.l.b16 %v279
    %v1523 = vunpack.c.l.b16 %v280
    %v1524 = vpack.c.b16 %v1517, %v1516
    %v1525 = vpack.c.b16 %v1519, %v1518
    %v1526 = vpack.c.b16 %v1521, %v1520
    %v1527 = vpack.c.b16 %v1523, %v1522
    %v1536 = vunpack.c.l.b16 %v529
    %v1537 = vunpack.c.l.b16 %v530
    %v1538 = vunpack.c.l.b16 %v531
    %v1539 = vunpack.c.l.b16 %v532
    %v1540 = vunpack.c.l.b16 %v533
    %v1541 = vunpack.c.l.b16 %v534
    %v1542 = vunpack.c.l.b16 %v535
    %v1543 = vunpack.c.l.b16 %v536
    %v1544 = vpack.c.b16 %v1537, %v1536
    %v1545 = vpack.c.b16 %v1539, %v1538
    %v1546 = vpack.c.b16 %v1541, %v1540
    %v1547 = vpack.c.b16 %v1543, %v1542
    %v1549 = vsel %vm617, %v1524, 0
    %v1552 = vsel %vm617, %v1525, 0
    %v1555 = vsel %vm617, %v1526, 0
    %v1558 = vsel %vm617, %v1527, 0
    %v1561 = vsel %vm617, %v1544, 0
    %v1564 = vsel %vm617, %v1545, 0
    %v1567 = vsel %vm617, %v1546, 0
    %v1570 = vsel %vm617, %v1547, 0
    %1572 = vmatpush.bf16.xpose.msra.mxu0 0
    %1573 = vmatpush.bf16.xpose.msra.mxu0 0
    %1574 = vmatpush.bf16.xpose.msra.mxu0 0
    %1575 = vmatpush.bf16.xpose.msra.mxu0 0
    %1576 = vmatpush.bf16.xpose.msra.mxu0 %v1570
    %1577 = vmatpush.bf16.xpose.msra.mxu0 %v1567
    %1578 = vmatpush.bf16.xpose.msra.mxu0 %v1564
    %1579 = vmatpush.bf16.xpose.msra.mxu0 %v1561
    %1580 = vmatmul.bf16.gmra.mxu0 %v1549
    %v1581 = vpop.f32.mrf.mxu0
    %v1582 = vadd.f32 0.0, %v1581
    %v1583 = vpop.f32.mrf.mxu0
    %v1584 = vadd.f32 0.0, %v1583
    %1585 = vmatmul.bf16.gmra.mxu0 %v1552
    %v1586 = vpop.f32.mrf.mxu0
    %v1587 = vadd.f32 0.0, %v1586
    %v1588 = vpop.f32.mrf.mxu0
    %v1589 = vadd.f32 0.0, %v1588
    %1590 = vmatmul.bf16.gmra.mxu0 %v1555
    %v1591 = vpop.f32.mrf.mxu0
    %v1592 = vadd.f32 0.0, %v1591
    %v1593 = vpop.f32.mrf.mxu0
    %v1594 = vadd.f32 0.0, %v1593
    %1595 = vmatmul.bf16.gmra.mxu0 %v1558
    %v1596 = vpop.f32.mrf.mxu0
    %v1597 = vadd.f32 0.0, %v1596
    %v1598 = vpop.f32.mrf.mxu0
    %v1599 = vadd.f32 0.0, %v1598
    %1600 = vdwg.mxu0
    %v1609 = vunpack.c.l.b16 %v281
    %v1610 = vunpack.c.l.b16 %v282
    %v1611 = vunpack.c.l.b16 %v283
    %v1612 = vunpack.c.l.b16 %v284
    %v1613 = vunpack.c.l.b16 %v285
    %v1614 = vunpack.c.l.b16 %v286
    %v1615 = vunpack.c.l.b16 %v287
    %v1616 = vunpack.c.l.b16 %v288
    %v1617 = vpack.c.b16 %v1610, %v1609
    %v1618 = vpack.c.b16 %v1612, %v1611
    %v1619 = vpack.c.b16 %v1614, %v1613
    %v1620 = vpack.c.b16 %v1616, %v1615
    %v1629 = vunpack.c.l.b16 %v537
    %v1630 = vunpack.c.l.b16 %v538
    %v1631 = vunpack.c.l.b16 %v539
    %v1632 = vunpack.c.l.b16 %v540
    %v1633 = vunpack.c.l.b16 %v541
    %v1634 = vunpack.c.l.b16 %v542
    %v1635 = vunpack.c.l.b16 %v543
    %v1636 = vunpack.c.l.b16 %v544
    %v1637 = vpack.c.b16 %v1630, %v1629
    %v1638 = vpack.c.b16 %v1632, %v1631
    %v1639 = vpack.c.b16 %v1634, %v1633
    %v1640 = vpack.c.b16 %v1636, %v1635
    %v1642 = vsel %vm617, %v1617, 0
    %v1645 = vsel %vm617, %v1618, 0
    %v1648 = vsel %vm617, %v1619, 0
    %v1651 = vsel %vm617, %v1620, 0
    %v1654 = vsel %vm617, %v1637, 0
    %v1657 = vsel %vm617, %v1638, 0
    %v1660 = vsel %vm617, %v1639, 0
    %v1663 = vsel %vm617, %v1640, 0
    %1665 = vmatpush.bf16.xpose.msra.mxu0 0
    %1666 = vmatpush.bf16.xpose.msra.mxu0 0
    %1667 = vmatpush.bf16.xpose.msra.mxu0 0
    %1668 = vmatpush.bf16.xpose.msra.mxu0 0
    %1669 = vmatpush.bf16.xpose.msra.mxu0 %v1663
    %1670 = vmatpush.bf16.xpose.msra.mxu0 %v1660
    %1671 = vmatpush.bf16.xpose.msra.mxu0 %v1657
    %1672 = vmatpush.bf16.xpose.msra.mxu0 %v1654
    %1673 = vmatmul.bf16.gmra.mxu0 %v1642
    %v1674 = vpop.f32.mrf.mxu0
    %v1675 = vadd.f32 0.0, %v1674
    %v1676 = vpop.f32.mrf.mxu0
    %v1677 = vadd.f32 0.0, %v1676
    %1678 = vmatmul.bf16.gmra.mxu0 %v1645
    %v1679 = vpop.f32.mrf.mxu0
    %v1680 = vadd.f32 0.0, %v1679
    %v1681 = vpop.f32.mrf.mxu0
    %v1682 = vadd.f32 0.0, %v1681
    %1683 = vmatmul.bf16.gmra.mxu0 %v1648
    %v1684 = vpop.f32.mrf.mxu0
    %v1685 = vadd.f32 0.0, %v1684
    %v1686 = vpop.f32.mrf.mxu0
    %v1687 = vadd.f32 0.0, %v1686
    %1688 = vmatmul.bf16.gmra.mxu0 %v1651
    %v1689 = vpop.f32.mrf.mxu0
    %v1690 = vadd.f32 0.0, %v1689
    %v1691 = vpop.f32.mrf.mxu0
    %v1692 = vadd.f32 0.0, %v1691
    %1693 = vdwg.mxu0
    %v1702 = vunpack.c.l.b16 %v289
    %v1703 = vunpack.c.l.b16 %v290
    %v1704 = vunpack.c.l.b16 %v291
    %v1705 = vunpack.c.l.b16 %v292
    %v1706 = vunpack.c.l.b16 %v293
    %v1707 = vunpack.c.l.b16 %v294
    %v1708 = vunpack.c.l.b16 %v295
    %v1709 = vunpack.c.l.b16 %v296
    %v1710 = vpack.c.b16 %v1703, %v1702
    %v1711 = vpack.c.b16 %v1705, %v1704
    %v1712 = vpack.c.b16 %v1707, %v1706
    %v1713 = vpack.c.b16 %v1709, %v1708
    %v1722 = vunpack.c.l.b16 %v545
    %v1723 = vunpack.c.l.b16 %v546
    %v1724 = vunpack.c.l.b16 %v547
    %v1725 = vunpack.c.l.b16 %v548
    %v1726 = vunpack.c.l.b16 %v549
    %v1727 = vunpack.c.l.b16 %v550
    %v1728 = vunpack.c.l.b16 %v551
    %v1729 = vunpack.c.l.b16 %v552
    %v1730 = vpack.c.b16 %v1723, %v1722
    %v1731 = vpack.c.b16 %v1725, %v1724
    %v1732 = vpack.c.b16 %v1727, %v1726
    %v1733 = vpack.c.b16 %v1729, %v1728
    %v1735 = vsel %vm617, %v1710, 0
    %v1738 = vsel %vm617, %v1711, 0
    %v1741 = vsel %vm617, %v1712, 0
    %v1744 = vsel %vm617, %v1713, 0
    %v1747 = vsel %vm617, %v1730, 0
    %v1750 = vsel %vm617, %v1731, 0
    %v1753 = vsel %vm617, %v1732, 0
    %v1756 = vsel %vm617, %v1733, 0
    %1758 = vmatpush.bf16.xpose.msra.mxu0 0
    %1759 = vmatpush.bf16.xpose.msra.mxu0 0
    %1760 = vmatpush.bf16.xpose.msra.mxu0 0
    %1761 = vmatpush.bf16.xpose.msra.mxu0 0
    %1762 = vmatpush.bf16.xpose.msra.mxu0 %v1756
    %1763 = vmatpush.bf16.xpose.msra.mxu0 %v1753
    %1764 = vmatpush.bf16.xpose.msra.mxu0 %v1750
    %1765 = vmatpush.bf16.xpose.msra.mxu0 %v1747
    %1766 = vmatmul.bf16.gmra.mxu0 %v1735
    %v1767 = vpop.f32.mrf.mxu0
    %v1768 = vadd.f32 0.0, %v1767
    %v1769 = vpop.f32.mrf.mxu0
    %v1770 = vadd.f32 0.0, %v1769
    %1771 = vmatmul.bf16.gmra.mxu0 %v1738
    %v1772 = vpop.f32.mrf.mxu0
    %v1773 = vadd.f32 0.0, %v1772
    %v1774 = vpop.f32.mrf.mxu0
    %v1775 = vadd.f32 0.0, %v1774
    %1776 = vmatmul.bf16.gmra.mxu0 %v1741
    %v1777 = vpop.f32.mrf.mxu0
    %v1778 = vadd.f32 0.0, %v1777
    %v1779 = vpop.f32.mrf.mxu0
    %v1780 = vadd.f32 0.0, %v1779
    %1781 = vmatmul.bf16.gmra.mxu0 %v1744
    %v1782 = vpop.f32.mrf.mxu0
    %v1783 = vadd.f32 0.0, %v1782
    %v1784 = vpop.f32.mrf.mxu0
    %v1785 = vadd.f32 0.0, %v1784
    %1786 = vdwg.mxu0
    %v1795 = vunpack.c.l.b16 %v297
    %v1796 = vunpack.c.l.b16 %v298
    %v1797 = vunpack.c.l.b16 %v299
    %v1798 = vunpack.c.l.b16 %v300
    %v1799 = vunpack.c.l.b16 %v301
    %v1800 = vunpack.c.l.b16 %v302
    %v1801 = vunpack.c.l.b16 %v303
    %v1802 = vunpack.c.l.b16 %v304
    %v1803 = vpack.c.b16 %v1796, %v1795
    %v1804 = vpack.c.b16 %v1798, %v1797
    %v1805 = vpack.c.b16 %v1800, %v1799
    %v1806 = vpack.c.b16 %v1802, %v1801
    %v1815 = vunpack.c.l.b16 %v553
    %v1816 = vunpack.c.l.b16 %v554
    %v1817 = vunpack.c.l.b16 %v555
    %v1818 = vunpack.c.l.b16 %v556
    %v1819 = vunpack.c.l.b16 %v557
    %v1820 = vunpack.c.l.b16 %v558
    %v1821 = vunpack.c.l.b16 %v559
    %v1822 = vunpack.c.l.b16 %v560
    %v1823 = vpack.c.b16 %v1816, %v1815
    %v1824 = vpack.c.b16 %v1818, %v1817
    %v1825 = vpack.c.b16 %v1820, %v1819
    %v1826 = vpack.c.b16 %v1822, %v1821
    %v1828 = vsel %vm617, %v1803, 0
    %v1831 = vsel %vm617, %v1804, 0
    %v1834 = vsel %vm617, %v1805, 0
    %v1837 = vsel %vm617, %v1806, 0
    %v1840 = vsel %vm617, %v1823, 0
    %v1843 = vsel %vm617, %v1824, 0
    %v1846 = vsel %vm617, %v1825, 0
    %v1849 = vsel %vm617, %v1826, 0
    %1851 = vmatpush.bf16.xpose.msra.mxu0 0
    %1852 = vmatpush.bf16.xpose.msra.mxu0 0
    %1853 = vmatpush.bf16.xpose.msra.mxu0 0
    %1854 = vmatpush.bf16.xpose.msra.mxu0 0
    %1855 = vmatpush.bf16.xpose.msra.mxu0 %v1849
    %1856 = vmatpush.bf16.xpose.msra.mxu0 %v1846
    %1857 = vmatpush.bf16.xpose.msra.mxu0 %v1843
    %1858 = vmatpush.bf16.xpose.msra.mxu0 %v1840
    %1859 = vmatmul.bf16.gmra.mxu0 %v1828
    %v1860 = vpop.f32.mrf.mxu0
    %v1861 = vadd.f32 0.0, %v1860
    %v1862 = vpop.f32.mrf.mxu0
    %v1863 = vadd.f32 0.0, %v1862
    %1864 = vmatmul.bf16.gmra.mxu0 %v1831
    %v1865 = vpop.f32.mrf.mxu0
    %v1866 = vadd.f32 0.0, %v1865
    %v1867 = vpop.f32.mrf.mxu0
    %v1868 = vadd.f32 0.0, %v1867
    %1869 = vmatmul.bf16.gmra.mxu0 %v1834
    %v1870 = vpop.f32.mrf.mxu0
    %v1871 = vadd.f32 0.0, %v1870
    %v1872 = vpop.f32.mrf.mxu0
    %v1873 = vadd.f32 0.0, %v1872
    %1874 = vmatmul.bf16.gmra.mxu0 %v1837
    %v1875 = vpop.f32.mrf.mxu0
    %v1876 = vadd.f32 0.0, %v1875
    %v1877 = vpop.f32.mrf.mxu0
    %v1878 = vadd.f32 0.0, %v1877
    %1879 = vdwg.mxu0
    %v1888 = vunpack.c.l.b16 %v305
    %v1889 = vunpack.c.l.b16 %v306
    %v1890 = vunpack.c.l.b16 %v307
    %v1891 = vunpack.c.l.b16 %v308
    %v1892 = vunpack.c.l.b16 %v309
    %v1893 = vunpack.c.l.b16 %v310
    %v1894 = vunpack.c.l.b16 %v311
    %v1895 = vunpack.c.l.b16 %v312
    %v1896 = vpack.c.b16 %v1889, %v1888
    %v1897 = vpack.c.b16 %v1891, %v1890
    %v1898 = vpack.c.b16 %v1893, %v1892
    %v1899 = vpack.c.b16 %v1895, %v1894
    %v1908 = vunpack.c.l.b16 %v561
    %v1909 = vunpack.c.l.b16 %v562
    %v1910 = vunpack.c.l.b16 %v563
    %v1911 = vunpack.c.l.b16 %v564
    %v1912 = vunpack.c.l.b16 %v565
    %v1913 = vunpack.c.l.b16 %v566
    %v1914 = vunpack.c.l.b16 %v567
    %v1915 = vunpack.c.l.b16 %v568
    %v1916 = vpack.c.b16 %v1909, %v1908
    %v1917 = vpack.c.b16 %v1911, %v1910
    %v1918 = vpack.c.b16 %v1913, %v1912
    %v1919 = vpack.c.b16 %v1915, %v1914
    %v1921 = vsel %vm617, %v1896, 0
    %v1924 = vsel %vm617, %v1897, 0
    %v1927 = vsel %vm617, %v1898, 0
    %v1930 = vsel %vm617, %v1899, 0
    %v1933 = vsel %vm617, %v1916, 0
    %v1936 = vsel %vm617, %v1917, 0
    %v1939 = vsel %vm617, %v1918, 0
    %v1942 = vsel %vm617, %v1919, 0
    %1944 = vmatpush.bf16.xpose.msra.mxu0 0
    %1945 = vmatpush.bf16.xpose.msra.mxu0 0
    %1946 = vmatpush.bf16.xpose.msra.mxu0 0
    %1947 = vmatpush.bf16.xpose.msra.mxu0 0
    %1948 = vmatpush.bf16.xpose.msra.mxu0 %v1942
    %1949 = vmatpush.bf16.xpose.msra.mxu0 %v1939
    %1950 = vmatpush.bf16.xpose.msra.mxu0 %v1936
    %1951 = vmatpush.bf16.xpose.msra.mxu0 %v1933
    %1952 = vmatmul.bf16.gmra.mxu0 %v1921
    %v1953 = vpop.f32.mrf.mxu0
    %v1954 = vadd.f32 0.0, %v1953
    %v1955 = vpop.f32.mrf.mxu0
    %v1956 = vadd.f32 0.0, %v1955
    %1957 = vmatmul.bf16.gmra.mxu0 %v1924
    %v1958 = vpop.f32.mrf.mxu0
    %v1959 = vadd.f32 0.0, %v1958
    %v1960 = vpop.f32.mrf.mxu0
    %v1961 = vadd.f32 0.0, %v1960
    %1962 = vmatmul.bf16.gmra.mxu0 %v1927
    %v1963 = vpop.f32.mrf.mxu0
    %v1964 = vadd.f32 0.0, %v1963
    %v1965 = vpop.f32.mrf.mxu0
    %v1966 = vadd.f32 0.0, %v1965
    %1967 = vmatmul.bf16.gmra.mxu0 %v1930
    %v1968 = vpop.f32.mrf.mxu0
    %v1969 = vadd.f32 0.0, %v1968
    %v1970 = vpop.f32.mrf.mxu0
    %v1971 = vadd.f32 0.0, %v1970
    %1972 = vdwg.mxu0
    %v1981 = vunpack.c.l.b16 %v313
    %v1982 = vunpack.c.l.b16 %v314
    %v1983 = vunpack.c.l.b16 %v315
    %v1984 = vunpack.c.l.b16 %v316
    %v1985 = vunpack.c.l.b16 %v317
    %v1986 = vunpack.c.l.b16 %v318
    %v1987 = vunpack.c.l.b16 %v319
    %v1988 = vunpack.c.l.b16 %v320
    %v1989 = vpack.c.b16 %v1982, %v1981
    %v1990 = vpack.c.b16 %v1984, %v1983
    %v1991 = vpack.c.b16 %v1986, %v1985
    %v1992 = vpack.c.b16 %v1988, %v1987
    %v2001 = vunpack.c.l.b16 %v569
    %v2002 = vunpack.c.l.b16 %v570
    %v2003 = vunpack.c.l.b16 %v571
    %v2004 = vunpack.c.l.b16 %v572
    %v2005 = vunpack.c.l.b16 %v573
    %v2006 = vunpack.c.l.b16 %v574
    %v2007 = vunpack.c.l.b16 %v575
    %v2008 = vunpack.c.l.b16 %v576
    %v2009 = vpack.c.b16 %v2002, %v2001
    %v2010 = vpack.c.b16 %v2004, %v2003
    %v2011 = vpack.c.b16 %v2006, %v2005
    %v2012 = vpack.c.b16 %v2008, %v2007
    %v2014 = vsel %vm617, %v1989, 0
    %v2017 = vsel %vm617, %v1990, 0
    %v2020 = vsel %vm617, %v1991, 0
    %v2023 = vsel %vm617, %v1992, 0
    %v2026 = vsel %vm617, %v2009, 0
    %v2029 = vsel %vm617, %v2010, 0
    %v2032 = vsel %vm617, %v2011, 0
    %v2035 = vsel %vm617, %v2012, 0
    %2037 = vmatpush.bf16.xpose.msra.mxu0 0
    %2038 = vmatpush.bf16.xpose.msra.mxu0 0
    %2039 = vmatpush.bf16.xpose.msra.mxu0 0
    %2040 = vmatpush.bf16.xpose.msra.mxu0 0
    %2041 = vmatpush.bf16.xpose.msra.mxu0 %v2035
    %2042 = vmatpush.bf16.xpose.msra.mxu0 %v2032
    %2043 = vmatpush.bf16.xpose.msra.mxu0 %v2029
    %2044 = vmatpush.bf16.xpose.msra.mxu0 %v2026
    %2045 = vmatmul.bf16.gmra.mxu0 %v2014
    %v2046 = vpop.f32.mrf.mxu0
    %v2047 = vadd.f32 0.0, %v2046
    %v2048 = vpop.f32.mrf.mxu0
    %v2049 = vadd.f32 0.0, %v2048
    %2050 = vmatmul.bf16.gmra.mxu0 %v2017
    %v2051 = vpop.f32.mrf.mxu0
    %v2052 = vadd.f32 0.0, %v2051
    %v2053 = vpop.f32.mrf.mxu0
    %v2054 = vadd.f32 0.0, %v2053
    %2055 = vmatmul.bf16.gmra.mxu0 %v2020
    %v2056 = vpop.f32.mrf.mxu0
    %v2057 = vadd.f32 0.0, %v2056
    %v2058 = vpop.f32.mrf.mxu0
    %v2059 = vadd.f32 0.0, %v2058
    %2060 = vmatmul.bf16.gmra.mxu0 %v2023
    %v2061 = vpop.f32.mrf.mxu0
    %v2062 = vadd.f32 0.0, %v2061
    %v2063 = vpop.f32.mrf.mxu0
    %v2064 = vadd.f32 0.0, %v2063
    %2065 = vdwg.mxu0
    %v2066 = vsel %vm617, %v652, -inf
    %2067 = vmax.xlane.f32.xlu0 %v2066
    %v2068 = vpop.xlane.xlu0 %2067
    %v2069 = vsel %vm617, %v654, -inf
    %2070 = vmax.xlane.f32.xlu0 %v2069
    %v2071 = vpop.xlane.xlu0 %2070
    %v2072 = vsel %vm617, %v657, -inf
    %2073 = vmax.xlane.f32.xlu0 %v2072
    %v2074 = vpop.xlane.xlu0 %2073
    %v2075 = vsel %vm617, %v659, -inf
    %2076 = vmax.xlane.f32.xlu0 %v2075
    %v2077 = vpop.xlane.xlu0 %2076
    %v2078 = vsel %vm617, %v662, -inf
    %2079 = vmax.xlane.f32.xlu0 %v2078
    %v2080 = vpop.xlane.xlu0 %2079
    %v2081 = vsel %vm617, %v664, -inf
    %2082 = vmax.xlane.f32.xlu0 %v2081
    %v2083 = vpop.xlane.xlu0 %2082
    %v2084 = vsel %vm617, %v667, -inf
    %2085 = vmax.xlane.f32.xlu0 %v2084
    %v2086 = vpop.xlane.xlu0 %2085
    %v2087 = vsel %vm617, %v669, -inf
    %2088 = vmax.xlane.f32.xlu0 %v2087
    %v2089 = vpop.xlane.xlu0 %2088
    %v2090 = vsel %vm617, %v745, -inf
    %2091 = vmax.xlane.f32.xlu0 %v2090
    %v2092 = vpop.xlane.xlu0 %2091
    %v2093 = vsel %vm617, %v747, -inf
    %2094 = vmax.xlane.f32.xlu0 %v2093
    %v2095 = vpop.xlane.xlu0 %2094
    %v2096 = vsel %vm617, %v750, -inf
    %2097 = vmax.xlane.f32.xlu0 %v2096
    %v2098 = vpop.xlane.xlu0 %2097
    %v2099 = vsel %vm617, %v752, -inf
    %2100 = vmax.xlane.f32.xlu0 %v2099
    %v2101 = vpop.xlane.xlu0 %2100
    %v2102 = vsel %vm617, %v755, -inf
    %2103 = vmax.xlane.f32.xlu0 %v2102
    %v2104 = vpop.xlane.xlu0 %2103
    %v2105 = vsel %vm617, %v757, -inf
    %2106 = vmax.xlane.f32.xlu0 %v2105
    %v2107 = vpop.xlane.xlu0 %2106
    %v2108 = vsel %vm617, %v760, -inf
    %2109 = vmax.xlane.f32.xlu0 %v2108
    %v2110 = vpop.xlane.xlu0 %2109
    %v2111 = vsel %vm617, %v762, -inf
    %2112 = vmax.xlane.f32.xlu0 %v2111
    %v2113 = vpop.xlane.xlu0 %2112
    %v2114 = vsel %vm617, %v838, -inf
    %2115 = vmax.xlane.f32.xlu0 %v2114
    %v2116 = vpop.xlane.xlu0 %2115
    %v2117 = vsel %vm617, %v840, -inf
    %2118 = vmax.xlane.f32.xlu0 %v2117
    %v2119 = vpop.xlane.xlu0 %2118
    %v2120 = vsel %vm617, %v843, -inf
    %2121 = vmax.xlane.f32.xlu0 %v2120
    %v2122 = vpop.xlane.xlu0 %2121
    %v2123 = vsel %vm617, %v845, -inf
    %2124 = vmax.xlane.f32.xlu0 %v2123
    %v2125 = vpop.xlane.xlu0 %2124
    %v2126 = vsel %vm617, %v848, -inf
    %2127 = vmax.xlane.f32.xlu0 %v2126
    %v2128 = vpop.xlane.xlu0 %2127
    %v2129 = vsel %vm617, %v850, -inf
    %2130 = vmax.xlane.f32.xlu0 %v2129
    %v2131 = vpop.xlane.xlu0 %2130
    %v2132 = vsel %vm617, %v853, -inf
    %2133 = vmax.xlane.f32.xlu0 %v2132
    %v2134 = vpop.xlane.xlu0 %2133
    %v2135 = vsel %vm617, %v855, -inf
    %2136 = vmax.xlane.f32.xlu0 %v2135
    %v2137 = vpop.xlane.xlu0 %2136
    %v2138 = vsel %vm617, %v931, -inf
    %2139 = vmax.xlane.f32.xlu0 %v2138
    %v2140 = vpop.xlane.xlu0 %2139
    %v2141 = vsel %vm617, %v933, -inf
    %2142 = vmax.xlane.f32.xlu0 %v2141
    %v2143 = vpop.xlane.xlu0 %2142
    %v2144 = vsel %vm617, %v936, -inf
    %2145 = vmax.xlane.f32.xlu0 %v2144
    %v2146 = vpop.xlane.xlu0 %2145
    %v2147 = vsel %vm617, %v938, -inf
    %2148 = vmax.xlane.f32.xlu0 %v2147
    %v2149 = vpop.xlane.xlu0 %2148
    %v2150 = vsel %vm617, %v941, -inf
    %2151 = vmax.xlane.f32.xlu0 %v2150
    %v2152 = vpop.xlane.xlu0 %2151
    %v2153 = vsel %vm617, %v943, -inf
    %2154 = vmax.xlane.f32.xlu0 %v2153
    %v2155 = vpop.xlane.xlu0 %2154
    %v2156 = vsel %vm617, %v946, -inf
    %2157 = vmax.xlane.f32.xlu0 %v2156
    %v2158 = vpop.xlane.xlu0 %2157
    %v2159 = vsel %vm617, %v948, -inf
    %2160 = vmax.xlane.f32.xlu0 %v2159
    %v2161 = vpop.xlane.xlu0 %2160
    %v2162 = vsel %vm617, %v1024, -inf
    %2163 = vmax.xlane.f32.xlu0 %v2162
    %v2164 = vpop.xlane.xlu0 %2163
    %v2165 = vsel %vm617, %v1026, -inf
    %2166 = vmax.xlane.f32.xlu0 %v2165
    %v2167 = vpop.xlane.xlu0 %2166
    %v2168 = vsel %vm617, %v1029, -inf
    %2169 = vmax.xlane.f32.xlu0 %v2168
    %v2170 = vpop.xlane.xlu0 %2169
    %v2171 = vsel %vm617, %v1031, -inf
    %2172 = vmax.xlane.f32.xlu0 %v2171
    %v2173 = vpop.xlane.xlu0 %2172
    %v2174 = vsel %vm617, %v1034, -inf
    %2175 = vmax.xlane.f32.xlu0 %v2174
    %v2176 = vpop.xlane.xlu0 %2175
    %v2177 = vsel %vm617, %v1036, -inf
    %2178 = vmax.xlane.f32.xlu0 %v2177
    %v2179 = vpop.xlane.xlu0 %2178
    %v2180 = vsel %vm617, %v1039, -inf
    %2181 = vmax.xlane.f32.xlu0 %v2180
    %v2182 = vpop.xlane.xlu0 %2181
    %v2183 = vsel %vm617, %v1041, -inf
    %2184 = vmax.xlane.f32.xlu0 %v2183
    %v2185 = vpop.xlane.xlu0 %2184
    %v2186 = vsel %vm617, %v1117, -inf
    %2187 = vmax.xlane.f32.xlu0 %v2186
    %v2188 = vpop.xlane.xlu0 %2187
    %v2189 = vsel %vm617, %v1119, -inf
    %2190 = vmax.xlane.f32.xlu0 %v2189
    %v2191 = vpop.xlane.xlu0 %2190
    %v2192 = vsel %vm617, %v1122, -inf
    %2193 = vmax.xlane.f32.xlu0 %v2192
    %v2194 = vpop.xlane.xlu0 %2193
    %v2195 = vsel %vm617, %v1124, -inf
    %2196 = vmax.xlane.f32.xlu0 %v2195
    %v2197 = vpop.xlane.xlu0 %2196
    %v2198 = vsel %vm617, %v1127, -inf
    %2199 = vmax.xlane.f32.xlu0 %v2198
    %v2200 = vpop.xlane.xlu0 %2199
    %v2201 = vsel %vm617, %v1129, -inf
    %2202 = vmax.xlane.f32.xlu0 %v2201
    %v2203 = vpop.xlane.xlu0 %2202
    %v2204 = vsel %vm617, %v1132, -inf
    %2205 = vmax.xlane.f32.xlu0 %v2204
    %v2206 = vpop.xlane.xlu0 %2205
    %v2207 = vsel %vm617, %v1134, -inf
    %2208 = vmax.xlane.f32.xlu0 %v2207
    %v2209 = vpop.xlane.xlu0 %2208
    %v2210 = vsel %vm617, %v1210, -inf
    %2211 = vmax.xlane.f32.xlu0 %v2210
    %v2212 = vpop.xlane.xlu0 %2211
    %v2213 = vsel %vm617, %v1212, -inf
    %2214 = vmax.xlane.f32.xlu0 %v2213
    %v2215 = vpop.xlane.xlu0 %2214
    %v2216 = vsel %vm617, %v1215, -inf
    %2217 = vmax.xlane.f32.xlu0 %v2216
    %v2218 = vpop.xlane.xlu0 %2217
    %v2219 = vsel %vm617, %v1217, -inf
    %2220 = vmax.xlane.f32.xlu0 %v2219
    %v2221 = vpop.xlane.xlu0 %2220
    %v2222 = vsel %vm617, %v1220, -inf
    %2223 = vmax.xlane.f32.xlu0 %v2222
    %v2224 = vpop.xlane.xlu0 %2223
    %v2225 = vsel %vm617, %v1222, -inf
    %2226 = vmax.xlane.f32.xlu0 %v2225
    %v2227 = vpop.xlane.xlu0 %2226
    %v2228 = vsel %vm617, %v1225, -inf
    %2229 = vmax.xlane.f32.xlu0 %v2228
    %v2230 = vpop.xlane.xlu0 %2229
    %v2231 = vsel %vm617, %v1227, -inf
    %2232 = vmax.xlane.f32.xlu0 %v2231
    %v2233 = vpop.xlane.xlu0 %2232
    %v2234 = vsel %vm617, %v1303, -inf
    %2235 = vmax.xlane.f32.xlu0 %v2234
    %v2236 = vpop.xlane.xlu0 %2235
    %v2237 = vsel %vm617, %v1305, -inf
    %2238 = vmax.xlane.f32.xlu0 %v2237
    %v2239 = vpop.xlane.xlu0 %2238
    %v2240 = vsel %vm617, %v1308, -inf
    %2241 = vmax.xlane.f32.xlu0 %v2240
    %v2242 = vpop.xlane.xlu0 %2241
    %v2243 = vsel %vm617, %v1310, -inf
    %2244 = vmax.xlane.f32.xlu0 %v2243
    %v2245 = vpop.xlane.xlu0 %2244
    %v2246 = vsel %vm617, %v1313, -inf
    %2247 = vmax.xlane.f32.xlu0 %v2246
    %v2248 = vpop.xlane.xlu0 %2247
    %v2249 = vsel %vm617, %v1315, -inf
    %2250 = vmax.xlane.f32.xlu0 %v2249
    %v2251 = vpop.xlane.xlu0 %2250
    %v2252 = vsel %vm617, %v1318, -inf
    %2253 = vmax.xlane.f32.xlu0 %v2252
    %v2254 = vpop.xlane.xlu0 %2253
    %v2255 = vsel %vm617, %v1320, -inf
    %2256 = vmax.xlane.f32.xlu0 %v2255
    %v2257 = vpop.xlane.xlu0 %2256
    %v2258 = vsel %vm617, %v1396, -inf
    %2259 = vmax.xlane.f32.xlu0 %v2258
    %v2260 = vpop.xlane.xlu0 %2259
    %v2261 = vsel %vm617, %v1398, -inf
    %2262 = vmax.xlane.f32.xlu0 %v2261
    %v2263 = vpop.xlane.xlu0 %2262
    %v2264 = vsel %vm617, %v1401, -inf
    %2265 = vmax.xlane.f32.xlu0 %v2264
    %v2266 = vpop.xlane.xlu0 %2265
    %v2267 = vsel %vm617, %v1403, -inf
    %2268 = vmax.xlane.f32.xlu0 %v2267
    %v2269 = vpop.xlane.xlu0 %2268
    %v2270 = vsel %vm617, %v1406, -inf
    %2271 = vmax.xlane.f32.xlu0 %v2270
    %v2272 = vpop.xlane.xlu0 %2271
    %v2273 = vsel %vm617, %v1408, -inf
    %2274 = vmax.xlane.f32.xlu0 %v2273
    %v2275 = vpop.xlane.xlu0 %2274
    %v2276 = vsel %vm617, %v1411, -inf
    %2277 = vmax.xlane.f32.xlu0 %v2276
    %v2278 = vpop.xlane.xlu0 %2277
    %v2279 = vsel %vm617, %v1413, -inf
    %2280 = vmax.xlane.f32.xlu0 %v2279
    %v2281 = vpop.xlane.xlu0 %2280
    %v2282 = vsel %vm617, %v1489, -inf
    %2283 = vmax.xlane.f32.xlu0 %v2282
    %v2284 = vpop.xlane.xlu0 %2283
    %v2285 = vsel %vm617, %v1491, -inf
    %2286 = vmax.xlane.f32.xlu0 %v2285
    %v2287 = vpop.xlane.xlu0 %2286
    %v2288 = vsel %vm617, %v1494, -inf
    %2289 = vmax.xlane.f32.xlu0 %v2288
    %v2290 = vpop.xlane.xlu0 %2289
    %v2291 = vsel %vm617, %v1496, -inf
    %2292 = vmax.xlane.f32.xlu0 %v2291
    %v2293 = vpop.xlane.xlu0 %2292
    %v2294 = vsel %vm617, %v1499, -inf
    %2295 = vmax.xlane.f32.xlu0 %v2294
    %v2296 = vpop.xlane.xlu0 %2295
    %v2297 = vsel %vm617, %v1501, -inf
    %2298 = vmax.xlane.f32.xlu0 %v2297
    %v2299 = vpop.xlane.xlu0 %2298
    %v2300 = vsel %vm617, %v1504, -inf
    %2301 = vmax.xlane.f32.xlu0 %v2300
    %v2302 = vpop.xlane.xlu0 %2301
    %v2303 = vsel %vm617, %v1506, -inf
    %2304 = vmax.xlane.f32.xlu0 %v2303
    %v2305 = vpop.xlane.xlu0 %2304
    %v2306 = vsel %vm617, %v1582, -inf
    %2307 = vmax.xlane.f32.xlu0 %v2306
    %v2308 = vpop.xlane.xlu0 %2307
    %v2309 = vsel %vm617, %v1584, -inf
    %2310 = vmax.xlane.f32.xlu0 %v2309
    %v2311 = vpop.xlane.xlu0 %2310
    %v2312 = vsel %vm617, %v1587, -inf
    %2313 = vmax.xlane.f32.xlu0 %v2312
    %v2314 = vpop.xlane.xlu0 %2313
    %v2315 = vsel %vm617, %v1589, -inf
    %2316 = vmax.xlane.f32.xlu0 %v2315
    %v2317 = vpop.xlane.xlu0 %2316
    %v2318 = vsel %vm617, %v1592, -inf
    %2319 = vmax.xlane.f32.xlu0 %v2318
    %v2320 = vpop.xlane.xlu0 %2319
    %v2321 = vsel %vm617, %v1594, -inf
    %2322 = vmax.xlane.f32.xlu0 %v2321
    %v2323 = vpop.xlane.xlu0 %2322
    %v2324 = vsel %vm617, %v1597, -inf
    %2325 = vmax.xlane.f32.xlu0 %v2324
    %v2326 = vpop.xlane.xlu0 %2325
    %v2327 = vsel %vm617, %v1599, -inf
    %2328 = vmax.xlane.f32.xlu0 %v2327
    %v2329 = vpop.xlane.xlu0 %2328
    %v2330 = vsel %vm617, %v1675, -inf
    %2331 = vmax.xlane.f32.xlu0 %v2330
    %v2332 = vpop.xlane.xlu0 %2331
    %v2333 = vsel %vm617, %v1677, -inf
    %2334 = vmax.xlane.f32.xlu0 %v2333
    %v2335 = vpop.xlane.xlu0 %2334
    %v2336 = vsel %vm617, %v1680, -inf
    %2337 = vmax.xlane.f32.xlu0 %v2336
    %v2338 = vpop.xlane.xlu0 %2337
    %v2339 = vsel %vm617, %v1682, -inf
    %2340 = vmax.xlane.f32.xlu0 %v2339
    %v2341 = vpop.xlane.xlu0 %2340
    %v2342 = vsel %vm617, %v1685, -inf
    %2343 = vmax.xlane.f32.xlu0 %v2342
    %v2344 = vpop.xlane.xlu0 %2343
    %v2345 = vsel %vm617, %v1687, -inf
    %2346 = vmax.xlane.f32.xlu0 %v2345
    %v2347 = vpop.xlane.xlu0 %2346
    %v2348 = vsel %vm617, %v1690, -inf
    %2349 = vmax.xlane.f32.xlu0 %v2348
    %v2350 = vpop.xlane.xlu0 %2349
    %v2351 = vsel %vm617, %v1692, -inf
    %2352 = vmax.xlane.f32.xlu0 %v2351
    %v2353 = vpop.xlane.xlu0 %2352
    %v2354 = vsel %vm617, %v1768, -inf
    %2355 = vmax.xlane.f32.xlu0 %v2354
    %v2356 = vpop.xlane.xlu0 %2355
    %v2357 = vsel %vm617, %v1770, -inf
    %2358 = vmax.xlane.f32.xlu0 %v2357
    %v2359 = vpop.xlane.xlu0 %2358
    %v2360 = vsel %vm617, %v1773, -inf
    %2361 = vmax.xlane.f32.xlu0 %v2360
    %v2362 = vpop.xlane.xlu0 %2361
    %v2363 = vsel %vm617, %v1775, -inf
    %2364 = vmax.xlane.f32.xlu0 %v2363
    %v2365 = vpop.xlane.xlu0 %2364
    %v2366 = vsel %vm617, %v1778, -inf
    %2367 = vmax.xlane.f32.xlu0 %v2366
    %v2368 = vpop.xlane.xlu0 %2367
    %v2369 = vsel %vm617, %v1780, -inf
    %2370 = vmax.xlane.f32.xlu0 %v2369
    %v2371 = vpop.xlane.xlu0 %2370
    %v2372 = vsel %vm617, %v1783, -inf
    %2373 = vmax.xlane.f32.xlu0 %v2372
    %v2374 = vpop.xlane.xlu0 %2373
    %v2375 = vsel %vm617, %v1785, -inf
    %2376 = vmax.xlane.f32.xlu0 %v2375
    %v2377 = vpop.xlane.xlu0 %2376
    %v2378 = vsel %vm617, %v1861, -inf
    %2379 = vmax.xlane.f32.xlu0 %v2378
    %v2380 = vpop.xlane.xlu0 %2379
    %v2381 = vsel %vm617, %v1863, -inf
    %2382 = vmax.xlane.f32.xlu0 %v2381
    %v2383 = vpop.xlane.xlu0 %2382
    %v2384 = vsel %vm617, %v1866, -inf
    %2385 = vmax.xlane.f32.xlu0 %v2384
    %v2386 = vpop.xlane.xlu0 %2385
    %v2387 = vsel %vm617, %v1868, -inf
    %2388 = vmax.xlane.f32.xlu0 %v2387
    %v2389 = vpop.xlane.xlu0 %2388
    %v2390 = vsel %vm617, %v1871, -inf
    %2391 = vmax.xlane.f32.xlu0 %v2390
    %v2392 = vpop.xlane.xlu0 %2391
    %v2393 = vsel %vm617, %v1873, -inf
    %2394 = vmax.xlane.f32.xlu0 %v2393
    %v2395 = vpop.xlane.xlu0 %2394
    %v2396 = vsel %vm617, %v1876, -inf
    %2397 = vmax.xlane.f32.xlu0 %v2396
    %v2398 = vpop.xlane.xlu0 %2397
    %v2399 = vsel %vm617, %v1878, -inf
    %2400 = vmax.xlane.f32.xlu0 %v2399
    %v2401 = vpop.xlane.xlu0 %2400
    %v2402 = vsel %vm617, %v1954, -inf
    %2403 = vmax.xlane.f32.xlu0 %v2402
    %v2404 = vpop.xlane.xlu0 %2403
    %v2405 = vsel %vm617, %v1956, -inf
    %2406 = vmax.xlane.f32.xlu0 %v2405
    %v2407 = vpop.xlane.xlu0 %2406
    %v2408 = vsel %vm617, %v1959, -inf
    %2409 = vmax.xlane.f32.xlu0 %v2408
    %v2410 = vpop.xlane.xlu0 %2409
    %v2411 = vsel %vm617, %v1961, -inf
    %2412 = vmax.xlane.f32.xlu0 %v2411
    %v2413 = vpop.xlane.xlu0 %2412
    %v2414 = vsel %vm617, %v1964, -inf
    %2415 = vmax.xlane.f32.xlu0 %v2414
    %v2416 = vpop.xlane.xlu0 %2415
    %v2417 = vsel %vm617, %v1966, -inf
    %2418 = vmax.xlane.f32.xlu0 %v2417
    %v2419 = vpop.xlane.xlu0 %2418
    %v2420 = vsel %vm617, %v1969, -inf
    %2421 = vmax.xlane.f32.xlu0 %v2420
    %v2422 = vpop.xlane.xlu0 %2421
    %v2423 = vsel %vm617, %v1971, -inf
    %2424 = vmax.xlane.f32.xlu0 %v2423
    %v2425 = vpop.xlane.xlu0 %2424
    %v2426 = vsel %vm617, %v2047, -inf
    %2427 = vmax.xlane.f32.xlu0 %v2426
    %v2428 = vpop.xlane.xlu0 %2427
    %v2429 = vsel %vm617, %v2049, -inf
    %2430 = vmax.xlane.f32.xlu0 %v2429
    %v2431 = vpop.xlane.xlu0 %2430
    %v2432 = vsel %vm617, %v2052, -inf
    %2433 = vmax.xlane.f32.xlu0 %v2432
    %v2434 = vpop.xlane.xlu0 %2433
    %v2435 = vsel %vm617, %v2054, -inf
    %2436 = vmax.xlane.f32.xlu0 %v2435
    %v2437 = vpop.xlane.xlu0 %2436
    %v2438 = vsel %vm617, %v2057, -inf
    %2439 = vmax.xlane.f32.xlu0 %v2438
    %v2440 = vpop.xlane.xlu0 %2439
    %v2441 = vsel %vm617, %v2059, -inf
    %2442 = vmax.xlane.f32.xlu0 %v2441
    %v2443 = vpop.xlane.xlu0 %2442
    %v2444 = vsel %vm617, %v2062, -inf
    %2445 = vmax.xlane.f32.xlu0 %v2444
    %v2446 = vpop.xlane.xlu0 %2445
    %v2447 = vsel %vm617, %v2064, -inf
    %2448 = vmax.xlane.f32.xlu0 %v2447
    %v2449 = vpop.xlane.xlu0 %2448
    %v2450 = vsub.f32 %v652, %v2068
    %v2451 = vsub.f32 %v654, %v2071
    %v2452 = vsub.f32 %v657, %v2074
    %v2453 = vsub.f32 %v659, %v2077
    %v2454 = vsub.f32 %v662, %v2080
    %v2455 = vsub.f32 %v664, %v2083
    %v2456 = vsub.f32 %v667, %v2086
    %v2457 = vsub.f32 %v669, %v2089
    %v2458 = vsub.f32 %v745, %v2092
    %v2459 = vsub.f32 %v747, %v2095
    %v2460 = vsub.f32 %v750, %v2098
    %v2461 = vsub.f32 %v752, %v2101
    %v2462 = vsub.f32 %v755, %v2104
    %v2463 = vsub.f32 %v757, %v2107
    %v2464 = vsub.f32 %v760, %v2110
    %v2465 = vsub.f32 %v762, %v2113
    %v2466 = vsub.f32 %v838, %v2116
    %v2467 = vsub.f32 %v840, %v2119
    %v2468 = vsub.f32 %v843, %v2122
    %v2469 = vsub.f32 %v845, %v2125
    %v2470 = vsub.f32 %v848, %v2128
    %v2471 = vsub.f32 %v850, %v2131
    %v2472 = vsub.f32 %v853, %v2134
    %v2473 = vsub.f32 %v855, %v2137
    %v2474 = vsub.f32 %v931, %v2140
    %v2475 = vsub.f32 %v933, %v2143
    %v2476 = vsub.f32 %v936, %v2146
    %v2477 = vsub.f32 %v938, %v2149
    %v2478 = vsub.f32 %v941, %v2152
    %v2479 = vsub.f32 %v943, %v2155
    %v2480 = vsub.f32 %v946, %v2158
    %v2481 = vsub.f32 %v948, %v2161
    %v2482 = vsub.f32 %v1024, %v2164
    %v2483 = vsub.f32 %v1026, %v2167
    %v2484 = vsub.f32 %v1029, %v2170
    %v2485 = vsub.f32 %v1031, %v2173
    %v2486 = vsub.f32 %v1034, %v2176
    %v2487 = vsub.f32 %v1036, %v2179
    %v2488 = vsub.f32 %v1039, %v2182
    %v2489 = vsub.f32 %v1041, %v2185
    %v2490 = vsub.f32 %v1117, %v2188
    %v2491 = vsub.f32 %v1119, %v2191
    %v2492 = vsub.f32 %v1122, %v2194
    %v2493 = vsub.f32 %v1124, %v2197
    %v2494 = vsub.f32 %v1127, %v2200
    %v2495 = vsub.f32 %v1129, %v2203
    %v2496 = vsub.f32 %v1132, %v2206
    %v2497 = vsub.f32 %v1134, %v2209
    %v2498 = vsub.f32 %v1210, %v2212
    %v2499 = vsub.f32 %v1212, %v2215
    %v2500 = vsub.f32 %v1215, %v2218
    %v2501 = vsub.f32 %v1217, %v2221
    %v2502 = vsub.f32 %v1220, %v2224
    %v2503 = vsub.f32 %v1222, %v2227
    %v2504 = vsub.f32 %v1225, %v2230
    %v2505 = vsub.f32 %v1227, %v2233
    %v2506 = vsub.f32 %v1303, %v2236
    %v2507 = vsub.f32 %v1305, %v2239
    %v2508 = vsub.f32 %v1308, %v2242
    %v2509 = vsub.f32 %v1310, %v2245
    %v2510 = vsub.f32 %v1313, %v2248
    %v2511 = vsub.f32 %v1315, %v2251
    %v2512 = vsub.f32 %v1318, %v2254
    %v2513 = vsub.f32 %v1320, %v2257
    %v2514 = vsub.f32 %v1396, %v2260
    %v2515 = vsub.f32 %v1398, %v2263
    %v2516 = vsub.f32 %v1401, %v2266
    %v2517 = vsub.f32 %v1403, %v2269
    %v2518 = vsub.f32 %v1406, %v2272
    %v2519 = vsub.f32 %v1408, %v2275
    %v2520 = vsub.f32 %v1411, %v2278
    %v2521 = vsub.f32 %v1413, %v2281
    %v2522 = vsub.f32 %v1489, %v2284
    %v2523 = vsub.f32 %v1491, %v2287
    %v2524 = vsub.f32 %v1494, %v2290
    %v2525 = vsub.f32 %v1496, %v2293
    %v2526 = vsub.f32 %v1499, %v2296
    %v2527 = vsub.f32 %v1501, %v2299
    %v2528 = vsub.f32 %v1504, %v2302
    %v2529 = vsub.f32 %v1506, %v2305
    %v2530 = vsub.f32 %v1582, %v2308
    %v2531 = vsub.f32 %v1584, %v2311
    %v2532 = vsub.f32 %v1587, %v2314
    %v2533 = vsub.f32 %v1589, %v2317
    %v2534 = vsub.f32 %v1592, %v2320
    %v2535 = vsub.f32 %v1594, %v2323
    %v2536 = vsub.f32 %v1597, %v2326
    %v2537 = vsub.f32 %v1599, %v2329
    %v2538 = vsub.f32 %v1675, %v2332
    %v2539 = vsub.f32 %v1677, %v2335
    %v2540 = vsub.f32 %v1680, %v2338
    %v2541 = vsub.f32 %v1682, %v2341
    %v2542 = vsub.f32 %v1685, %v2344
    %v2543 = vsub.f32 %v1687, %v2347
    %v2544 = vsub.f32 %v1690, %v2350
    %v2545 = vsub.f32 %v1692, %v2353
    %v2546 = vsub.f32 %v1768, %v2356
    %v2547 = vsub.f32 %v1770, %v2359
    %v2548 = vsub.f32 %v1773, %v2362
    %v2549 = vsub.f32 %v1775, %v2365
    %v2550 = vsub.f32 %v1778, %v2368
    %v2551 = vsub.f32 %v1780, %v2371
    %v2552 = vsub.f32 %v1783, %v2374
    %v2553 = vsub.f32 %v1785, %v2377
    %v2554 = vsub.f32 %v1861, %v2380
    %v2555 = vsub.f32 %v1863, %v2383
    %v2556 = vsub.f32 %v1866, %v2386
    %v2557 = vsub.f32 %v1868, %v2389
    %v2558 = vsub.f32 %v1871, %v2392
    %v2559 = vsub.f32 %v1873, %v2395
    %v2560 = vsub.f32 %v1876, %v2398
    %v2561 = vsub.f32 %v1878, %v2401
    %v2562 = vsub.f32 %v1954, %v2404
    %v2563 = vsub.f32 %v1956, %v2407
    %v2564 = vsub.f32 %v1959, %v2410
    %v2565 = vsub.f32 %v1961, %v2413
    %v2566 = vsub.f32 %v1964, %v2416
    %v2567 = vsub.f32 %v1966, %v2419
    %v2568 = vsub.f32 %v1969, %v2422
    %v2569 = vsub.f32 %v1971, %v2425
    %v2570 = vsub.f32 %v2047, %v2428
    %v2571 = vsub.f32 %v2049, %v2431
    %v2572 = vsub.f32 %v2052, %v2434
    %v2573 = vsub.f32 %v2054, %v2437
    %v2574 = vsub.f32 %v2057, %v2440
    %v2575 = vsub.f32 %v2059, %v2443
    %v2576 = vsub.f32 %v2062, %v2446
    %v2577 = vsub.f32 %v2064, %v2449
    %v2578 = vmul.f32 %v2450, 1.442695
    %v2579 = vpow.pop %v2578
    %v2580 = vmul.f32 %v2451, 1.442695
    %v2581 = vpow.pop %v2580
    %v2582 = vmul.f32 %v2452, 1.442695
    %v2583 = vpow.pop %v2582
    %v2584 = vmul.f32 %v2453, 1.442695
    %v2585 = vpow.pop %v2584
    %v2586 = vmul.f32 %v2454, 1.442695
    %v2587 = vpow.pop %v2586
    %v2588 = vmul.f32 %v2455, 1.442695
    %v2589 = vpow.pop %v2588
    %v2590 = vmul.f32 %v2456, 1.442695
    %v2591 = vpow.pop %v2590
    %v2592 = vmul.f32 %v2457, 1.442695
    %v2593 = vpow.pop %v2592
    %v2594 = vmul.f32 %v2458, 1.442695
    %v2595 = vpow.pop %v2594
    %v2596 = vmul.f32 %v2459, 1.442695
    %v2597 = vpow.pop %v2596
    %v2598 = vmul.f32 %v2460, 1.442695
    %v2599 = vpow.pop %v2598
    %v2600 = vmul.f32 %v2461, 1.442695
    %v2601 = vpow.pop %v2600
    %v2602 = vmul.f32 %v2462, 1.442695
    %v2603 = vpow.pop %v2602
    %v2604 = vmul.f32 %v2463, 1.442695
    %v2605 = vpow.pop %v2604
    %v2606 = vmul.f32 %v2464, 1.442695
    %v2607 = vpow.pop %v2606
    %v2608 = vmul.f32 %v2465, 1.442695
    %v2609 = vpow.pop %v2608
    %v2610 = vmul.f32 %v2466, 1.442695
    %v2611 = vpow.pop %v2610
    %v2612 = vmul.f32 %v2467, 1.442695
    %v2613 = vpow.pop %v2612
    %v2614 = vmul.f32 %v2468, 1.442695
    %v2615 = vpow.pop %v2614
    %v2616 = vmul.f32 %v2469, 1.442695
    %v2617 = vpow.pop %v2616
    %v2618 = vmul.f32 %v2470, 1.442695
    %v2619 = vpow.pop %v2618
    %v2620 = vmul.f32 %v2471, 1.442695
    %v2621 = vpow.pop %v2620
    %v2622 = vmul.f32 %v2472, 1.442695
    %v2623 = vpow.pop %v2622
    %v2624 = vmul.f32 %v2473, 1.442695
    %v2625 = vpow.pop %v2624
    %v2626 = vmul.f32 %v2474, 1.442695
    %v2627 = vpow.pop %v2626
    %v2628 = vmul.f32 %v2475, 1.442695
    %v2629 = vpow.pop %v2628
    %v2630 = vmul.f32 %v2476, 1.442695
    %v2631 = vpow.pop %v2630
    %v2632 = vmul.f32 %v2477, 1.442695
    %v2633 = vpow.pop %v2632
    %v2634 = vmul.f32 %v2478, 1.442695
    %v2635 = vpow.pop %v2634
    %v2636 = vmul.f32 %v2479, 1.442695
    %v2637 = vpow.pop %v2636
    %v2638 = vmul.f32 %v2480, 1.442695
    %v2639 = vpow.pop %v2638
    %v2640 = vmul.f32 %v2481, 1.442695
    %v2641 = vpow.pop %v2640
    %v2642 = vmul.f32 %v2482, 1.442695
    %v2643 = vpow.pop %v2642
    %v2644 = vmul.f32 %v2483, 1.442695
    %v2645 = vpow.pop %v2644
    %v2646 = vmul.f32 %v2484, 1.442695
    %v2647 = vpow.pop %v2646
    %v2648 = vmul.f32 %v2485, 1.442695
    %v2649 = vpow.pop %v2648
    %v2650 = vmul.f32 %v2486, 1.442695
    %v2651 = vpow.pop %v2650
    %v2652 = vmul.f32 %v2487, 1.442695
    %v2653 = vpow.pop %v2652
    %v2654 = vmul.f32 %v2488, 1.442695
    %v2655 = vpow.pop %v2654
    %v2656 = vmul.f32 %v2489, 1.442695
    %v2657 = vpow.pop %v2656
    %v2658 = vmul.f32 %v2490, 1.442695
    %v2659 = vpow.pop %v2658
    %v2660 = vmul.f32 %v2491, 1.442695
    %v2661 = vpow.pop %v2660
    %v2662 = vmul.f32 %v2492, 1.442695
    %v2663 = vpow.pop %v2662
    %v2664 = vmul.f32 %v2493, 1.442695
    %v2665 = vpow.pop %v2664
    %v2666 = vmul.f32 %v2494, 1.442695
    %v2667 = vpow.pop %v2666
    %v2668 = vmul.f32 %v2495, 1.442695
    %v2669 = vpow.pop %v2668
    %v2670 = vmul.f32 %v2496, 1.442695
    %v2671 = vpow.pop %v2670
    %v2672 = vmul.f32 %v2497, 1.442695
    %v2673 = vpow.pop %v2672
    %v2674 = vmul.f32 %v2498, 1.442695
    %v2675 = vpow.pop %v2674
    %v2676 = vmul.f32 %v2499, 1.442695
    %v2677 = vpow.pop %v2676
    %v2678 = vmul.f32 %v2500, 1.442695
    %v2679 = vpow.pop %v2678
    %v2680 = vmul.f32 %v2501, 1.442695
    %v2681 = vpow.pop %v2680
    %v2682 = vmul.f32 %v2502, 1.442695
    %v2683 = vpow.pop %v2682
    %v2684 = vmul.f32 %v2503, 1.442695
    %v2685 = vpow.pop %v2684
    %v2686 = vmul.f32 %v2504, 1.442695
    %v2687 = vpow.pop %v2686
    %v2688 = vmul.f32 %v2505, 1.442695
    %v2689 = vpow.pop %v2688
    %v2690 = vmul.f32 %v2506, 1.442695
    %v2691 = vpow.pop %v2690
    %v2692 = vmul.f32 %v2507, 1.442695
    %v2693 = vpow.pop %v2692
    %v2694 = vmul.f32 %v2508, 1.442695
    %v2695 = vpow.pop %v2694
    %v2696 = vmul.f32 %v2509, 1.442695
    %v2697 = vpow.pop %v2696
    %v2698 = vmul.f32 %v2510, 1.442695
    %v2699 = vpow.pop %v2698
    %v2700 = vmul.f32 %v2511, 1.442695
    %v2701 = vpow.pop %v2700
    %v2702 = vmul.f32 %v2512, 1.442695
    %v2703 = vpow.pop %v2702
    %v2704 = vmul.f32 %v2513, 1.442695
    %v2705 = vpow.pop %v2704
    %v2706 = vmul.f32 %v2514, 1.442695
    %v2707 = vpow.pop %v2706
    %v2708 = vmul.f32 %v2515, 1.442695
    %v2709 = vpow.pop %v2708
    %v2710 = vmul.f32 %v2516, 1.442695
    %v2711 = vpow.pop %v2710
    %v2712 = vmul.f32 %v2517, 1.442695
    %v2713 = vpow.pop %v2712
    %v2714 = vmul.f32 %v2518, 1.442695
    %v2715 = vpow.pop %v2714
    %v2716 = vmul.f32 %v2519, 1.442695
    %v2717 = vpow.pop %v2716
    %v2718 = vmul.f32 %v2520, 1.442695
    %v2719 = vpow.pop %v2718
    %v2720 = vmul.f32 %v2521, 1.442695
    %v2721 = vpow.pop %v2720
    %v2722 = vmul.f32 %v2522, 1.442695
    %v2723 = vpow.pop %v2722
    %v2724 = vmul.f32 %v2523, 1.442695
    %v2725 = vpow.pop %v2724
    %v2726 = vmul.f32 %v2524, 1.442695
    %v2727 = vpow.pop %v2726
    %v2728 = vmul.f32 %v2525, 1.442695
    %v2729 = vpow.pop %v2728
    %v2730 = vmul.f32 %v2526, 1.442695
    %v2731 = vpow.pop %v2730
    %v2732 = vmul.f32 %v2527, 1.442695
    %v2733 = vpow.pop %v2732
    %v2734 = vmul.f32 %v2528, 1.442695
    %v2735 = vpow.pop %v2734
    %v2736 = vmul.f32 %v2529, 1.442695
    %v2737 = vpow.pop %v2736
    %v2738 = vmul.f32 %v2530, 1.442695
    %v2739 = vpow.pop %v2738
    %v2740 = vmul.f32 %v2531, 1.442695
    %v2741 = vpow.pop %v2740
    %v2742 = vmul.f32 %v2532, 1.442695
    %v2743 = vpow.pop %v2742
    %v2744 = vmul.f32 %v2533, 1.442695
    %v2745 = vpow.pop %v2744
    %v2746 = vmul.f32 %v2534, 1.442695
    %v2747 = vpow.pop %v2746
    %v2748 = vmul.f32 %v2535, 1.442695
    %v2749 = vpow.pop %v2748
    %v2750 = vmul.f32 %v2536, 1.442695
    %v2751 = vpow.pop %v2750
    %v2752 = vmul.f32 %v2537, 1.442695
    %v2753 = vpow.pop %v2752
    %v2754 = vmul.f32 %v2538, 1.442695
    %v2755 = vpow.pop %v2754
    %v2756 = vmul.f32 %v2539, 1.442695
    %v2757 = vpow.pop %v2756
    %v2758 = vmul.f32 %v2540, 1.442695
    %v2759 = vpow.pop %v2758
    %v2760 = vmul.f32 %v2541, 1.442695
    %v2761 = vpow.pop %v2760
    %v2762 = vmul.f32 %v2542, 1.442695
    %v2763 = vpow.pop %v2762
    %v2764 = vmul.f32 %v2543, 1.442695
    %v2765 = vpow.pop %v2764
    %v2766 = vmul.f32 %v2544, 1.442695
    %v2767 = vpow.pop %v2766
    %v2768 = vmul.f32 %v2545, 1.442695
    %v2769 = vpow.pop %v2768
    %v2770 = vmul.f32 %v2546, 1.442695
    %v2771 = vpow.pop %v2770
    %v2772 = vmul.f32 %v2547, 1.442695
    %v2773 = vpow.pop %v2772
    %v2774 = vmul.f32 %v2548, 1.442695
    %v2775 = vpow.pop %v2774
    %v2776 = vmul.f32 %v2549, 1.442695
    %v2777 = vpow.pop %v2776
    %v2778 = vmul.f32 %v2550, 1.442695
    %v2779 = vpow.pop %v2778
    %v2780 = vmul.f32 %v2551, 1.442695
    %v2781 = vpow.pop %v2780
    %v2782 = vmul.f32 %v2552, 1.442695
    %v2783 = vpow.pop %v2782
    %v2784 = vmul.f32 %v2553, 1.442695
    %v2785 = vpow.pop %v2784
    %v2786 = vmul.f32 %v2554, 1.442695
    %v2787 = vpow.pop %v2786
    %v2788 = vmul.f32 %v2555, 1.442695
    %v2789 = vpow.pop %v2788
    %v2790 = vmul.f32 %v2556, 1.442695
    %v2791 = vpow.pop %v2790
    %v2792 = vmul.f32 %v2557, 1.442695
    %v2793 = vpow.pop %v2792
    %v2794 = vmul.f32 %v2558, 1.442695
    %v2795 = vpow.pop %v2794
    %v2796 = vmul.f32 %v2559, 1.442695
    %v2797 = vpow.pop %v2796
    %v2798 = vmul.f32 %v2560, 1.442695
    %v2799 = vpow.pop %v2798
    %v2800 = vmul.f32 %v2561, 1.442695
    %v2801 = vpow.pop %v2800
    %v2802 = vmul.f32 %v2562, 1.442695
    %v2803 = vpow.pop %v2802
    %v2804 = vmul.f32 %v2563, 1.442695
    %v2805 = vpow.pop %v2804
    %v2806 = vmul.f32 %v2564, 1.442695
    %v2807 = vpow.pop %v2806
    %v2808 = vmul.f32 %v2565, 1.442695
    %v2809 = vpow.pop %v2808
    %v2810 = vmul.f32 %v2566, 1.442695
    %v2811 = vpow.pop %v2810
    %v2812 = vmul.f32 %v2567, 1.442695
    %v2813 = vpow.pop %v2812
    %v2814 = vmul.f32 %v2568, 1.442695
    %v2815 = vpow.pop %v2814
    %v2816 = vmul.f32 %v2569, 1.442695
    %v2817 = vpow.pop %v2816
    %v2818 = vmul.f32 %v2570, 1.442695
    %v2819 = vpow.pop %v2818
    %v2820 = vmul.f32 %v2571, 1.442695
    %v2821 = vpow.pop %v2820
    %v2822 = vmul.f32 %v2572, 1.442695
    %v2823 = vpow.pop %v2822
    %v2824 = vmul.f32 %v2573, 1.442695
    %v2825 = vpow.pop %v2824
    %v2826 = vmul.f32 %v2574, 1.442695
    %v2827 = vpow.pop %v2826
    %v2828 = vmul.f32 %v2575, 1.442695
    %v2829 = vpow.pop %v2828
    %v2830 = vmul.f32 %v2576, 1.442695
    %v2831 = vpow.pop %v2830
    %v2832 = vmul.f32 %v2577, 1.442695
    %v2833 = vpow.pop %v2832
    %v2834 = vsel %vm617, %v2579, 0.0
    %2835 = vadd.xlane.f32.xlu0 %v2834
    %v2836 = vpop.xlane.xlu0 %2835
    %v2837 = vsel %vm617, %v2581, 0.0
    %2838 = vadd.xlane.f32.xlu0 %v2837
    %v2839 = vpop.xlane.xlu0 %2838
    %v2840 = vsel %vm617, %v2583, 0.0
    %2841 = vadd.xlane.f32.xlu0 %v2840
    %v2842 = vpop.xlane.xlu0 %2841
    %v2843 = vsel %vm617, %v2585, 0.0
    %2844 = vadd.xlane.f32.xlu0 %v2843
    %v2845 = vpop.xlane.xlu0 %2844
    %v2846 = vsel %vm617, %v2587, 0.0
    %2847 = vadd.xlane.f32.xlu0 %v2846
    %v2848 = vpop.xlane.xlu0 %2847
    %v2849 = vsel %vm617, %v2589, 0.0
    %2850 = vadd.xlane.f32.xlu0 %v2849
    %v2851 = vpop.xlane.xlu0 %2850
    %v2852 = vsel %vm617, %v2591, 0.0
    %2853 = vadd.xlane.f32.xlu0 %v2852
    %v2854 = vpop.xlane.xlu0 %2853
    %v2855 = vsel %vm617, %v2593, 0.0
    %2856 = vadd.xlane.f32.xlu0 %v2855
    %v2857 = vpop.xlane.xlu0 %2856
    %v2858 = vsel %vm617, %v2595, 0.0
    %2859 = vadd.xlane.f32.xlu0 %v2858
    %v2860 = vpop.xlane.xlu0 %2859
    %v2861 = vsel %vm617, %v2597, 0.0
    %2862 = vadd.xlane.f32.xlu0 %v2861
    %v2863 = vpop.xlane.xlu0 %2862
    %v2864 = vsel %vm617, %v2599, 0.0
    %2865 = vadd.xlane.f32.xlu0 %v2864
    %v2866 = vpop.xlane.xlu0 %2865
    %v2867 = vsel %vm617, %v2601, 0.0
    %2868 = vadd.xlane.f32.xlu0 %v2867
    %v2869 = vpop.xlane.xlu0 %2868
    %v2870 = vsel %vm617, %v2603, 0.0
    %2871 = vadd.xlane.f32.xlu0 %v2870
    %v2872 = vpop.xlane.xlu0 %2871
    %v2873 = vsel %vm617, %v2605, 0.0
    %2874 = vadd.xlane.f32.xlu0 %v2873
    %v2875 = vpop.xlane.xlu0 %2874
    %v2876 = vsel %vm617, %v2607, 0.0
    %2877 = vadd.xlane.f32.xlu0 %v2876
    %v2878 = vpop.xlane.xlu0 %2877
    %v2879 = vsel %vm617, %v2609, 0.0
    %2880 = vadd.xlane.f32.xlu0 %v2879
    %v2881 = vpop.xlane.xlu0 %2880
    %v2882 = vsel %vm617, %v2611, 0.0
    %2883 = vadd.xlane.f32.xlu0 %v2882
    %v2884 = vpop.xlane.xlu0 %2883
    %v2885 = vsel %vm617, %v2613, 0.0
    %2886 = vadd.xlane.f32.xlu0 %v2885
    %v2887 = vpop.xlane.xlu0 %2886
    %v2888 = vsel %vm617, %v2615, 0.0
    %2889 = vadd.xlane.f32.xlu0 %v2888
    %v2890 = vpop.xlane.xlu0 %2889
    %v2891 = vsel %vm617, %v2617, 0.0
    %2892 = vadd.xlane.f32.xlu0 %v2891
    %v2893 = vpop.xlane.xlu0 %2892
    %v2894 = vsel %vm617, %v2619, 0.0
    %2895 = vadd.xlane.f32.xlu0 %v2894
    %v2896 = vpop.xlane.xlu0 %2895
    %v2897 = vsel %vm617, %v2621, 0.0
    %2898 = vadd.xlane.f32.xlu0 %v2897
    %v2899 = vpop.xlane.xlu0 %2898
    %v2900 = vsel %vm617, %v2623, 0.0
    %2901 = vadd.xlane.f32.xlu0 %v2900
    %v2902 = vpop.xlane.xlu0 %2901
    %v2903 = vsel %vm617, %v2625, 0.0
    %2904 = vadd.xlane.f32.xlu0 %v2903
    %v2905 = vpop.xlane.xlu0 %2904
    %v2906 = vsel %vm617, %v2627, 0.0
    %2907 = vadd.xlane.f32.xlu0 %v2906
    %v2908 = vpop.xlane.xlu0 %2907
    %v2909 = vsel %vm617, %v2629, 0.0
    %2910 = vadd.xlane.f32.xlu0 %v2909
    %v2911 = vpop.xlane.xlu0 %2910
    %v2912 = vsel %vm617, %v2631, 0.0
    %2913 = vadd.xlane.f32.xlu0 %v2912
    %v2914 = vpop.xlane.xlu0 %2913
    %v2915 = vsel %vm617, %v2633, 0.0
    %2916 = vadd.xlane.f32.xlu0 %v2915
    %v2917 = vpop.xlane.xlu0 %2916
    %v2918 = vsel %vm617, %v2635, 0.0
    %2919 = vadd.xlane.f32.xlu0 %v2918
    %v2920 = vpop.xlane.xlu0 %2919
    %v2921 = vsel %vm617, %v2637, 0.0
    %2922 = vadd.xlane.f32.xlu0 %v2921
    %v2923 = vpop.xlane.xlu0 %2922
    %v2924 = vsel %vm617, %v2639, 0.0
    %2925 = vadd.xlane.f32.xlu0 %v2924
    %v2926 = vpop.xlane.xlu0 %2925
    %v2927 = vsel %vm617, %v2641, 0.0
    %2928 = vadd.xlane.f32.xlu0 %v2927
    %v2929 = vpop.xlane.xlu0 %2928
    %v2930 = vsel %vm617, %v2643, 0.0
    %2931 = vadd.xlane.f32.xlu0 %v2930
    %v2932 = vpop.xlane.xlu0 %2931
    %v2933 = vsel %vm617, %v2645, 0.0
    %2934 = vadd.xlane.f32.xlu0 %v2933
    %v2935 = vpop.xlane.xlu0 %2934
    %v2936 = vsel %vm617, %v2647, 0.0
    %2937 = vadd.xlane.f32.xlu0 %v2936
    %v2938 = vpop.xlane.xlu0 %2937
    %v2939 = vsel %vm617, %v2649, 0.0
    %2940 = vadd.xlane.f32.xlu0 %v2939
    %v2941 = vpop.xlane.xlu0 %2940
    %v2942 = vsel %vm617, %v2651, 0.0
    %2943 = vadd.xlane.f32.xlu0 %v2942
    %v2944 = vpop.xlane.xlu0 %2943
    %v2945 = vsel %vm617, %v2653, 0.0
    %2946 = vadd.xlane.f32.xlu0 %v2945
    %v2947 = vpop.xlane.xlu0 %2946
    %v2948 = vsel %vm617, %v2655, 0.0
    %2949 = vadd.xlane.f32.xlu0 %v2948
    %v2950 = vpop.xlane.xlu0 %2949
    %v2951 = vsel %vm617, %v2657, 0.0
    %2952 = vadd.xlane.f32.xlu0 %v2951
    %v2953 = vpop.xlane.xlu0 %2952
    %v2954 = vsel %vm617, %v2659, 0.0
    %2955 = vadd.xlane.f32.xlu0 %v2954
    %v2956 = vpop.xlane.xlu0 %2955
    %v2957 = vsel %vm617, %v2661, 0.0
    %2958 = vadd.xlane.f32.xlu0 %v2957
    %v2959 = vpop.xlane.xlu0 %2958
    %v2960 = vsel %vm617, %v2663, 0.0
    %2961 = vadd.xlane.f32.xlu0 %v2960
    %v2962 = vpop.xlane.xlu0 %2961
    %v2963 = vsel %vm617, %v2665, 0.0
    %2964 = vadd.xlane.f32.xlu0 %v2963
    %v2965 = vpop.xlane.xlu0 %2964
    %v2966 = vsel %vm617, %v2667, 0.0
    %2967 = vadd.xlane.f32.xlu0 %v2966
    %v2968 = vpop.xlane.xlu0 %2967
    %v2969 = vsel %vm617, %v2669, 0.0
    %2970 = vadd.xlane.f32.xlu0 %v2969
    %v2971 = vpop.xlane.xlu0 %2970
    %v2972 = vsel %vm617, %v2671, 0.0
    %2973 = vadd.xlane.f32.xlu0 %v2972
    %v2974 = vpop.xlane.xlu0 %2973
    %v2975 = vsel %vm617, %v2673, 0.0
    %2976 = vadd.xlane.f32.xlu0 %v2975
    %v2977 = vpop.xlane.xlu0 %2976
    %v2978 = vsel %vm617, %v2675, 0.0
    %2979 = vadd.xlane.f32.xlu0 %v2978
    %v2980 = vpop.xlane.xlu0 %2979
    %v2981 = vsel %vm617, %v2677, 0.0
    %2982 = vadd.xlane.f32.xlu0 %v2981
    %v2983 = vpop.xlane.xlu0 %2982
    %v2984 = vsel %vm617, %v2679, 0.0
    %2985 = vadd.xlane.f32.xlu0 %v2984
    %v2986 = vpop.xlane.xlu0 %2985
    %v2987 = vsel %vm617, %v2681, 0.0
    %2988 = vadd.xlane.f32.xlu0 %v2987
    %v2989 = vpop.xlane.xlu0 %2988
    %v2990 = vsel %vm617, %v2683, 0.0
    %2991 = vadd.xlane.f32.xlu0 %v2990
    %v2992 = vpop.xlane.xlu0 %2991
    %v2993 = vsel %vm617, %v2685, 0.0
    %2994 = vadd.xlane.f32.xlu0 %v2993
    %v2995 = vpop.xlane.xlu0 %2994
    %v2996 = vsel %vm617, %v2687, 0.0
    %2997 = vadd.xlane.f32.xlu0 %v2996
    %v2998 = vpop.xlane.xlu0 %2997
    %v2999 = vsel %vm617, %v2689, 0.0
    %3000 = vadd.xlane.f32.xlu0 %v2999
    %v3001 = vpop.xlane.xlu0 %3000
    %v3002 = vsel %vm617, %v2691, 0.0
    %3003 = vadd.xlane.f32.xlu0 %v3002
    %v3004 = vpop.xlane.xlu0 %3003
    %v3005 = vsel %vm617, %v2693, 0.0
    %3006 = vadd.xlane.f32.xlu0 %v3005
    %v3007 = vpop.xlane.xlu0 %3006
    %v3008 = vsel %vm617, %v2695, 0.0
    %3009 = vadd.xlane.f32.xlu0 %v3008
    %v3010 = vpop.xlane.xlu0 %3009
    %v3011 = vsel %vm617, %v2697, 0.0
    %3012 = vadd.xlane.f32.xlu0 %v3011
    %v3013 = vpop.xlane.xlu0 %3012
    %v3014 = vsel %vm617, %v2699, 0.0
    %3015 = vadd.xlane.f32.xlu0 %v3014
    %v3016 = vpop.xlane.xlu0 %3015
    %v3017 = vsel %vm617, %v2701, 0.0
    %3018 = vadd.xlane.f32.xlu0 %v3017
    %v3019 = vpop.xlane.xlu0 %3018
    %v3020 = vsel %vm617, %v2703, 0.0
    %3021 = vadd.xlane.f32.xlu0 %v3020
    %v3022 = vpop.xlane.xlu0 %3021
    %v3023 = vsel %vm617, %v2705, 0.0
    %3024 = vadd.xlane.f32.xlu0 %v3023
    %v3025 = vpop.xlane.xlu0 %3024
    %v3026 = vsel %vm617, %v2707, 0.0
    %3027 = vadd.xlane.f32.xlu0 %v3026
    %v3028 = vpop.xlane.xlu0 %3027
    %v3029 = vsel %vm617, %v2709, 0.0
    %3030 = vadd.xlane.f32.xlu0 %v3029
    %v3031 = vpop.xlane.xlu0 %3030
    %v3032 = vsel %vm617, %v2711, 0.0
    %3033 = vadd.xlane.f32.xlu0 %v3032
    %v3034 = vpop.xlane.xlu0 %3033
    %v3035 = vsel %vm617, %v2713, 0.0
    %3036 = vadd.xlane.f32.xlu0 %v3035
    %v3037 = vpop.xlane.xlu0 %3036
    %v3038 = vsel %vm617, %v2715, 0.0
    %3039 = vadd.xlane.f32.xlu0 %v3038
    %v3040 = vpop.xlane.xlu0 %3039
    %v3041 = vsel %vm617, %v2717, 0.0
    %3042 = vadd.xlane.f32.xlu0 %v3041
    %v3043 = vpop.xlane.xlu0 %3042
    %v3044 = vsel %vm617, %v2719, 0.0
    %3045 = vadd.xlane.f32.xlu0 %v3044
    %v3046 = vpop.xlane.xlu0 %3045
    %v3047 = vsel %vm617, %v2721, 0.0
    %3048 = vadd.xlane.f32.xlu0 %v3047
    %v3049 = vpop.xlane.xlu0 %3048
    %v3050 = vsel %vm617, %v2723, 0.0
    %3051 = vadd.xlane.f32.xlu0 %v3050
    %v3052 = vpop.xlane.xlu0 %3051
    %v3053 = vsel %vm617, %v2725, 0.0
    %3054 = vadd.xlane.f32.xlu0 %v3053
    %v3055 = vpop.xlane.xlu0 %3054
    %v3056 = vsel %vm617, %v2727, 0.0
    %3057 = vadd.xlane.f32.xlu0 %v3056
    %v3058 = vpop.xlane.xlu0 %3057
    %v3059 = vsel %vm617, %v2729, 0.0
    %3060 = vadd.xlane.f32.xlu0 %v3059
    %v3061 = vpop.xlane.xlu0 %3060
    %v3062 = vsel %vm617, %v2731, 0.0
    %3063 = vadd.xlane.f32.xlu0 %v3062
    %v3064 = vpop.xlane.xlu0 %3063
    %v3065 = vsel %vm617, %v2733, 0.0
    %3066 = vadd.xlane.f32.xlu0 %v3065
    %v3067 = vpop.xlane.xlu0 %3066
    %v3068 = vsel %vm617, %v2735, 0.0
    %3069 = vadd.xlane.f32.xlu0 %v3068
    %v3070 = vpop.xlane.xlu0 %3069
    %v3071 = vsel %vm617, %v2737, 0.0
    %3072 = vadd.xlane.f32.xlu0 %v3071
    %v3073 = vpop.xlane.xlu0 %3072
    %v3074 = vsel %vm617, %v2739, 0.0
    %3075 = vadd.xlane.f32.xlu0 %v3074
    %v3076 = vpop.xlane.xlu0 %3075
    %v3077 = vsel %vm617, %v2741, 0.0
    %3078 = vadd.xlane.f32.xlu0 %v3077
    %v3079 = vpop.xlane.xlu0 %3078
    %v3080 = vsel %vm617, %v2743, 0.0
    %3081 = vadd.xlane.f32.xlu0 %v3080
    %v3082 = vpop.xlane.xlu0 %3081
    %v3083 = vsel %vm617, %v2745, 0.0
    %3084 = vadd.xlane.f32.xlu0 %v3083
    %v3085 = vpop.xlane.xlu0 %3084
    %v3086 = vsel %vm617, %v2747, 0.0
    %3087 = vadd.xlane.f32.xlu0 %v3086
    %v3088 = vpop.xlane.xlu0 %3087
    %v3089 = vsel %vm617, %v2749, 0.0
    %3090 = vadd.xlane.f32.xlu0 %v3089
    %v3091 = vpop.xlane.xlu0 %3090
    %v3092 = vsel %vm617, %v2751, 0.0
    %3093 = vadd.xlane.f32.xlu0 %v3092
    %v3094 = vpop.xlane.xlu0 %3093
    %v3095 = vsel %vm617, %v2753, 0.0
    %3096 = vadd.xlane.f32.xlu0 %v3095
    %v3097 = vpop.xlane.xlu0 %3096
    %v3098 = vsel %vm617, %v2755, 0.0
    %3099 = vadd.xlane.f32.xlu0 %v3098
    %v3100 = vpop.xlane.xlu0 %3099
    %v3101 = vsel %vm617, %v2757, 0.0
    %3102 = vadd.xlane.f32.xlu0 %v3101
    %v3103 = vpop.xlane.xlu0 %3102
    %v3104 = vsel %vm617, %v2759, 0.0
    %3105 = vadd.xlane.f32.xlu0 %v3104
    %v3106 = vpop.xlane.xlu0 %3105
    %v3107 = vsel %vm617, %v2761, 0.0
    %3108 = vadd.xlane.f32.xlu0 %v3107
    %v3109 = vpop.xlane.xlu0 %3108
    %v3110 = vsel %vm617, %v2763, 0.0
    %3111 = vadd.xlane.f32.xlu0 %v3110
    %v3112 = vpop.xlane.xlu0 %3111
    %v3113 = vsel %vm617, %v2765, 0.0
    %3114 = vadd.xlane.f32.xlu0 %v3113
    %v3115 = vpop.xlane.xlu0 %3114
    %v3116 = vsel %vm617, %v2767, 0.0
    %3117 = vadd.xlane.f32.xlu0 %v3116
    %v3118 = vpop.xlane.xlu0 %3117
    %v3119 = vsel %vm617, %v2769, 0.0
    %3120 = vadd.xlane.f32.xlu0 %v3119
    %v3121 = vpop.xlane.xlu0 %3120
    %v3122 = vsel %vm617, %v2771, 0.0
    %3123 = vadd.xlane.f32.xlu0 %v3122
    %v3124 = vpop.xlane.xlu0 %3123
    %v3125 = vsel %vm617, %v2773, 0.0
    %3126 = vadd.xlane.f32.xlu0 %v3125
    %v3127 = vpop.xlane.xlu0 %3126
    %v3128 = vsel %vm617, %v2775, 0.0
    %3129 = vadd.xlane.f32.xlu0 %v3128
    %v3130 = vpop.xlane.xlu0 %3129
    %v3131 = vsel %vm617, %v2777, 0.0
    %3132 = vadd.xlane.f32.xlu0 %v3131
    %v3133 = vpop.xlane.xlu0 %3132
    %v3134 = vsel %vm617, %v2779, 0.0
    %3135 = vadd.xlane.f32.xlu0 %v3134
    %v3136 = vpop.xlane.xlu0 %3135
    %v3137 = vsel %vm617, %v2781, 0.0
    %3138 = vadd.xlane.f32.xlu0 %v3137
    %v3139 = vpop.xlane.xlu0 %3138
    %v3140 = vsel %vm617, %v2783, 0.0
    %3141 = vadd.xlane.f32.xlu0 %v3140
    %v3142 = vpop.xlane.xlu0 %3141
    %v3143 = vsel %vm617, %v2785, 0.0
    %3144 = vadd.xlane.f32.xlu0 %v3143
    %v3145 = vpop.xlane.xlu0 %3144
    %v3146 = vsel %vm617, %v2787, 0.0
    %3147 = vadd.xlane.f32.xlu0 %v3146
    %v3148 = vpop.xlane.xlu0 %3147
    %v3149 = vsel %vm617, %v2789, 0.0
    %3150 = vadd.xlane.f32.xlu0 %v3149
    %v3151 = vpop.xlane.xlu0 %3150
    %v3152 = vsel %vm617, %v2791, 0.0
    %3153 = vadd.xlane.f32.xlu0 %v3152
    %v3154 = vpop.xlane.xlu0 %3153
    %v3155 = vsel %vm617, %v2793, 0.0
    %3156 = vadd.xlane.f32.xlu0 %v3155
    %v3157 = vpop.xlane.xlu0 %3156
    %v3158 = vsel %vm617, %v2795, 0.0
    %3159 = vadd.xlane.f32.xlu0 %v3158
    %v3160 = vpop.xlane.xlu0 %3159
    %v3161 = vsel %vm617, %v2797, 0.0
    %3162 = vadd.xlane.f32.xlu0 %v3161
    %v3163 = vpop.xlane.xlu0 %3162
    %v3164 = vsel %vm617, %v2799, 0.0
    %3165 = vadd.xlane.f32.xlu0 %v3164
    %v3166 = vpop.xlane.xlu0 %3165
    %v3167 = vsel %vm617, %v2801, 0.0
    %3168 = vadd.xlane.f32.xlu0 %v3167
    %v3169 = vpop.xlane.xlu0 %3168
    %v3170 = vsel %vm617, %v2803, 0.0
    %3171 = vadd.xlane.f32.xlu0 %v3170
    %v3172 = vpop.xlane.xlu0 %3171
    %v3173 = vsel %vm617, %v2805, 0.0
    %3174 = vadd.xlane.f32.xlu0 %v3173
    %v3175 = vpop.xlane.xlu0 %3174
    %v3176 = vsel %vm617, %v2807, 0.0
    %3177 = vadd.xlane.f32.xlu0 %v3176
    %v3178 = vpop.xlane.xlu0 %3177
    %v3179 = vsel %vm617, %v2809, 0.0
    %3180 = vadd.xlane.f32.xlu0 %v3179
    %v3181 = vpop.xlane.xlu0 %3180
    %v3182 = vsel %vm617, %v2811, 0.0
    %3183 = vadd.xlane.f32.xlu0 %v3182
    %v3184 = vpop.xlane.xlu0 %3183
    %v3185 = vsel %vm617, %v2813, 0.0
    %3186 = vadd.xlane.f32.xlu0 %v3185
    %v3187 = vpop.xlane.xlu0 %3186
    %v3188 = vsel %vm617, %v2815, 0.0
    %3189 = vadd.xlane.f32.xlu0 %v3188
    %v3190 = vpop.xlane.xlu0 %3189
    %v3191 = vsel %vm617, %v2817, 0.0
    %3192 = vadd.xlane.f32.xlu0 %v3191
    %v3193 = vpop.xlane.xlu0 %3192
    %v3194 = vsel %vm617, %v2819, 0.0
    %3195 = vadd.xlane.f32.xlu0 %v3194
    %v3196 = vpop.xlane.xlu0 %3195
    %v3197 = vsel %vm617, %v2821, 0.0
    %3198 = vadd.xlane.f32.xlu0 %v3197
    %v3199 = vpop.xlane.xlu0 %3198
    %v3200 = vsel %vm617, %v2823, 0.0
    %3201 = vadd.xlane.f32.xlu0 %v3200
    %v3202 = vpop.xlane.xlu0 %3201
    %v3203 = vsel %vm617, %v2825, 0.0
    %3204 = vadd.xlane.f32.xlu0 %v3203
    %v3205 = vpop.xlane.xlu0 %3204
    %v3206 = vsel %vm617, %v2827, 0.0
    %3207 = vadd.xlane.f32.xlu0 %v3206
    %v3208 = vpop.xlane.xlu0 %3207
    %v3209 = vsel %vm617, %v2829, 0.0
    %3210 = vadd.xlane.f32.xlu0 %v3209
    %v3211 = vpop.xlane.xlu0 %3210
    %v3212 = vsel %vm617, %v2831, 0.0
    %3213 = vadd.xlane.f32.xlu0 %v3212
    %v3214 = vpop.xlane.xlu0 %3213
    %v3215 = vsel %vm617, %v2833, 0.0
    %3216 = vadd.xlane.f32.xlu0 %v3215
    %v3217 = vpop.xlane.xlu0 %3216
    %v3218 = vpack.c.bf16 %v2579, %v2579
    %v3219 = vpack.c.bf16 %v2581, %v2581
    %v3220 = vpack.c.bf16 %v2583, %v2583
    %v3221 = vpack.c.bf16 %v2585, %v2585
    %v3222 = vpack.c.bf16 %v2587, %v2587
    %v3223 = vpack.c.bf16 %v2589, %v2589
    %v3224 = vpack.c.bf16 %v2591, %v2591
    %v3225 = vpack.c.bf16 %v2593, %v2593
    %v3226 = vpack.c.bf16 %v2595, %v2595
    %v3227 = vpack.c.bf16 %v2597, %v2597
    %v3228 = vpack.c.bf16 %v2599, %v2599
    %v3229 = vpack.c.bf16 %v2601, %v2601
    %v3230 = vpack.c.bf16 %v2603, %v2603
    %v3231 = vpack.c.bf16 %v2605, %v2605
    %v3232 = vpack.c.bf16 %v2607, %v2607
    %v3233 = vpack.c.bf16 %v2609, %v2609
    %v3234 = vpack.c.bf16 %v2611, %v2611
    %v3235 = vpack.c.bf16 %v2613, %v2613
    %v3236 = vpack.c.bf16 %v2615, %v2615
    %v3237 = vpack.c.bf16 %v2617, %v2617
    %v3238 = vpack.c.bf16 %v2619, %v2619
    %v3239 = vpack.c.bf16 %v2621, %v2621
    %v3240 = vpack.c.bf16 %v2623, %v2623
    %v3241 = vpack.c.bf16 %v2625, %v2625
    %v3242 = vpack.c.bf16 %v2627, %v2627
    %v3243 = vpack.c.bf16 %v2629, %v2629
    %v3244 = vpack.c.bf16 %v2631, %v2631
    %v3245 = vpack.c.bf16 %v2633, %v2633
    %v3246 = vpack.c.bf16 %v2635, %v2635
    %v3247 = vpack.c.bf16 %v2637, %v2637
    %v3248 = vpack.c.bf16 %v2639, %v2639
    %v3249 = vpack.c.bf16 %v2641, %v2641
    %v3250 = vpack.c.bf16 %v2643, %v2643
    %v3251 = vpack.c.bf16 %v2645, %v2645
    %v3252 = vpack.c.bf16 %v2647, %v2647
    %v3253 = vpack.c.bf16 %v2649, %v2649
    %v3254 = vpack.c.bf16 %v2651, %v2651
    %v3255 = vpack.c.bf16 %v2653, %v2653
    %v3256 = vpack.c.bf16 %v2655, %v2655
    %v3257 = vpack.c.bf16 %v2657, %v2657
    %v3258 = vpack.c.bf16 %v2659, %v2659
    %v3259 = vpack.c.bf16 %v2661, %v2661
    %v3260 = vpack.c.bf16 %v2663, %v2663
    %v3261 = vpack.c.bf16 %v2665, %v2665
    %v3262 = vpack.c.bf16 %v2667, %v2667
    %v3263 = vpack.c.bf16 %v2669, %v2669
    %v3264 = vpack.c.bf16 %v2671, %v2671
    %v3265 = vpack.c.bf16 %v2673, %v2673
    %v3266 = vpack.c.bf16 %v2675, %v2675
    %v3267 = vpack.c.bf16 %v2677, %v2677
    %v3268 = vpack.c.bf16 %v2679, %v2679
    %v3269 = vpack.c.bf16 %v2681, %v2681
    %v3270 = vpack.c.bf16 %v2683, %v2683
    %v3271 = vpack.c.bf16 %v2685, %v2685
    %v3272 = vpack.c.bf16 %v2687, %v2687
    %v3273 = vpack.c.bf16 %v2689, %v2689
    %v3274 = vpack.c.bf16 %v2691, %v2691
    %v3275 = vpack.c.bf16 %v2693, %v2693
    %v3276 = vpack.c.bf16 %v2695, %v2695
    %v3277 = vpack.c.bf16 %v2697, %v2697
    %v3278 = vpack.c.bf16 %v2699, %v2699
    %v3279 = vpack.c.bf16 %v2701, %v2701
    %v3280 = vpack.c.bf16 %v2703, %v2703
    %v3281 = vpack.c.bf16 %v2705, %v2705
    %v3282 = vpack.c.bf16 %v2707, %v2707
    %v3283 = vpack.c.bf16 %v2709, %v2709
    %v3284 = vpack.c.bf16 %v2711, %v2711
    %v3285 = vpack.c.bf16 %v2713, %v2713
    %v3286 = vpack.c.bf16 %v2715, %v2715
    %v3287 = vpack.c.bf16 %v2717, %v2717
    %v3288 = vpack.c.bf16 %v2719, %v2719
    %v3289 = vpack.c.bf16 %v2721, %v2721
    %v3290 = vpack.c.bf16 %v2723, %v2723
    %v3291 = vpack.c.bf16 %v2725, %v2725
    %v3292 = vpack.c.bf16 %v2727, %v2727
    %v3293 = vpack.c.bf16 %v2729, %v2729
    %v3294 = vpack.c.bf16 %v2731, %v2731
    %v3295 = vpack.c.bf16 %v2733, %v2733
    %v3296 = vpack.c.bf16 %v2735, %v2735
    %v3297 = vpack.c.bf16 %v2737, %v2737
    %v3298 = vpack.c.bf16 %v2739, %v2739
    %v3299 = vpack.c.bf16 %v2741, %v2741
    %v3300 = vpack.c.bf16 %v2743, %v2743
    %v3301 = vpack.c.bf16 %v2745, %v2745
    %v3302 = vpack.c.bf16 %v2747, %v2747
    %v3303 = vpack.c.bf16 %v2749, %v2749
    %v3304 = vpack.c.bf16 %v2751, %v2751
    %v3305 = vpack.c.bf16 %v2753, %v2753
    %v3306 = vpack.c.bf16 %v2755, %v2755
    %v3307 = vpack.c.bf16 %v2757, %v2757
    %v3308 = vpack.c.bf16 %v2759, %v2759
    %v3309 = vpack.c.bf16 %v2761, %v2761
    %v3310 = vpack.c.bf16 %v2763, %v2763
    %v3311 = vpack.c.bf16 %v2765, %v2765
    %v3312 = vpack.c.bf16 %v2767, %v2767
    %v3313 = vpack.c.bf16 %v2769, %v2769
    %v3314 = vpack.c.bf16 %v2771, %v2771
    %v3315 = vpack.c.bf16 %v2773, %v2773
    %v3316 = vpack.c.bf16 %v2775, %v2775
    %v3317 = vpack.c.bf16 %v2777, %v2777
    %v3318 = vpack.c.bf16 %v2779, %v2779
    %v3319 = vpack.c.bf16 %v2781, %v2781
    %v3320 = vpack.c.bf16 %v2783, %v2783
    %v3321 = vpack.c.bf16 %v2785, %v2785
    %v3322 = vpack.c.bf16 %v2787, %v2787
    %v3323 = vpack.c.bf16 %v2789, %v2789
    %v3324 = vpack.c.bf16 %v2791, %v2791
    %v3325 = vpack.c.bf16 %v2793, %v2793
    %v3326 = vpack.c.bf16 %v2795, %v2795
    %v3327 = vpack.c.bf16 %v2797, %v2797
    %v3328 = vpack.c.bf16 %v2799, %v2799
    %v3329 = vpack.c.bf16 %v2801, %v2801
    %v3330 = vpack.c.bf16 %v2803, %v2803
    %v3331 = vpack.c.bf16 %v2805, %v2805
    %v3332 = vpack.c.bf16 %v2807, %v2807
    %v3333 = vpack.c.bf16 %v2809, %v2809
    %v3334 = vpack.c.bf16 %v2811, %v2811
    %v3335 = vpack.c.bf16 %v2813, %v2813
    %v3336 = vpack.c.bf16 %v2815, %v2815
    %v3337 = vpack.c.bf16 %v2817, %v2817
    %v3338 = vpack.c.bf16 %v2819, %v2819
    %v3339 = vpack.c.bf16 %v2821, %v2821
    %v3340 = vpack.c.bf16 %v2823, %v2823
    %v3341 = vpack.c.bf16 %v2825, %v2825
    %v3342 = vpack.c.bf16 %v2827, %v2827
    %v3343 = vpack.c.bf16 %v2829, %v2829
    %v3344 = vpack.c.bf16 %v2831, %v2831
    %v3345 = vpack.c.bf16 %v2833, %v2833
    %v3346 = vld [vmem:[#allocation9] sm:$0xff]
    %v3347 = vld [vmem:[#allocation9 + $0x8] sm:$0xff]
    %v3348 = vld [vmem:[#allocation9 + $0x10] sm:$0xff]
    %v3349 = vld [vmem:[#allocation9 + $0x18] sm:$0xff]
    %v3350 = vld [vmem:[#allocation9 + $0x20] sm:$0xff]
    %v3351 = vld [vmem:[#allocation9 + $0x28] sm:$0xff]
    %v3352 = vld [vmem:[#allocation9 + $0x30] sm:$0xff]
    %v3353 = vld [vmem:[#allocation9 + $0x38] sm:$0xff]
    %v3354 = vld [vmem:[#allocation9 + $0x40] sm:$0xff]
    %v3355 = vld [vmem:[#allocation9 + $0x48] sm:$0xff]
    %v3356 = vld [vmem:[#allocation9 + $0x50] sm:$0xff]
    %v3357 = vld [vmem:[#allocation9 + $0x58] sm:$0xff]
    %v3358 = vld [vmem:[#allocation9 + $0x60] sm:$0xff]
    %v3359 = vld [vmem:[#allocation9 + $0x68] sm:$0xff]
    %v3360 = vld [vmem:[#allocation9 + $0x70] sm:$0xff]
    %v3361 = vld [vmem:[#allocation9 + $0x78] sm:$0xff]
    %v3362 = vld [vmem:[#allocation9 + $0x80] sm:$0xff]
    %v3363 = vld [vmem:[#allocation9 + $0x88] sm:$0xff]
    %v3364 = vld [vmem:[#allocation9 + $0x90] sm:$0xff]
    %v3365 = vld [vmem:[#allocation9 + $0x98] sm:$0xff]
    %v3366 = vld [vmem:[#allocation9 + $0xa0] sm:$0xff]
    %v3367 = vld [vmem:[#allocation9 + $0xa8] sm:$0xff]
    %v3368 = vld [vmem:[#allocation9 + $0xb0] sm:$0xff]
    %v3369 = vld [vmem:[#allocation9 + $0xb8] sm:$0xff]
    %v3370 = vld [vmem:[#allocation9 + $0xc0] sm:$0xff]
    %v3371 = vld [vmem:[#allocation9 + $0xc8] sm:$0xff]
    %v3372 = vld [vmem:[#allocation9 + $0xd0] sm:$0xff]
    %v3373 = vld [vmem:[#allocation9 + $0xd8] sm:$0xff]
    %v3374 = vld [vmem:[#allocation9 + $0xe0] sm:$0xff]
    %v3375 = vld [vmem:[#allocation9 + $0xe8] sm:$0xff]
    %v3376 = vld [vmem:[#allocation9 + $0xf0] sm:$0xff]
    %v3377 = vld [vmem:[#allocation9 + $0xf8] sm:$0xff]
    %v3378 = vld [vmem:[#allocation9 + $0x100] sm:$0xff]
    %v3379 = vld [vmem:[#allocation9 + $0x108] sm:$0xff]
    %v3380 = vld [vmem:[#allocation9 + $0x110] sm:$0xff]
    %v3381 = vld [vmem:[#allocation9 + $0x118] sm:$0xff]
    %v3382 = vld [vmem:[#allocation9 + $0x120] sm:$0xff]
    %v3383 = vld [vmem:[#allocation9 + $0x128] sm:$0xff]
    %v3384 = vld [vmem:[#allocation9 + $0x130] sm:$0xff]
    %v3385 = vld [vmem:[#allocation9 + $0x138] sm:$0xff]
    %v3386 = vld [vmem:[#allocation9 + $0x140] sm:$0xff]
    %v3387 = vld [vmem:[#allocation9 + $0x148] sm:$0xff]
    %v3388 = vld [vmem:[#allocation9 + $0x150] sm:$0xff]
    %v3389 = vld [vmem:[#allocation9 + $0x158] sm:$0xff]
    %v3390 = vld [vmem:[#allocation9 + $0x160] sm:$0xff]
    %v3391 = vld [vmem:[#allocation9 + $0x168] sm:$0xff]
    %v3392 = vld [vmem:[#allocation9 + $0x170] sm:$0xff]
    %v3393 = vld [vmem:[#allocation9 + $0x178] sm:$0xff]
    %v3394 = vld [vmem:[#allocation9 + $0x180] sm:$0xff]
    %v3395 = vld [vmem:[#allocation9 + $0x188] sm:$0xff]
    %v3396 = vld [vmem:[#allocation9 + $0x190] sm:$0xff]
    %v3397 = vld [vmem:[#allocation9 + $0x198] sm:$0xff]
    %v3398 = vld [vmem:[#allocation9 + $0x1a0] sm:$0xff]
    %v3399 = vld [vmem:[#allocation9 + $0x1a8] sm:$0xff]
    %v3400 = vld [vmem:[#allocation9 + $0x1b0] sm:$0xff]
    %v3401 = vld [vmem:[#allocation9 + $0x1b8] sm:$0xff]
    %v3402 = vld [vmem:[#allocation9 + $0x1c0] sm:$0xff]
    %v3403 = vld [vmem:[#allocation9 + $0x1c8] sm:$0xff]
    %v3404 = vld [vmem:[#allocation9 + $0x1d0] sm:$0xff]
    %v3405 = vld [vmem:[#allocation9 + $0x1d8] sm:$0xff]
    %v3406 = vld [vmem:[#allocation9 + $0x1e0] sm:$0xff]
    %v3407 = vld [vmem:[#allocation9 + $0x1e8] sm:$0xff]
    %v3408 = vld [vmem:[#allocation9 + $0x1f0] sm:$0xff]
    %v3409 = vld [vmem:[#allocation9 + $0x1f8] sm:$0xff]
    %v3410 = vld [vmem:[#allocation9 + $0x200] sm:$0xff]
    %v3411 = vld [vmem:[#allocation9 + $0x208] sm:$0xff]
    %v3412 = vld [vmem:[#allocation9 + $0x210] sm:$0xff]
    %v3413 = vld [vmem:[#allocation9 + $0x218] sm:$0xff]
    %v3414 = vld [vmem:[#allocation9 + $0x220] sm:$0xff]
    %v3415 = vld [vmem:[#allocation9 + $0x228] sm:$0xff]
    %v3416 = vld [vmem:[#allocation9 + $0x230] sm:$0xff]
    %v3417 = vld [vmem:[#allocation9 + $0x238] sm:$0xff]
    %v3418 = vld [vmem:[#allocation9 + $0x240] sm:$0xff]
    %v3419 = vld [vmem:[#allocation9 + $0x248] sm:$0xff]
    %v3420 = vld [vmem:[#allocation9 + $0x250] sm:$0xff]
    %v3421 = vld [vmem:[#allocation9 + $0x258] sm:$0xff]
    %v3422 = vld [vmem:[#allocation9 + $0x260] sm:$0xff]
    %v3423 = vld [vmem:[#allocation9 + $0x268] sm:$0xff]
    %v3424 = vld [vmem:[#allocation9 + $0x270] sm:$0xff]
    %v3425 = vld [vmem:[#allocation9 + $0x278] sm:$0xff]
    %v3426 = vld [vmem:[#allocation9 + $0x280] sm:$0xff]
    %v3427 = vld [vmem:[#allocation9 + $0x288] sm:$0xff]
    %v3428 = vld [vmem:[#allocation9 + $0x290] sm:$0xff]
    %v3429 = vld [vmem:[#allocation9 + $0x298] sm:$0xff]
    %v3430 = vld [vmem:[#allocation9 + $0x2a0] sm:$0xff]
    %v3431 = vld [vmem:[#allocation9 + $0x2a8] sm:$0xff]
    %v3432 = vld [vmem:[#allocation9 + $0x2b0] sm:$0xff]
    %v3433 = vld [vmem:[#allocation9 + $0x2b8] sm:$0xff]
    %v3434 = vld [vmem:[#allocation9 + $0x2c0] sm:$0xff]
    %v3435 = vld [vmem:[#allocation9 + $0x2c8] sm:$0xff]
    %v3436 = vld [vmem:[#allocation9 + $0x2d0] sm:$0xff]
    %v3437 = vld [vmem:[#allocation9 + $0x2d8] sm:$0xff]
    %v3438 = vld [vmem:[#allocation9 + $0x2e0] sm:$0xff]
    %v3439 = vld [vmem:[#allocation9 + $0x2e8] sm:$0xff]
    %v3440 = vld [vmem:[#allocation9 + $0x2f0] sm:$0xff]
    %v3441 = vld [vmem:[#allocation9 + $0x2f8] sm:$0xff]
    %v3442 = vld [vmem:[#allocation9 + $0x300] sm:$0xff]
    %v3443 = vld [vmem:[#allocation9 + $0x308] sm:$0xff]
    %v3444 = vld [vmem:[#allocation9 + $0x310] sm:$0xff]
    %v3445 = vld [vmem:[#allocation9 + $0x318] sm:$0xff]
    %v3446 = vld [vmem:[#allocation9 + $0x320] sm:$0xff]
    %v3447 = vld [vmem:[#allocation9 + $0x328] sm:$0xff]
    %v3448 = vld [vmem:[#allocation9 + $0x330] sm:$0xff]
    %v3449 = vld [vmem:[#allocation9 + $0x338] sm:$0xff]
    %v3450 = vld [vmem:[#allocation9 + $0x340] sm:$0xff]
    %v3451 = vld [vmem:[#allocation9 + $0x348] sm:$0xff]
    %v3452 = vld [vmem:[#allocation9 + $0x350] sm:$0xff]
    %v3453 = vld [vmem:[#allocation9 + $0x358] sm:$0xff]
    %v3454 = vld [vmem:[#allocation9 + $0x360] sm:$0xff]
    %v3455 = vld [vmem:[#allocation9 + $0x368] sm:$0xff]
    %v3456 = vld [vmem:[#allocation9 + $0x370] sm:$0xff]
    %v3457 = vld [vmem:[#allocation9 + $0x378] sm:$0xff]
    %v3458 = vld [vmem:[#allocation9 + $0x380] sm:$0xff]
    %v3459 = vld [vmem:[#allocation9 + $0x388] sm:$0xff]
    %v3460 = vld [vmem:[#allocation9 + $0x390] sm:$0xff]
    %v3461 = vld [vmem:[#allocation9 + $0x398] sm:$0xff]
    %v3462 = vld [vmem:[#allocation9 + $0x3a0] sm:$0xff]
    %v3463 = vld [vmem:[#allocation9 + $0x3a8] sm:$0xff]
    %v3464 = vld [vmem:[#allocation9 + $0x3b0] sm:$0xff]
    %v3465 = vld [vmem:[#allocation9 + $0x3b8] sm:$0xff]
    %v3466 = vld [vmem:[#allocation9 + $0x3c0] sm:$0xff]
    %v3467 = vld [vmem:[#allocation9 + $0x3c8] sm:$0xff]
    %v3468 = vld [vmem:[#allocation9 + $0x3d0] sm:$0xff]
    %v3469 = vld [vmem:[#allocation9 + $0x3d8] sm:$0xff]
    %v3470 = vld [vmem:[#allocation9 + $0x3e0] sm:$0xff]
    %v3471 = vld [vmem:[#allocation9 + $0x3e8] sm:$0xff]
    %v3472 = vld [vmem:[#allocation9 + $0x3f0] sm:$0xff]
    %v3473 = vld [vmem:[#allocation9 + $0x3f8] sm:$0xff]
    %v3474 = vpack.c.bf16 %v3346, %v3346
    %v3475 = vpack.c.bf16 %v3347, %v3347
    %v3476 = vpack.c.bf16 %v3348, %v3348
    %v3477 = vpack.c.bf16 %v3349, %v3349
    %v3478 = vpack.c.bf16 %v3350, %v3350
    %v3479 = vpack.c.bf16 %v3351, %v3351
    %v3480 = vpack.c.bf16 %v3352, %v3352
    %v3481 = vpack.c.bf16 %v3353, %v3353
    %v3482 = vpack.c.bf16 %v3354, %v3354
    %v3483 = vpack.c.bf16 %v3355, %v3355
    %v3484 = vpack.c.bf16 %v3356, %v3356
    %v3485 = vpack.c.bf16 %v3357, %v3357
    %v3486 = vpack.c.bf16 %v3358, %v3358
    %v3487 = vpack.c.bf16 %v3359, %v3359
    %v3488 = vpack.c.bf16 %v3360, %v3360
    %v3489 = vpack.c.bf16 %v3361, %v3361
    %v3490 = vpack.c.bf16 %v3362, %v3362
    %v3491 = vpack.c.bf16 %v3363, %v3363
    %v3492 = vpack.c.bf16 %v3364, %v3364
    %v3493 = vpack.c.bf16 %v3365, %v3365
    %v3494 = vpack.c.bf16 %v3366, %v3366
    %v3495 = vpack.c.bf16 %v3367, %v3367
    %v3496 = vpack.c.bf16 %v3368, %v3368
    %v3497 = vpack.c.bf16 %v3369, %v3369
    %v3498 = vpack.c.bf16 %v3370, %v3370
    %v3499 = vpack.c.bf16 %v3371, %v3371
    %v3500 = vpack.c.bf16 %v3372, %v3372
    %v3501 = vpack.c.bf16 %v3373, %v3373
    %v3502 = vpack.c.bf16 %v3374, %v3374
    %v3503 = vpack.c.bf16 %v3375, %v3375
    %v3504 = vpack.c.bf16 %v3376, %v3376
    %v3505 = vpack.c.bf16 %v3377, %v3377
    %v3506 = vpack.c.bf16 %v3378, %v3378
    %v3507 = vpack.c.bf16 %v3379, %v3379
    %v3508 = vpack.c.bf16 %v3380, %v3380
    %v3509 = vpack.c.bf16 %v3381, %v3381
    %v3510 = vpack.c.bf16 %v3382, %v3382
    %v3511 = vpack.c.bf16 %v3383, %v3383
    %v3512 = vpack.c.bf16 %v3384, %v3384
    %v3513 = vpack.c.bf16 %v3385, %v3385
    %v3514 = vpack.c.bf16 %v3386, %v3386
    %v3515 = vpack.c.bf16 %v3387, %v3387
    %v3516 = vpack.c.bf16 %v3388, %v3388
    %v3517 = vpack.c.bf16 %v3389, %v3389
    %v3518 = vpack.c.bf16 %v3390, %v3390
    %v3519 = vpack.c.bf16 %v3391, %v3391
    %v3520 = vpack.c.bf16 %v3392, %v3392
    %v3521 = vpack.c.bf16 %v3393, %v3393
    %v3522 = vpack.c.bf16 %v3394, %v3394
    %v3523 = vpack.c.bf16 %v3395, %v3395
    %v3524 = vpack.c.bf16 %v3396, %v3396
    %v3525 = vpack.c.bf16 %v3397, %v3397
    %v3526 = vpack.c.bf16 %v3398, %v3398
    %v3527 = vpack.c.bf16 %v3399, %v3399
    %v3528 = vpack.c.bf16 %v3400, %v3400
    %v3529 = vpack.c.bf16 %v3401, %v3401
    %v3530 = vpack.c.bf16 %v3402, %v3402
    %v3531 = vpack.c.bf16 %v3403, %v3403
    %v3532 = vpack.c.bf16 %v3404, %v3404
    %v3533 = vpack.c.bf16 %v3405, %v3405
    %v3534 = vpack.c.bf16 %v3406, %v3406
    %v3535 = vpack.c.bf16 %v3407, %v3407
    %v3536 = vpack.c.bf16 %v3408, %v3408
    %v3537 = vpack.c.bf16 %v3409, %v3409
    %v3538 = vpack.c.bf16 %v3410, %v3410
    %v3539 = vpack.c.bf16 %v3411, %v3411
    %v3540 = vpack.c.bf16 %v3412, %v3412
    %v3541 = vpack.c.bf16 %v3413, %v3413
    %v3542 = vpack.c.bf16 %v3414, %v3414
    %v3543 = vpack.c.bf16 %v3415, %v3415
    %v3544 = vpack.c.bf16 %v3416, %v3416
    %v3545 = vpack.c.bf16 %v3417, %v3417
    %v3546 = vpack.c.bf16 %v3418, %v3418
    %v3547 = vpack.c.bf16 %v3419, %v3419
    %v3548 = vpack.c.bf16 %v3420, %v3420
    %v3549 = vpack.c.bf16 %v3421, %v3421
    %v3550 = vpack.c.bf16 %v3422, %v3422
    %v3551 = vpack.c.bf16 %v3423, %v3423
    %v3552 = vpack.c.bf16 %v3424, %v3424
    %v3553 = vpack.c.bf16 %v3425, %v3425
    %v3554 = vpack.c.bf16 %v3426, %v3426
    %v3555 = vpack.c.bf16 %v3427, %v3427
    %v3556 = vpack.c.bf16 %v3428, %v3428
    %v3557 = vpack.c.bf16 %v3429, %v3429
    %v3558 = vpack.c.bf16 %v3430, %v3430
    %v3559 = vpack.c.bf16 %v3431, %v3431
    %v3560 = vpack.c.bf16 %v3432, %v3432
    %v3561 = vpack.c.bf16 %v3433, %v3433
    %v3562 = vpack.c.bf16 %v3434, %v3434
    %v3563 = vpack.c.bf16 %v3435, %v3435
    %v3564 = vpack.c.bf16 %v3436, %v3436
    %v3565 = vpack.c.bf16 %v3437, %v3437
    %v3566 = vpack.c.bf16 %v3438, %v3438
    %v3567 = vpack.c.bf16 %v3439, %v3439
    %v3568 = vpack.c.bf16 %v3440, %v3440
    %v3569 = vpack.c.bf16 %v3441, %v3441
    %v3570 = vpack.c.bf16 %v3442, %v3442
    %v3571 = vpack.c.bf16 %v3443, %v3443
    %v3572 = vpack.c.bf16 %v3444, %v3444
    %v3573 = vpack.c.bf16 %v3445, %v3445
    %v3574 = vpack.c.bf16 %v3446, %v3446
    %v3575 = vpack.c.bf16 %v3447, %v3447
    %v3576 = vpack.c.bf16 %v3448, %v3448
    %v3577 = vpack.c.bf16 %v3449, %v3449
    %v3578 = vpack.c.bf16 %v3450, %v3450
    %v3579 = vpack.c.bf16 %v3451, %v3451
    %v3580 = vpack.c.bf16 %v3452, %v3452
    %v3581 = vpack.c.bf16 %v3453, %v3453
    %v3582 = vpack.c.bf16 %v3454, %v3454
    %v3583 = vpack.c.bf16 %v3455, %v3455
    %v3584 = vpack.c.bf16 %v3456, %v3456
    %v3585 = vpack.c.bf16 %v3457, %v3457
    %v3586 = vpack.c.bf16 %v3458, %v3458
    %v3587 = vpack.c.bf16 %v3459, %v3459
    %v3588 = vpack.c.bf16 %v3460, %v3460
    %v3589 = vpack.c.bf16 %v3461, %v3461
    %v3590 = vpack.c.bf16 %v3462, %v3462
    %v3591 = vpack.c.bf16 %v3463, %v3463
    %v3592 = vpack.c.bf16 %v3464, %v3464
    %v3593 = vpack.c.bf16 %v3465, %v3465
    %v3594 = vpack.c.bf16 %v3466, %v3466
    %v3595 = vpack.c.bf16 %v3467, %v3467
    %v3596 = vpack.c.bf16 %v3468, %v3468
    %v3597 = vpack.c.bf16 %v3469, %v3469
    %v3598 = vpack.c.bf16 %v3470, %v3470
    %v3599 = vpack.c.bf16 %v3471, %v3471
    %v3600 = vpack.c.bf16 %v3472, %v3472
    %v3601 = vpack.c.bf16 %v3473, %v3473
    %v3610 = vunpack.c.l.b16 %v3218
    %v3611 = vunpack.c.l.b16 %v3219
    %v3612 = vunpack.c.l.b16 %v3220
    %v3613 = vunpack.c.l.b16 %v3221
    %v3614 = vunpack.c.l.b16 %v3222
    %v3615 = vunpack.c.l.b16 %v3223
    %v3616 = vunpack.c.l.b16 %v3224
    %v3617 = vunpack.c.l.b16 %v3225
    %v3618 = vpack.c.b16 %v3611, %v3610
    %v3619 = vpack.c.b16 %v3613, %v3612
    %v3620 = vpack.c.b16 %v3615, %v3614
    %v3621 = vpack.c.b16 %v3617, %v3616
    %v3630 = vunpack.c.l.b16 %v3474
    %v3631 = vunpack.c.l.b16 %v3475
    %v3632 = vunpack.c.l.b16 %v3476
    %v3633 = vunpack.c.l.b16 %v3477
    %v3634 = vunpack.c.l.b16 %v3478
    %v3635 = vunpack.c.l.b16 %v3479
    %v3636 = vunpack.c.l.b16 %v3480
    %v3637 = vunpack.c.l.b16 %v3481
    %v3638 = vpack.c.b16 %v3631, %v3630
    %v3639 = vpack.c.b16 %v3633, %v3632
    %v3640 = vpack.c.b16 %v3635, %v3634
    %v3641 = vpack.c.b16 %v3637, %v3636
    %v3647 = vsel %vm617, %v3618, 0
    %v3650 = vsel %vm617, %v3619, 0
    %v3653 = vsel %vm617, %v3620, 0
    %v3656 = vsel %vm617, %v3621, 0
    %3658 = vmatpush.bf16.msra.mxu0 0
    %3659 = vmatpush.bf16.msra.mxu0 0
    %3660 = vmatpush.bf16.msra.mxu0 0
    %3661 = vmatpush.bf16.msra.mxu0 0
    %3662 = vmatpush.bf16.msra.mxu0 %v3641
    %3663 = vmatpush.bf16.msra.mxu0 %v3640
    %3664 = vmatpush.bf16.msra.mxu0 %v3639
    %3665 = vmatpush.bf16.msra.mxu0 %v3638
    %3666 = vmatmul.bf16.gmra.mxu0 %v3647
    %v3667 = vpop.f32.mrf.mxu0
    %v3668 = vadd.f32 0.0, %v3667
    %v3669 = vpop.f32.mrf.mxu0
    %v3670 = vadd.f32 0.0, %v3669
    %3671 = vmatmul.bf16.gmra.mxu0 %v3650
    %v3672 = vpop.f32.mrf.mxu0
    %v3673 = vadd.f32 0.0, %v3672
    %v3674 = vpop.f32.mrf.mxu0
    %v3675 = vadd.f32 0.0, %v3674
    %3676 = vmatmul.bf16.gmra.mxu0 %v3653
    %v3677 = vpop.f32.mrf.mxu0
    %v3678 = vadd.f32 0.0, %v3677
    %v3679 = vpop.f32.mrf.mxu0
    %v3680 = vadd.f32 0.0, %v3679
    %3681 = vmatmul.bf16.gmra.mxu0 %v3656
    %v3682 = vpop.f32.mrf.mxu0
    %v3683 = vadd.f32 0.0, %v3682
    %v3684 = vpop.f32.mrf.mxu0
    %v3685 = vadd.f32 0.0, %v3684
    %3686 = vdwg.mxu0
    %v3695 = vunpack.c.l.b16 %v3226
    %v3696 = vunpack.c.l.b16 %v3227
    %v3697 = vunpack.c.l.b16 %v3228
    %v3698 = vunpack.c.l.b16 %v3229
    %v3699 = vunpack.c.l.b16 %v3230
    %v3700 = vunpack.c.l.b16 %v3231
    %v3701 = vunpack.c.l.b16 %v3232
    %v3702 = vunpack.c.l.b16 %v3233
    %v3703 = vpack.c.b16 %v3696, %v3695
    %v3704 = vpack.c.b16 %v3698, %v3697
    %v3705 = vpack.c.b16 %v3700, %v3699
    %v3706 = vpack.c.b16 %v3702, %v3701
    %v3715 = vunpack.c.l.b16 %v3482
    %v3716 = vunpack.c.l.b16 %v3483
    %v3717 = vunpack.c.l.b16 %v3484
    %v3718 = vunpack.c.l.b16 %v3485
    %v3719 = vunpack.c.l.b16 %v3486
    %v3720 = vunpack.c.l.b16 %v3487
    %v3721 = vunpack.c.l.b16 %v3488
    %v3722 = vunpack.c.l.b16 %v3489
    %v3723 = vpack.c.b16 %v3716, %v3715
    %v3724 = vpack.c.b16 %v3718, %v3717
    %v3725 = vpack.c.b16 %v3720, %v3719
    %v3726 = vpack.c.b16 %v3722, %v3721
    %v3732 = vsel %vm617, %v3703, 0
    %v3735 = vsel %vm617, %v3704, 0
    %v3738 = vsel %vm617, %v3705, 0
    %v3741 = vsel %vm617, %v3706, 0
    %3743 = vmatpush.bf16.msra.mxu0 0
    %3744 = vmatpush.bf16.msra.mxu0 0
    %3745 = vmatpush.bf16.msra.mxu0 0
    %3746 = vmatpush.bf16.msra.mxu0 0
    %3747 = vmatpush.bf16.msra.mxu0 %v3726
    %3748 = vmatpush.bf16.msra.mxu0 %v3725
    %3749 = vmatpush.bf16.msra.mxu0 %v3724
    %3750 = vmatpush.bf16.msra.mxu0 %v3723
    %3751 = vmatmul.bf16.gmra.mxu0 %v3732
    %v3752 = vpop.f32.mrf.mxu0
    %v3753 = vadd.f32 0.0, %v3752
    %v3754 = vpop.f32.mrf.mxu0
    %v3755 = vadd.f32 0.0, %v3754
    %3756 = vmatmul.bf16.gmra.mxu0 %v3735
    %v3757 = vpop.f32.mrf.mxu0
    %v3758 = vadd.f32 0.0, %v3757
    %v3759 = vpop.f32.mrf.mxu0
    %v3760 = vadd.f32 0.0, %v3759
    %3761 = vmatmul.bf16.gmra.mxu0 %v3738
    %v3762 = vpop.f32.mrf.mxu0
    %v3763 = vadd.f32 0.0, %v3762
    %v3764 = vpop.f32.mrf.mxu0
    %v3765 = vadd.f32 0.0, %v3764
    %3766 = vmatmul.bf16.gmra.mxu0 %v3741
    %v3767 = vpop.f32.mrf.mxu0
    %v3768 = vadd.f32 0.0, %v3767
    %v3769 = vpop.f32.mrf.mxu0
    %v3770 = vadd.f32 0.0, %v3769
    %3771 = vdwg.mxu0
    %v3780 = vunpack.c.l.b16 %v3234
    %v3781 = vunpack.c.l.b16 %v3235
    %v3782 = vunpack.c.l.b16 %v3236
    %v3783 = vunpack.c.l.b16 %v3237
    %v3784 = vunpack.c.l.b16 %v3238
    %v3785 = vunpack.c.l.b16 %v3239
    %v3786 = vunpack.c.l.b16 %v3240
    %v3787 = vunpack.c.l.b16 %v3241
    %v3788 = vpack.c.b16 %v3781, %v3780
    %v3789 = vpack.c.b16 %v3783, %v3782
    %v3790 = vpack.c.b16 %v3785, %v3784
    %v3791 = vpack.c.b16 %v3787, %v3786
    %v3800 = vunpack.c.l.b16 %v3490
    %v3801 = vunpack.c.l.b16 %v3491
    %v3802 = vunpack.c.l.b16 %v3492
    %v3803 = vunpack.c.l.b16 %v3493
    %v3804 = vunpack.c.l.b16 %v3494
    %v3805 = vunpack.c.l.b16 %v3495
    %v3806 = vunpack.c.l.b16 %v3496
    %v3807 = vunpack.c.l.b16 %v3497
    %v3808 = vpack.c.b16 %v3801, %v3800
    %v3809 = vpack.c.b16 %v3803, %v3802
    %v3810 = vpack.c.b16 %v3805, %v3804
    %v3811 = vpack.c.b16 %v3807, %v3806
    %v3817 = vsel %vm617, %v3788, 0
    %v3820 = vsel %vm617, %v3789, 0
    %v3823 = vsel %vm617, %v3790, 0
    %v3826 = vsel %vm617, %v3791, 0
    %3828 = vmatpush.bf16.msra.mxu0 0
    %3829 = vmatpush.bf16.msra.mxu0 0
    %3830 = vmatpush.bf16.msra.mxu0 0
    %3831 = vmatpush.bf16.msra.mxu0 0
    %3832 = vmatpush.bf16.msra.mxu0 %v3811
    %3833 = vmatpush.bf16.msra.mxu0 %v3810
    %3834 = vmatpush.bf16.msra.mxu0 %v3809
    %3835 = vmatpush.bf16.msra.mxu0 %v3808
    %3836 = vmatmul.bf16.gmra.mxu0 %v3817
    %v3837 = vpop.f32.mrf.mxu0
    %v3838 = vadd.f32 0.0, %v3837
    %v3839 = vpop.f32.mrf.mxu0
    %v3840 = vadd.f32 0.0, %v3839
    %3841 = vmatmul.bf16.gmra.mxu0 %v3820
    %v3842 = vpop.f32.mrf.mxu0
    %v3843 = vadd.f32 0.0, %v3842
    %v3844 = vpop.f32.mrf.mxu0
    %v3845 = vadd.f32 0.0, %v3844
    %3846 = vmatmul.bf16.gmra.mxu0 %v3823
    %v3847 = vpop.f32.mrf.mxu0
    %v3848 = vadd.f32 0.0, %v3847
    %v3849 = vpop.f32.mrf.mxu0
    %v3850 = vadd.f32 0.0, %v3849
    %3851 = vmatmul.bf16.gmra.mxu0 %v3826
    %v3852 = vpop.f32.mrf.mxu0
    %v3853 = vadd.f32 0.0, %v3852
    %v3854 = vpop.f32.mrf.mxu0
    %v3855 = vadd.f32 0.0, %v3854
    %3856 = vdwg.mxu0
    %v3865 = vunpack.c.l.b16 %v3242
    %v3866 = vunpack.c.l.b16 %v3243
    %v3867 = vunpack.c.l.b16 %v3244
    %v3868 = vunpack.c.l.b16 %v3245
    %v3869 = vunpack.c.l.b16 %v3246
    %v3870 = vunpack.c.l.b16 %v3247
    %v3871 = vunpack.c.l.b16 %v3248
    %v3872 = vunpack.c.l.b16 %v3249
    %v3873 = vpack.c.b16 %v3866, %v3865
    %v3874 = vpack.c.b16 %v3868, %v3867
    %v3875 = vpack.c.b16 %v3870, %v3869
    %v3876 = vpack.c.b16 %v3872, %v3871
    %v3885 = vunpack.c.l.b16 %v3498
    %v3886 = vunpack.c.l.b16 %v3499
    %v3887 = vunpack.c.l.b16 %v3500
    %v3888 = vunpack.c.l.b16 %v3501
    %v3889 = vunpack.c.l.b16 %v3502
    %v3890 = vunpack.c.l.b16 %v3503
    %v3891 = vunpack.c.l.b16 %v3504
    %v3892 = vunpack.c.l.b16 %v3505
    %v3893 = vpack.c.b16 %v3886, %v3885
    %v3894 = vpack.c.b16 %v3888, %v3887
    %v3895 = vpack.c.b16 %v3890, %v3889
    %v3896 = vpack.c.b16 %v3892, %v3891
    %v3902 = vsel %vm617, %v3873, 0
    %v3905 = vsel %vm617, %v3874, 0
    %v3908 = vsel %vm617, %v3875, 0
    %v3911 = vsel %vm617, %v3876, 0
    %3913 = vmatpush.bf16.msra.mxu0 0
    %3914 = vmatpush.bf16.msra.mxu0 0
    %3915 = vmatpush.bf16.msra.mxu0 0
    %3916 = vmatpush.bf16.msra.mxu0 0
    %3917 = vmatpush.bf16.msra.mxu0 %v3896
    %3918 = vmatpush.bf16.msra.mxu0 %v3895
    %3919 = vmatpush.bf16.msra.mxu0 %v3894
    %3920 = vmatpush.bf16.msra.mxu0 %v3893
    %3921 = vmatmul.bf16.gmra.mxu0 %v3902
    %v3922 = vpop.f32.mrf.mxu0
    %v3923 = vadd.f32 0.0, %v3922
    %v3924 = vpop.f32.mrf.mxu0
    %v3925 = vadd.f32 0.0, %v3924
    %3926 = vmatmul.bf16.gmra.mxu0 %v3905
    %v3927 = vpop.f32.mrf.mxu0
    %v3928 = vadd.f32 0.0, %v3927
    %v3929 = vpop.f32.mrf.mxu0
    %v3930 = vadd.f32 0.0, %v3929
    %3931 = vmatmul.bf16.gmra.mxu0 %v3908
    %v3932 = vpop.f32.mrf.mxu0
    %v3933 = vadd.f32 0.0, %v3932
    %v3934 = vpop.f32.mrf.mxu0
    %v3935 = vadd.f32 0.0, %v3934
    %3936 = vmatmul.bf16.gmra.mxu0 %v3911
    %v3937 = vpop.f32.mrf.mxu0
    %v3938 = vadd.f32 0.0, %v3937
    %v3939 = vpop.f32.mrf.mxu0
    %v3940 = vadd.f32 0.0, %v3939
    %3941 = vdwg.mxu0
    %v3950 = vunpack.c.l.b16 %v3250
    %v3951 = vunpack.c.l.b16 %v3251
    %v3952 = vunpack.c.l.b16 %v3252
    %v3953 = vunpack.c.l.b16 %v3253
    %v3954 = vunpack.c.l.b16 %v3254
    %v3955 = vunpack.c.l.b16 %v3255
    %v3956 = vunpack.c.l.b16 %v3256
    %v3957 = vunpack.c.l.b16 %v3257
    %v3958 = vpack.c.b16 %v3951, %v3950
    %v3959 = vpack.c.b16 %v3953, %v3952
    %v3960 = vpack.c.b16 %v3955, %v3954
    %v3961 = vpack.c.b16 %v3957, %v3956
    %v3970 = vunpack.c.l.b16 %v3506
    %v3971 = vunpack.c.l.b16 %v3507
    %v3972 = vunpack.c.l.b16 %v3508
    %v3973 = vunpack.c.l.b16 %v3509
    %v3974 = vunpack.c.l.b16 %v3510
    %v3975 = vunpack.c.l.b16 %v3511
    %v3976 = vunpack.c.l.b16 %v3512
    %v3977 = vunpack.c.l.b16 %v3513
    %v3978 = vpack.c.b16 %v3971, %v3970
    %v3979 = vpack.c.b16 %v3973, %v3972
    %v3980 = vpack.c.b16 %v3975, %v3974
    %v3981 = vpack.c.b16 %v3977, %v3976
    %v3987 = vsel %vm617, %v3958, 0
    %v3990 = vsel %vm617, %v3959, 0
    %v3993 = vsel %vm617, %v3960, 0
    %v3996 = vsel %vm617, %v3961, 0
    %3998 = vmatpush.bf16.msra.mxu0 0
    %3999 = vmatpush.bf16.msra.mxu0 0
    %4000 = vmatpush.bf16.msra.mxu0 0
    %4001 = vmatpush.bf16.msra.mxu0 0
    %4002 = vmatpush.bf16.msra.mxu0 %v3981
    %4003 = vmatpush.bf16.msra.mxu0 %v3980
    %4004 = vmatpush.bf16.msra.mxu0 %v3979
    %4005 = vmatpush.bf16.msra.mxu0 %v3978
    %4006 = vmatmul.bf16.gmra.mxu0 %v3987
    %v4007 = vpop.f32.mrf.mxu0
    %v4008 = vadd.f32 0.0, %v4007
    %v4009 = vpop.f32.mrf.mxu0
    %v4010 = vadd.f32 0.0, %v4009
    %4011 = vmatmul.bf16.gmra.mxu0 %v3990
    %v4012 = vpop.f32.mrf.mxu0
    %v4013 = vadd.f32 0.0, %v4012
    %v4014 = vpop.f32.mrf.mxu0
    %v4015 = vadd.f32 0.0, %v4014
    %4016 = vmatmul.bf16.gmra.mxu0 %v3993
    %v4017 = vpop.f32.mrf.mxu0
    %v4018 = vadd.f32 0.0, %v4017
    %v4019 = vpop.f32.mrf.mxu0
    %v4020 = vadd.f32 0.0, %v4019
    %4021 = vmatmul.bf16.gmra.mxu0 %v3996
    %v4022 = vpop.f32.mrf.mxu0
    %v4023 = vadd.f32 0.0, %v4022
    %v4024 = vpop.f32.mrf.mxu0
    %v4025 = vadd.f32 0.0, %v4024
    %4026 = vdwg.mxu0
    %v4035 = vunpack.c.l.b16 %v3258
    %v4036 = vunpack.c.l.b16 %v3259
    %v4037 = vunpack.c.l.b16 %v3260
    %v4038 = vunpack.c.l.b16 %v3261
    %v4039 = vunpack.c.l.b16 %v3262
    %v4040 = vunpack.c.l.b16 %v3263
    %v4041 = vunpack.c.l.b16 %v3264
    %v4042 = vunpack.c.l.b16 %v3265
    %v4043 = vpack.c.b16 %v4036, %v4035
    %v4044 = vpack.c.b16 %v4038, %v4037
    %v4045 = vpack.c.b16 %v4040, %v4039
    %v4046 = vpack.c.b16 %v4042, %v4041
    %v4055 = vunpack.c.l.b16 %v3514
    %v4056 = vunpack.c.l.b16 %v3515
    %v4057 = vunpack.c.l.b16 %v3516
    %v4058 = vunpack.c.l.b16 %v3517
    %v4059 = vunpack.c.l.b16 %v3518
    %v4060 = vunpack.c.l.b16 %v3519
    %v4061 = vunpack.c.l.b16 %v3520
    %v4062 = vunpack.c.l.b16 %v3521
    %v4063 = vpack.c.b16 %v4056, %v4055
    %v4064 = vpack.c.b16 %v4058, %v4057
    %v4065 = vpack.c.b16 %v4060, %v4059
    %v4066 = vpack.c.b16 %v4062, %v4061
    %v4072 = vsel %vm617, %v4043, 0
    %v4075 = vsel %vm617, %v4044, 0
    %v4078 = vsel %vm617, %v4045, 0
    %v4081 = vsel %vm617, %v4046, 0
    %4083 = vmatpush.bf16.msra.mxu0 0
    %4084 = vmatpush.bf16.msra.mxu0 0
    %4085 = vmatpush.bf16.msra.mxu0 0
    %4086 = vmatpush.bf16.msra.mxu0 0
    %4087 = vmatpush.bf16.msra.mxu0 %v4066
    %4088 = vmatpush.bf16.msra.mxu0 %v4065
    %4089 = vmatpush.bf16.msra.mxu0 %v4064
    %4090 = vmatpush.bf16.msra.mxu0 %v4063
    %4091 = vmatmul.bf16.gmra.mxu0 %v4072
    %v4092 = vpop.f32.mrf.mxu0
    %v4093 = vadd.f32 0.0, %v4092
    %v4094 = vpop.f32.mrf.mxu0
    %v4095 = vadd.f32 0.0, %v4094
    %4096 = vmatmul.bf16.gmra.mxu0 %v4075
    %v4097 = vpop.f32.mrf.mxu0
    %v4098 = vadd.f32 0.0, %v4097
    %v4099 = vpop.f32.mrf.mxu0
    %v4100 = vadd.f32 0.0, %v4099
    %4101 = vmatmul.bf16.gmra.mxu0 %v4078
    %v4102 = vpop.f32.mrf.mxu0
    %v4103 = vadd.f32 0.0, %v4102
    %v4104 = vpop.f32.mrf.mxu0
    %v4105 = vadd.f32 0.0, %v4104
    %4106 = vmatmul.bf16.gmra.mxu0 %v4081
    %v4107 = vpop.f32.mrf.mxu0
    %v4108 = vadd.f32 0.0, %v4107
    %v4109 = vpop.f32.mrf.mxu0
    %v4110 = vadd.f32 0.0, %v4109
    %4111 = vdwg.mxu0
    %v4120 = vunpack.c.l.b16 %v3266
    %v4121 = vunpack.c.l.b16 %v3267
    %v4122 = vunpack.c.l.b16 %v3268
    %v4123 = vunpack.c.l.b16 %v3269
    %v4124 = vunpack.c.l.b16 %v3270
    %v4125 = vunpack.c.l.b16 %v3271
    %v4126 = vunpack.c.l.b16 %v3272
    %v4127 = vunpack.c.l.b16 %v3273
    %v4128 = vpack.c.b16 %v4121, %v4120
    %v4129 = vpack.c.b16 %v4123, %v4122
    %v4130 = vpack.c.b16 %v4125, %v4124
    %v4131 = vpack.c.b16 %v4127, %v4126
    %v4140 = vunpack.c.l.b16 %v3522
    %v4141 = vunpack.c.l.b16 %v3523
    %v4142 = vunpack.c.l.b16 %v3524
    %v4143 = vunpack.c.l.b16 %v3525
    %v4144 = vunpack.c.l.b16 %v3526
    %v4145 = vunpack.c.l.b16 %v3527
    %v4146 = vunpack.c.l.b16 %v3528
    %v4147 = vunpack.c.l.b16 %v3529
    %v4148 = vpack.c.b16 %v4141, %v4140
    %v4149 = vpack.c.b16 %v4143, %v4142
    %v4150 = vpack.c.b16 %v4145, %v4144
    %v4151 = vpack.c.b16 %v4147, %v4146
    %v4157 = vsel %vm617, %v4128, 0
    %v4160 = vsel %vm617, %v4129, 0
    %v4163 = vsel %vm617, %v4130, 0
    %v4166 = vsel %vm617, %v4131, 0
    %4168 = vmatpush.bf16.msra.mxu0 0
    %4169 = vmatpush.bf16.msra.mxu0 0
    %4170 = vmatpush.bf16.msra.mxu0 0
    %4171 = vmatpush.bf16.msra.mxu0 0
    %4172 = vmatpush.bf16.msra.mxu0 %v4151
    %4173 = vmatpush.bf16.msra.mxu0 %v4150
    %4174 = vmatpush.bf16.msra.mxu0 %v4149
    %4175 = vmatpush.bf16.msra.mxu0 %v4148
    %4176 = vmatmul.bf16.gmra.mxu0 %v4157
    %v4177 = vpop.f32.mrf.mxu0
    %v4178 = vadd.f32 0.0, %v4177
    %v4179 = vpop.f32.mrf.mxu0
    %v4180 = vadd.f32 0.0, %v4179
    %4181 = vmatmul.bf16.gmra.mxu0 %v4160
    %v4182 = vpop.f32.mrf.mxu0
    %v4183 = vadd.f32 0.0, %v4182
    %v4184 = vpop.f32.mrf.mxu0
    %v4185 = vadd.f32 0.0, %v4184
    %4186 = vmatmul.bf16.gmra.mxu0 %v4163
    %v4187 = vpop.f32.mrf.mxu0
    %v4188 = vadd.f32 0.0, %v4187
    %v4189 = vpop.f32.mrf.mxu0
    %v4190 = vadd.f32 0.0, %v4189
    %4191 = vmatmul.bf16.gmra.mxu0 %v4166
    %v4192 = vpop.f32.mrf.mxu0
    %v4193 = vadd.f32 0.0, %v4192
    %v4194 = vpop.f32.mrf.mxu0
    %v4195 = vadd.f32 0.0, %v4194
    %4196 = vdwg.mxu0
    %v4205 = vunpack.c.l.b16 %v3274
    %v4206 = vunpack.c.l.b16 %v3275
    %v4207 = vunpack.c.l.b16 %v3276
    %v4208 = vunpack.c.l.b16 %v3277
    %v4209 = vunpack.c.l.b16 %v3278
    %v4210 = vunpack.c.l.b16 %v3279
    %v4211 = vunpack.c.l.b16 %v3280
    %v4212 = vunpack.c.l.b16 %v3281
    %v4213 = vpack.c.b16 %v4206, %v4205
    %v4214 = vpack.c.b16 %v4208, %v4207
    %v4215 = vpack.c.b16 %v4210, %v4209
    %v4216 = vpack.c.b16 %v4212, %v4211
    %v4225 = vunpack.c.l.b16 %v3530
    %v4226 = vunpack.c.l.b16 %v3531
    %v4227 = vunpack.c.l.b16 %v3532
    %v4228 = vunpack.c.l.b16 %v3533
    %v4229 = vunpack.c.l.b16 %v3534
    %v4230 = vunpack.c.l.b16 %v3535
    %v4231 = vunpack.c.l.b16 %v3536
    %v4232 = vunpack.c.l.b16 %v3537
    %v4233 = vpack.c.b16 %v4226, %v4225
    %v4234 = vpack.c.b16 %v4228, %v4227
    %v4235 = vpack.c.b16 %v4230, %v4229
    %v4236 = vpack.c.b16 %v4232, %v4231
    %v4242 = vsel %vm617, %v4213, 0
    %v4245 = vsel %vm617, %v4214, 0
    %v4248 = vsel %vm617, %v4215, 0
    %v4251 = vsel %vm617, %v4216, 0
    %4253 = vmatpush.bf16.msra.mxu0 0
    %4254 = vmatpush.bf16.msra.mxu0 0
    %4255 = vmatpush.bf16.msra.mxu0 0
    %4256 = vmatpush.bf16.msra.mxu0 0
    %4257 = vmatpush.bf16.msra.mxu0 %v4236
    %4258 = vmatpush.bf16.msra.mxu0 %v4235
    %4259 = vmatpush.bf16.msra.mxu0 %v4234
    %4260 = vmatpush.bf16.msra.mxu0 %v4233
    %4261 = vmatmul.bf16.gmra.mxu0 %v4242
    %v4262 = vpop.f32.mrf.mxu0
    %v4263 = vadd.f32 0.0, %v4262
    %v4264 = vpop.f32.mrf.mxu0
    %v4265 = vadd.f32 0.0, %v4264
    %4266 = vmatmul.bf16.gmra.mxu0 %v4245
    %v4267 = vpop.f32.mrf.mxu0
    %v4268 = vadd.f32 0.0, %v4267
    %v4269 = vpop.f32.mrf.mxu0
    %v4270 = vadd.f32 0.0, %v4269
    %4271 = vmatmul.bf16.gmra.mxu0 %v4248
    %v4272 = vpop.f32.mrf.mxu0
    %v4273 = vadd.f32 0.0, %v4272
    %v4274 = vpop.f32.mrf.mxu0
    %v4275 = vadd.f32 0.0, %v4274
    %4276 = vmatmul.bf16.gmra.mxu0 %v4251
    %v4277 = vpop.f32.mrf.mxu0
    %v4278 = vadd.f32 0.0, %v4277
    %v4279 = vpop.f32.mrf.mxu0
    %v4280 = vadd.f32 0.0, %v4279
    %4281 = vdwg.mxu0
    %v4290 = vunpack.c.l.b16 %v3282
    %v4291 = vunpack.c.l.b16 %v3283
    %v4292 = vunpack.c.l.b16 %v3284
    %v4293 = vunpack.c.l.b16 %v3285
    %v4294 = vunpack.c.l.b16 %v3286
    %v4295 = vunpack.c.l.b16 %v3287
    %v4296 = vunpack.c.l.b16 %v3288
    %v4297 = vunpack.c.l.b16 %v3289
    %v4298 = vpack.c.b16 %v4291, %v4290
    %v4299 = vpack.c.b16 %v4293, %v4292
    %v4300 = vpack.c.b16 %v4295, %v4294
    %v4301 = vpack.c.b16 %v4297, %v4296
    %v4310 = vunpack.c.l.b16 %v3538
    %v4311 = vunpack.c.l.b16 %v3539
    %v4312 = vunpack.c.l.b16 %v3540
    %v4313 = vunpack.c.l.b16 %v3541
    %v4314 = vunpack.c.l.b16 %v3542
    %v4315 = vunpack.c.l.b16 %v3543
    %v4316 = vunpack.c.l.b16 %v3544
    %v4317 = vunpack.c.l.b16 %v3545
    %v4318 = vpack.c.b16 %v4311, %v4310
    %v4319 = vpack.c.b16 %v4313, %v4312
    %v4320 = vpack.c.b16 %v4315, %v4314
    %v4321 = vpack.c.b16 %v4317, %v4316
    %v4327 = vsel %vm617, %v4298, 0
    %v4330 = vsel %vm617, %v4299, 0
    %v4333 = vsel %vm617, %v4300, 0
    %v4336 = vsel %vm617, %v4301, 0
    %4338 = vmatpush.bf16.msra.mxu0 0
    %4339 = vmatpush.bf16.msra.mxu0 0
    %4340 = vmatpush.bf16.msra.mxu0 0
    %4341 = vmatpush.bf16.msra.mxu0 0
    %4342 = vmatpush.bf16.msra.mxu0 %v4321
    %4343 = vmatpush.bf16.msra.mxu0 %v4320
    %4344 = vmatpush.bf16.msra.mxu0 %v4319
    %4345 = vmatpush.bf16.msra.mxu0 %v4318
    %4346 = vmatmul.bf16.gmra.mxu0 %v4327
    %v4347 = vpop.f32.mrf.mxu0
    %v4348 = vadd.f32 0.0, %v4347
    %v4349 = vpop.f32.mrf.mxu0
    %v4350 = vadd.f32 0.0, %v4349
    %4351 = vmatmul.bf16.gmra.mxu0 %v4330
    %v4352 = vpop.f32.mrf.mxu0
    %v4353 = vadd.f32 0.0, %v4352
    %v4354 = vpop.f32.mrf.mxu0
    %v4355 = vadd.f32 0.0, %v4354
    %4356 = vmatmul.bf16.gmra.mxu0 %v4333
    %v4357 = vpop.f32.mrf.mxu0
    %v4358 = vadd.f32 0.0, %v4357
    %v4359 = vpop.f32.mrf.mxu0
    %v4360 = vadd.f32 0.0, %v4359
    %4361 = vmatmul.bf16.gmra.mxu0 %v4336
    %v4362 = vpop.f32.mrf.mxu0
    %v4363 = vadd.f32 0.0, %v4362
    %v4364 = vpop.f32.mrf.mxu0
    %v4365 = vadd.f32 0.0, %v4364
    %4366 = vdwg.mxu0
    %v4375 = vunpack.c.l.b16 %v3290
    %v4376 = vunpack.c.l.b16 %v3291
    %v4377 = vunpack.c.l.b16 %v3292
    %v4378 = vunpack.c.l.b16 %v3293
    %v4379 = vunpack.c.l.b16 %v3294
    %v4380 = vunpack.c.l.b16 %v3295
    %v4381 = vunpack.c.l.b16 %v3296
    %v4382 = vunpack.c.l.b16 %v3297
    %v4383 = vpack.c.b16 %v4376, %v4375
    %v4384 = vpack.c.b16 %v4378, %v4377
    %v4385 = vpack.c.b16 %v4380, %v4379
    %v4386 = vpack.c.b16 %v4382, %v4381
    %v4395 = vunpack.c.l.b16 %v3546
    %v4396 = vunpack.c.l.b16 %v3547
    %v4397 = vunpack.c.l.b16 %v3548
    %v4398 = vunpack.c.l.b16 %v3549
    %v4399 = vunpack.c.l.b16 %v3550
    %v4400 = vunpack.c.l.b16 %v3551
    %v4401 = vunpack.c.l.b16 %v3552
    %v4402 = vunpack.c.l.b16 %v3553
    %v4403 = vpack.c.b16 %v4396, %v4395
    %v4404 = vpack.c.b16 %v4398, %v4397
    %v4405 = vpack.c.b16 %v4400, %v4399
    %v4406 = vpack.c.b16 %v4402, %v4401
    %v4412 = vsel %vm617, %v4383, 0
    %v4415 = vsel %vm617, %v4384, 0
    %v4418 = vsel %vm617, %v4385, 0
    %v4421 = vsel %vm617, %v4386, 0
    %4423 = vmatpush.bf16.msra.mxu0 0
    %4424 = vmatpush.bf16.msra.mxu0 0
    %4425 = vmatpush.bf16.msra.mxu0 0
    %4426 = vmatpush.bf16.msra.mxu0 0
    %4427 = vmatpush.bf16.msra.mxu0 %v4406
    %4428 = vmatpush.bf16.msra.mxu0 %v4405
    %4429 = vmatpush.bf16.msra.mxu0 %v4404
    %4430 = vmatpush.bf16.msra.mxu0 %v4403
    %4431 = vmatmul.bf16.gmra.mxu0 %v4412
    %v4432 = vpop.f32.mrf.mxu0
    %v4433 = vadd.f32 0.0, %v4432
    %v4434 = vpop.f32.mrf.mxu0
    %v4435 = vadd.f32 0.0, %v4434
    %4436 = vmatmul.bf16.gmra.mxu0 %v4415
    %v4437 = vpop.f32.mrf.mxu0
    %v4438 = vadd.f32 0.0, %v4437
    %v4439 = vpop.f32.mrf.mxu0
    %v4440 = vadd.f32 0.0, %v4439
    %4441 = vmatmul.bf16.gmra.mxu0 %v4418
    %v4442 = vpop.f32.mrf.mxu0
    %v4443 = vadd.f32 0.0, %v4442
    %v4444 = vpop.f32.mrf.mxu0
    %v4445 = vadd.f32 0.0, %v4444
    %4446 = vmatmul.bf16.gmra.mxu0 %v4421
    %v4447 = vpop.f32.mrf.mxu0
    %v4448 = vadd.f32 0.0, %v4447
    %v4449 = vpop.f32.mrf.mxu0
    %v4450 = vadd.f32 0.0, %v4449
    %4451 = vdwg.mxu0
    %v4460 = vunpack.c.l.b16 %v3298
    %v4461 = vunpack.c.l.b16 %v3299
    %v4462 = vunpack.c.l.b16 %v3300
    %v4463 = vunpack.c.l.b16 %v3301
    %v4464 = vunpack.c.l.b16 %v3302
    %v4465 = vunpack.c.l.b16 %v3303
    %v4466 = vunpack.c.l.b16 %v3304
    %v4467 = vunpack.c.l.b16 %v3305
    %v4468 = vpack.c.b16 %v4461, %v4460
    %v4469 = vpack.c.b16 %v4463, %v4462
    %v4470 = vpack.c.b16 %v4465, %v4464
    %v4471 = vpack.c.b16 %v4467, %v4466
    %v4480 = vunpack.c.l.b16 %v3554
    %v4481 = vunpack.c.l.b16 %v3555
    %v4482 = vunpack.c.l.b16 %v3556
    %v4483 = vunpack.c.l.b16 %v3557
    %v4484 = vunpack.c.l.b16 %v3558
    %v4485 = vunpack.c.l.b16 %v3559
    %v4486 = vunpack.c.l.b16 %v3560
    %v4487 = vunpack.c.l.b16 %v3561
    %v4488 = vpack.c.b16 %v4481, %v4480
    %v4489 = vpack.c.b16 %v4483, %v4482
    %v4490 = vpack.c.b16 %v4485, %v4484
    %v4491 = vpack.c.b16 %v4487, %v4486
    %v4497 = vsel %vm617, %v4468, 0
    %v4500 = vsel %vm617, %v4469, 0
    %v4503 = vsel %vm617, %v4470, 0
    %v4506 = vsel %vm617, %v4471, 0
    %4508 = vmatpush.bf16.msra.mxu0 0
    %4509 = vmatpush.bf16.msra.mxu0 0
    %4510 = vmatpush.bf16.msra.mxu0 0
    %4511 = vmatpush.bf16.msra.mxu0 0
    %4512 = vmatpush.bf16.msra.mxu0 %v4491
    %4513 = vmatpush.bf16.msra.mxu0 %v4490
    %4514 = vmatpush.bf16.msra.mxu0 %v4489
    %4515 = vmatpush.bf16.msra.mxu0 %v4488
    %4516 = vmatmul.bf16.gmra.mxu0 %v4497
    %v4517 = vpop.f32.mrf.mxu0
    %v4518 = vadd.f32 0.0, %v4517
    %v4519 = vpop.f32.mrf.mxu0
    %v4520 = vadd.f32 0.0, %v4519
    %4521 = vmatmul.bf16.gmra.mxu0 %v4500
    %v4522 = vpop.f32.mrf.mxu0
    %v4523 = vadd.f32 0.0, %v4522
    %v4524 = vpop.f32.mrf.mxu0
    %v4525 = vadd.f32 0.0, %v4524
    %4526 = vmatmul.bf16.gmra.mxu0 %v4503
    %v4527 = vpop.f32.mrf.mxu0
    %v4528 = vadd.f32 0.0, %v4527
    %v4529 = vpop.f32.mrf.mxu0
    %v4530 = vadd.f32 0.0, %v4529
    %4531 = vmatmul.bf16.gmra.mxu0 %v4506
    %v4532 = vpop.f32.mrf.mxu0
    %v4533 = vadd.f32 0.0, %v4532
    %v4534 = vpop.f32.mrf.mxu0
    %v4535 = vadd.f32 0.0, %v4534
    %4536 = vdwg.mxu0
    %v4545 = vunpack.c.l.b16 %v3306
    %v4546 = vunpack.c.l.b16 %v3307
    %v4547 = vunpack.c.l.b16 %v3308
    %v4548 = vunpack.c.l.b16 %v3309
    %v4549 = vunpack.c.l.b16 %v3310
    %v4550 = vunpack.c.l.b16 %v3311
    %v4551 = vunpack.c.l.b16 %v3312
    %v4552 = vunpack.c.l.b16 %v3313
    %v4553 = vpack.c.b16 %v4546, %v4545
    %v4554 = vpack.c.b16 %v4548, %v4547
    %v4555 = vpack.c.b16 %v4550, %v4549
    %v4556 = vpack.c.b16 %v4552, %v4551
    %v4565 = vunpack.c.l.b16 %v3562
    %v4566 = vunpack.c.l.b16 %v3563
    %v4567 = vunpack.c.l.b16 %v3564
    %v4568 = vunpack.c.l.b16 %v3565
    %v4569 = vunpack.c.l.b16 %v3566
    %v4570 = vunpack.c.l.b16 %v3567
    %v4571 = vunpack.c.l.b16 %v3568
    %v4572 = vunpack.c.l.b16 %v3569
    %v4573 = vpack.c.b16 %v4566, %v4565
    %v4574 = vpack.c.b16 %v4568, %v4567
    %v4575 = vpack.c.b16 %v4570, %v4569
    %v4576 = vpack.c.b16 %v4572, %v4571
    %v4582 = vsel %vm617, %v4553, 0
    %v4585 = vsel %vm617, %v4554, 0
    %v4588 = vsel %vm617, %v4555, 0
    %v4591 = vsel %vm617, %v4556, 0
    %4593 = vmatpush.bf16.msra.mxu0 0
    %4594 = vmatpush.bf16.msra.mxu0 0
    %4595 = vmatpush.bf16.msra.mxu0 0
    %4596 = vmatpush.bf16.msra.mxu0 0
    %4597 = vmatpush.bf16.msra.mxu0 %v4576
    %4598 = vmatpush.bf16.msra.mxu0 %v4575
    %4599 = vmatpush.bf16.msra.mxu0 %v4574
    %4600 = vmatpush.bf16.msra.mxu0 %v4573
    %4601 = vmatmul.bf16.gmra.mxu0 %v4582
    %v4602 = vpop.f32.mrf.mxu0
    %v4603 = vadd.f32 0.0, %v4602
    %v4604 = vpop.f32.mrf.mxu0
    %v4605 = vadd.f32 0.0, %v4604
    %4606 = vmatmul.bf16.gmra.mxu0 %v4585
    %v4607 = vpop.f32.mrf.mxu0
    %v4608 = vadd.f32 0.0, %v4607
    %v4609 = vpop.f32.mrf.mxu0
    %v4610 = vadd.f32 0.0, %v4609
    %4611 = vmatmul.bf16.gmra.mxu0 %v4588
    %v4612 = vpop.f32.mrf.mxu0
    %v4613 = vadd.f32 0.0, %v4612
    %v4614 = vpop.f32.mrf.mxu0
    %v4615 = vadd.f32 0.0, %v4614
    %4616 = vmatmul.bf16.gmra.mxu0 %v4591
    %v4617 = vpop.f32.mrf.mxu0
    %v4618 = vadd.f32 0.0, %v4617
    %v4619 = vpop.f32.mrf.mxu0
    %v4620 = vadd.f32 0.0, %v4619
    %4621 = vdwg.mxu0
    %v4630 = vunpack.c.l.b16 %v3314
    %v4631 = vunpack.c.l.b16 %v3315
    %v4632 = vunpack.c.l.b16 %v3316
    %v4633 = vunpack.c.l.b16 %v3317
    %v4634 = vunpack.c.l.b16 %v3318
    %v4635 = vunpack.c.l.b16 %v3319
    %v4636 = vunpack.c.l.b16 %v3320
    %v4637 = vunpack.c.l.b16 %v3321
    %v4638 = vpack.c.b16 %v4631, %v4630
    %v4639 = vpack.c.b16 %v4633, %v4632
    %v4640 = vpack.c.b16 %v4635, %v4634
    %v4641 = vpack.c.b16 %v4637, %v4636
    %v4650 = vunpack.c.l.b16 %v3570
    %v4651 = vunpack.c.l.b16 %v3571
    %v4652 = vunpack.c.l.b16 %v3572
    %v4653 = vunpack.c.l.b16 %v3573
    %v4654 = vunpack.c.l.b16 %v3574
    %v4655 = vunpack.c.l.b16 %v3575
    %v4656 = vunpack.c.l.b16 %v3576
    %v4657 = vunpack.c.l.b16 %v3577
    %v4658 = vpack.c.b16 %v4651, %v4650
    %v4659 = vpack.c.b16 %v4653, %v4652
    %v4660 = vpack.c.b16 %v4655, %v4654
    %v4661 = vpack.c.b16 %v4657, %v4656
    %v4667 = vsel %vm617, %v4638, 0
    %v4670 = vsel %vm617, %v4639, 0
    %v4673 = vsel %vm617, %v4640, 0
    %v4676 = vsel %vm617, %v4641, 0
    %4678 = vmatpush.bf16.msra.mxu0 0
    %4679 = vmatpush.bf16.msra.mxu0 0
    %4680 = vmatpush.bf16.msra.mxu0 0
    %4681 = vmatpush.bf16.msra.mxu0 0
    %4682 = vmatpush.bf16.msra.mxu0 %v4661
    %4683 = vmatpush.bf16.msra.mxu0 %v4660
    %4684 = vmatpush.bf16.msra.mxu0 %v4659
    %4685 = vmatpush.bf16.msra.mxu0 %v4658
    %4686 = vmatmul.bf16.gmra.mxu0 %v4667
    %v4687 = vpop.f32.mrf.mxu0
    %v4688 = vadd.f32 0.0, %v4687
    %v4689 = vpop.f32.mrf.mxu0
    %v4690 = vadd.f32 0.0, %v4689
    %4691 = vmatmul.bf16.gmra.mxu0 %v4670
    %v4692 = vpop.f32.mrf.mxu0
    %v4693 = vadd.f32 0.0, %v4692
    %v4694 = vpop.f32.mrf.mxu0
    %v4695 = vadd.f32 0.0, %v4694
    %4696 = vmatmul.bf16.gmra.mxu0 %v4673
    %v4697 = vpop.f32.mrf.mxu0
    %v4698 = vadd.f32 0.0, %v4697
    %v4699 = vpop.f32.mrf.mxu0
    %v4700 = vadd.f32 0.0, %v4699
    %4701 = vmatmul.bf16.gmra.mxu0 %v4676
    %v4702 = vpop.f32.mrf.mxu0
    %v4703 = vadd.f32 0.0, %v4702
    %v4704 = vpop.f32.mrf.mxu0
    %v4705 = vadd.f32 0.0, %v4704
    %4706 = vdwg.mxu0
    %v4715 = vunpack.c.l.b16 %v3322
    %v4716 = vunpack.c.l.b16 %v3323
    %v4717 = vunpack.c.l.b16 %v3324
    %v4718 = vunpack.c.l.b16 %v3325
    %v4719 = vunpack.c.l.b16 %v3326
    %v4720 = vunpack.c.l.b16 %v3327
    %v4721 = vunpack.c.l.b16 %v3328
    %v4722 = vunpack.c.l.b16 %v3329
    %v4723 = vpack.c.b16 %v4716, %v4715
    %v4724 = vpack.c.b16 %v4718, %v4717
    %v4725 = vpack.c.b16 %v4720, %v4719
    %v4726 = vpack.c.b16 %v4722, %v4721
    %v4735 = vunpack.c.l.b16 %v3578
    %v4736 = vunpack.c.l.b16 %v3579
    %v4737 = vunpack.c.l.b16 %v3580
    %v4738 = vunpack.c.l.b16 %v3581
    %v4739 = vunpack.c.l.b16 %v3582
    %v4740 = vunpack.c.l.b16 %v3583
    %v4741 = vunpack.c.l.b16 %v3584
    %v4742 = vunpack.c.l.b16 %v3585
    %v4743 = vpack.c.b16 %v4736, %v4735
    %v4744 = vpack.c.b16 %v4738, %v4737
    %v4745 = vpack.c.b16 %v4740, %v4739
    %v4746 = vpack.c.b16 %v4742, %v4741
    %v4752 = vsel %vm617, %v4723, 0
    %v4755 = vsel %vm617, %v4724, 0
    %v4758 = vsel %vm617, %v4725, 0
    %v4761 = vsel %vm617, %v4726, 0
    %4763 = vmatpush.bf16.msra.mxu0 0
    %4764 = vmatpush.bf16.msra.mxu0 0
    %4765 = vmatpush.bf16.msra.mxu0 0
    %4766 = vmatpush.bf16.msra.mxu0 0
    %4767 = vmatpush.bf16.msra.mxu0 %v4746
    %4768 = vmatpush.bf16.msra.mxu0 %v4745
    %4769 = vmatpush.bf16.msra.mxu0 %v4744
    %4770 = vmatpush.bf16.msra.mxu0 %v4743
    %4771 = vmatmul.bf16.gmra.mxu0 %v4752
    %v4772 = vpop.f32.mrf.mxu0
    %v4773 = vadd.f32 0.0, %v4772
    %v4774 = vpop.f32.mrf.mxu0
    %v4775 = vadd.f32 0.0, %v4774
    %4776 = vmatmul.bf16.gmra.mxu0 %v4755
    %v4777 = vpop.f32.mrf.mxu0
    %v4778 = vadd.f32 0.0, %v4777
    %v4779 = vpop.f32.mrf.mxu0
    %v4780 = vadd.f32 0.0, %v4779
    %4781 = vmatmul.bf16.gmra.mxu0 %v4758
    %v4782 = vpop.f32.mrf.mxu0
    %v4783 = vadd.f32 0.0, %v4782
    %v4784 = vpop.f32.mrf.mxu0
    %v4785 = vadd.f32 0.0, %v4784
    %4786 = vmatmul.bf16.gmra.mxu0 %v4761
    %v4787 = vpop.f32.mrf.mxu0
    %v4788 = vadd.f32 0.0, %v4787
    %v4789 = vpop.f32.mrf.mxu0
    %v4790 = vadd.f32 0.0, %v4789
    %4791 = vdwg.mxu0
    %v4800 = vunpack.c.l.b16 %v3330
    %v4801 = vunpack.c.l.b16 %v3331
    %v4802 = vunpack.c.l.b16 %v3332
    %v4803 = vunpack.c.l.b16 %v3333
    %v4804 = vunpack.c.l.b16 %v3334
    %v4805 = vunpack.c.l.b16 %v3335
    %v4806 = vunpack.c.l.b16 %v3336
    %v4807 = vunpack.c.l.b16 %v3337
    %v4808 = vpack.c.b16 %v4801, %v4800
    %v4809 = vpack.c.b16 %v4803, %v4802
    %v4810 = vpack.c.b16 %v4805, %v4804
    %v4811 = vpack.c.b16 %v4807, %v4806
    %v4820 = vunpack.c.l.b16 %v3586
    %v4821 = vunpack.c.l.b16 %v3587
    %v4822 = vunpack.c.l.b16 %v3588
    %v4823 = vunpack.c.l.b16 %v3589
    %v4824 = vunpack.c.l.b16 %v3590
    %v4825 = vunpack.c.l.b16 %v3591
    %v4826 = vunpack.c.l.b16 %v3592
    %v4827 = vunpack.c.l.b16 %v3593
    %v4828 = vpack.c.b16 %v4821, %v4820
    %v4829 = vpack.c.b16 %v4823, %v4822
    %v4830 = vpack.c.b16 %v4825, %v4824
    %v4831 = vpack.c.b16 %v4827, %v4826
    %v4837 = vsel %vm617, %v4808, 0
    %v4840 = vsel %vm617, %v4809, 0
    %v4843 = vsel %vm617, %v4810, 0
    %v4846 = vsel %vm617, %v4811, 0
    %4848 = vmatpush.bf16.msra.mxu0 0
    %4849 = vmatpush.bf16.msra.mxu0 0
    %4850 = vmatpush.bf16.msra.mxu0 0
    %4851 = vmatpush.bf16.msra.mxu0 0
    %4852 = vmatpush.bf16.msra.mxu0 %v4831
    %4853 = vmatpush.bf16.msra.mxu0 %v4830
    %4854 = vmatpush.bf16.msra.mxu0 %v4829
    %4855 = vmatpush.bf16.msra.mxu0 %v4828
    %4856 = vmatmul.bf16.gmra.mxu0 %v4837
    %v4857 = vpop.f32.mrf.mxu0
    %v4858 = vadd.f32 0.0, %v4857
    %v4859 = vpop.f32.mrf.mxu0
    %v4860 = vadd.f32 0.0, %v4859
    %4861 = vmatmul.bf16.gmra.mxu0 %v4840
    %v4862 = vpop.f32.mrf.mxu0
    %v4863 = vadd.f32 0.0, %v4862
    %v4864 = vpop.f32.mrf.mxu0
    %v4865 = vadd.f32 0.0, %v4864
    %4866 = vmatmul.bf16.gmra.mxu0 %v4843
    %v4867 = vpop.f32.mrf.mxu0
    %v4868 = vadd.f32 0.0, %v4867
    %v4869 = vpop.f32.mrf.mxu0
    %v4870 = vadd.f32 0.0, %v4869
    %4871 = vmatmul.bf16.gmra.mxu0 %v4846
    %v4872 = vpop.f32.mrf.mxu0
    %v4873 = vadd.f32 0.0, %v4872
    %v4874 = vpop.f32.mrf.mxu0
    %v4875 = vadd.f32 0.0, %v4874
    %4876 = vdwg.mxu0
    %v4885 = vunpack.c.l.b16 %v3338
    %v4886 = vunpack.c.l.b16 %v3339
    %v4887 = vunpack.c.l.b16 %v3340
    %v4888 = vunpack.c.l.b16 %v3341
    %v4889 = vunpack.c.l.b16 %v3342
    %v4890 = vunpack.c.l.b16 %v3343
    %v4891 = vunpack.c.l.b16 %v3344
    %v4892 = vunpack.c.l.b16 %v3345
    %v4893 = vpack.c.b16 %v4886, %v4885
    %v4894 = vpack.c.b16 %v4888, %v4887
    %v4895 = vpack.c.b16 %v4890, %v4889
    %v4896 = vpack.c.b16 %v4892, %v4891
    %v4905 = vunpack.c.l.b16 %v3594
    %v4906 = vunpack.c.l.b16 %v3595
    %v4907 = vunpack.c.l.b16 %v3596
    %v4908 = vunpack.c.l.b16 %v3597
    %v4909 = vunpack.c.l.b16 %v3598
    %v4910 = vunpack.c.l.b16 %v3599
    %v4911 = vunpack.c.l.b16 %v3600
    %v4912 = vunpack.c.l.b16 %v3601
    %v4913 = vpack.c.b16 %v4906, %v4905
    %v4914 = vpack.c.b16 %v4908, %v4907
    %v4915 = vpack.c.b16 %v4910, %v4909
    %v4916 = vpack.c.b16 %v4912, %v4911
    %v4922 = vsel %vm617, %v4893, 0
    %v4925 = vsel %vm617, %v4894, 0
    %v4928 = vsel %vm617, %v4895, 0
    %v4931 = vsel %vm617, %v4896, 0
    %4933 = vmatpush.bf16.msra.mxu0 0
    %4934 = vmatpush.bf16.msra.mxu0 0
    %4935 = vmatpush.bf16.msra.mxu0 0
    %4936 = vmatpush.bf16.msra.mxu0 0
    %4937 = vmatpush.bf16.msra.mxu0 %v4916
    %4938 = vmatpush.bf16.msra.mxu0 %v4915
    %4939 = vmatpush.bf16.msra.mxu0 %v4914
    %4940 = vmatpush.bf16.msra.mxu0 %v4913
    %4941 = vmatmul.bf16.gmra.mxu0 %v4922
    %v4942 = vpop.f32.mrf.mxu0
    %v4943 = vadd.f32 0.0, %v4942
    %v4944 = vpop.f32.mrf.mxu0
    %v4945 = vadd.f32 0.0, %v4944
    %4946 = vmatmul.bf16.gmra.mxu0 %v4925
    %v4947 = vpop.f32.mrf.mxu0
    %v4948 = vadd.f32 0.0, %v4947
    %v4949 = vpop.f32.mrf.mxu0
    %v4950 = vadd.f32 0.0, %v4949
    %4951 = vmatmul.bf16.gmra.mxu0 %v4928
    %v4952 = vpop.f32.mrf.mxu0
    %v4953 = vadd.f32 0.0, %v4952
    %v4954 = vpop.f32.mrf.mxu0
    %v4955 = vadd.f32 0.0, %v4954
    %4956 = vmatmul.bf16.gmra.mxu0 %v4931
    %v4957 = vpop.f32.mrf.mxu0
    %v4958 = vadd.f32 0.0, %v4957
    %v4959 = vpop.f32.mrf.mxu0
    %v4960 = vadd.f32 0.0, %v4959
    %4961 = vdwg.mxu0
    %v4962 = vrcp.pop %v2836
    %v4963 = vrcp.pop %v2839
    %v4964 = vrcp.pop %v2842
    %v4965 = vrcp.pop %v2845
    %v4966 = vrcp.pop %v2848
    %v4967 = vrcp.pop %v2851
    %v4968 = vrcp.pop %v2854
    %v4969 = vrcp.pop %v2857
    %v4970 = vrcp.pop %v2860
    %v4971 = vrcp.pop %v2863
    %v4972 = vrcp.pop %v2866
    %v4973 = vrcp.pop %v2869
    %v4974 = vrcp.pop %v2872
    %v4975 = vrcp.pop %v2875
    %v4976 = vrcp.pop %v2878
    %v4977 = vrcp.pop %v2881
    %v4978 = vrcp.pop %v2884
    %v4979 = vrcp.pop %v2887
    %v4980 = vrcp.pop %v2890
    %v4981 = vrcp.pop %v2893
    %v4982 = vrcp.pop %v2896
    %v4983 = vrcp.pop %v2899
    %v4984 = vrcp.pop %v2902
    %v4985 = vrcp.pop %v2905
    %v4986 = vrcp.pop %v2908
    %v4987 = vrcp.pop %v2911
    %v4988 = vrcp.pop %v2914
    %v4989 = vrcp.pop %v2917
    %v4990 = vrcp.pop %v2920
    %v4991 = vrcp.pop %v2923
    %v4992 = vrcp.pop %v2926
    %v4993 = vrcp.pop %v2929
    %v4994 = vrcp.pop %v2932
    %v4995 = vrcp.pop %v2935
    %v4996 = vrcp.pop %v2938
    %v4997 = vrcp.pop %v2941
    %v4998 = vrcp.pop %v2944
    %v4999 = vrcp.pop %v2947
    %v5000 = vrcp.pop %v2950
    %v5001 = vrcp.pop %v2953
    %v5002 = vrcp.pop %v2956
    %v5003 = vrcp.pop %v2959
    %v5004 = vrcp.pop %v2962
    %v5005 = vrcp.pop %v2965
    %v5006 = vrcp.pop %v2968
    %v5007 = vrcp.pop %v2971
    %v5008 = vrcp.pop %v2974
    %v5009 = vrcp.pop %v2977
    %v5010 = vrcp.pop %v2980
    %v5011 = vrcp.pop %v2983
    %v5012 = vrcp.pop %v2986
    %v5013 = vrcp.pop %v2989
    %v5014 = vrcp.pop %v2992
    %v5015 = vrcp.pop %v2995
    %v5016 = vrcp.pop %v2998
    %v5017 = vrcp.pop %v3001
    %v5018 = vrcp.pop %v3004
    %v5019 = vrcp.pop %v3007
    %v5020 = vrcp.pop %v3010
    %v5021 = vrcp.pop %v3013
    %v5022 = vrcp.pop %v3016
    %v5023 = vrcp.pop %v3019
    %v5024 = vrcp.pop %v3022
    %v5025 = vrcp.pop %v3025
    %v5026 = vrcp.pop %v3028
    %v5027 = vrcp.pop %v3031
    %v5028 = vrcp.pop %v3034
    %v5029 = vrcp.pop %v3037
    %v5030 = vrcp.pop %v3040
    %v5031 = vrcp.pop %v3043
    %v5032 = vrcp.pop %v3046
    %v5033 = vrcp.pop %v3049
    %v5034 = vrcp.pop %v3052
    %v5035 = vrcp.pop %v3055
    %v5036 = vrcp.pop %v3058
    %v5037 = vrcp.pop %v3061
    %v5038 = vrcp.pop %v3064
    %v5039 = vrcp.pop %v3067
    %v5040 = vrcp.pop %v3070
    %v5041 = vrcp.pop %v3073
    %v5042 = vrcp.pop %v3076
    %v5043 = vrcp.pop %v3079
    %v5044 = vrcp.pop %v3082
    %v5045 = vrcp.pop %v3085
    %v5046 = vrcp.pop %v3088
    %v5047 = vrcp.pop %v3091
    %v5048 = vrcp.pop %v3094
    %v5049 = vrcp.pop %v3097
    %v5050 = vrcp.pop %v3100
    %v5051 = vrcp.pop %v3103
    %v5052 = vrcp.pop %v3106
    %v5053 = vrcp.pop %v3109
    %v5054 = vrcp.pop %v3112
    %v5055 = vrcp.pop %v3115
    %v5056 = vrcp.pop %v3118
    %v5057 = vrcp.pop %v3121
    %v5058 = vrcp.pop %v3124
    %v5059 = vrcp.pop %v3127
    %v5060 = vrcp.pop %v3130
    %v5061 = vrcp.pop %v3133
    %v5062 = vrcp.pop %v3136
    %v5063 = vrcp.pop %v3139
    %v5064 = vrcp.pop %v3142
    %v5065 = vrcp.pop %v3145
    %v5066 = vrcp.pop %v3148
    %v5067 = vrcp.pop %v3151
    %v5068 = vrcp.pop %v3154
    %v5069 = vrcp.pop %v3157
    %v5070 = vrcp.pop %v3160
    %v5071 = vrcp.pop %v3163
    %v5072 = vrcp.pop %v3166
    %v5073 = vrcp.pop %v3169
    %v5074 = vrcp.pop %v3172
    %v5075 = vrcp.pop %v3175
    %v5076 = vrcp.pop %v3178
    %v5077 = vrcp.pop %v3181
    %v5078 = vrcp.pop %v3184
    %v5079 = vrcp.pop %v3187
    %v5080 = vrcp.pop %v3190
    %v5081 = vrcp.pop %v3193
    %v5082 = vrcp.pop %v3196
    %v5083 = vrcp.pop %v3199
    %v5084 = vrcp.pop %v3202
    %v5085 = vrcp.pop %v3205
    %v5086 = vrcp.pop %v3208
    %v5087 = vrcp.pop %v3211
    %v5088 = vrcp.pop %v3214
    %v5089 = vrcp.pop %v3217
    %v5090 = vmul.f32 %v3668, %v4962
    %v5091 = vmul.f32 %v3670, %v4963
    %v5092 = vmul.f32 %v3673, %v4964
    %v5093 = vmul.f32 %v3675, %v4965
    %v5094 = vmul.f32 %v3678, %v4966
    %v5095 = vmul.f32 %v3680, %v4967
    %v5096 = vmul.f32 %v3683, %v4968
    %v5097 = vmul.f32 %v3685, %v4969
    %v5098 = vmul.f32 %v3753, %v4970
    %v5099 = vmul.f32 %v3755, %v4971
    %v5100 = vmul.f32 %v3758, %v4972
    %v5101 = vmul.f32 %v3760, %v4973
    %v5102 = vmul.f32 %v3763, %v4974
    %v5103 = vmul.f32 %v3765, %v4975
    %v5104 = vmul.f32 %v3768, %v4976
    %v5105 = vmul.f32 %v3770, %v4977
    %v5106 = vmul.f32 %v3838, %v4978
    %v5107 = vmul.f32 %v3840, %v4979
    %v5108 = vmul.f32 %v3843, %v4980
    %v5109 = vmul.f32 %v3845, %v4981
    %v5110 = vmul.f32 %v3848, %v4982
    %v5111 = vmul.f32 %v3850, %v4983
    %v5112 = vmul.f32 %v3853, %v4984
    %v5113 = vmul.f32 %v3855, %v4985
    %v5114 = vmul.f32 %v3923, %v4986
    %v5115 = vmul.f32 %v3925, %v4987
    %v5116 = vmul.f32 %v3928, %v4988
    %v5117 = vmul.f32 %v3930, %v4989
    %v5118 = vmul.f32 %v3933, %v4990
    %v5119 = vmul.f32 %v3935, %v4991
    %v5120 = vmul.f32 %v3938, %v4992
    %v5121 = vmul.f32 %v3940, %v4993
    %v5122 = vmul.f32 %v4008, %v4994
    %v5123 = vmul.f32 %v4010, %v4995
    %v5124 = vmul.f32 %v4013, %v4996
    %v5125 = vmul.f32 %v4015, %v4997
    %v5126 = vmul.f32 %v4018, %v4998
    %v5127 = vmul.f32 %v4020, %v4999
    %v5128 = vmul.f32 %v4023, %v5000
    %v5129 = vmul.f32 %v4025, %v5001
    %v5130 = vmul.f32 %v4093, %v5002
    %v5131 = vmul.f32 %v4095, %v5003
    %v5132 = vmul.f32 %v4098, %v5004
    %v5133 = vmul.f32 %v4100, %v5005
    %v5134 = vmul.f32 %v4103, %v5006
    %v5135 = vmul.f32 %v4105, %v5007
    %v5136 = vmul.f32 %v4108, %v5008
    %v5137 = vmul.f32 %v4110, %v5009
    %v5138 = vmul.f32 %v4178, %v5010
    %v5139 = vmul.f32 %v4180, %v5011
    %v5140 = vmul.f32 %v4183, %v5012
    %v5141 = vmul.f32 %v4185, %v5013
    %v5142 = vmul.f32 %v4188, %v5014
    %v5143 = vmul.f32 %v4190, %v5015
    %v5144 = vmul.f32 %v4193, %v5016
    %v5145 = vmul.f32 %v4195, %v5017
    %v5146 = vmul.f32 %v4263, %v5018
    %v5147 = vmul.f32 %v4265, %v5019
    %v5148 = vmul.f32 %v4268, %v5020
    %v5149 = vmul.f32 %v4270, %v5021
    %v5150 = vmul.f32 %v4273, %v5022
    %v5151 = vmul.f32 %v4275, %v5023
    %v5152 = vmul.f32 %v4278, %v5024
    %v5153 = vmul.f32 %v4280, %v5025
    %v5154 = vmul.f32 %v4348, %v5026
    %v5155 = vmul.f32 %v4350, %v5027
    %v5156 = vmul.f32 %v4353, %v5028
    %v5157 = vmul.f32 %v4355, %v5029
    %v5158 = vmul.f32 %v4358, %v5030
    %v5159 = vmul.f32 %v4360, %v5031
    %v5160 = vmul.f32 %v4363, %v5032
    %v5161 = vmul.f32 %v4365, %v5033
    %v5162 = vmul.f32 %v4433, %v5034
    %v5163 = vmul.f32 %v4435, %v5035
    %v5164 = vmul.f32 %v4438, %v5036
    %v5165 = vmul.f32 %v4440, %v5037
    %v5166 = vmul.f32 %v4443, %v5038
    %v5167 = vmul.f32 %v4445, %v5039
    %v5168 = vmul.f32 %v4448, %v5040
    %v5169 = vmul.f32 %v4450, %v5041
    %v5170 = vmul.f32 %v4518, %v5042
    %v5171 = vmul.f32 %v4520, %v5043
    %v5172 = vmul.f32 %v4523, %v5044
    %v5173 = vmul.f32 %v4525, %v5045
    %v5174 = vmul.f32 %v4528, %v5046
    %v5175 = vmul.f32 %v4530, %v5047
    %v5176 = vmul.f32 %v4533, %v5048
    %v5177 = vmul.f32 %v4535, %v5049
    %v5178 = vmul.f32 %v4603, %v5050
    %v5179 = vmul.f32 %v4605, %v5051
    %v5180 = vmul.f32 %v4608, %v5052
    %v5181 = vmul.f32 %v4610, %v5053
    %v5182 = vmul.f32 %v4613, %v5054
    %v5183 = vmul.f32 %v4615, %v5055
    %v5184 = vmul.f32 %v4618, %v5056
    %v5185 = vmul.f32 %v4620, %v5057
    %v5186 = vmul.f32 %v4688, %v5058
    %v5187 = vmul.f32 %v4690, %v5059
    %v5188 = vmul.f32 %v4693, %v5060
    %v5189 = vmul.f32 %v4695, %v5061
    %v5190 = vmul.f32 %v4698, %v5062
    %v5191 = vmul.f32 %v4700, %v5063
    %v5192 = vmul.f32 %v4703, %v5064
    %v5193 = vmul.f32 %v4705, %v5065
    %v5194 = vmul.f32 %v4773, %v5066
    %v5195 = vmul.f32 %v4775, %v5067
    %v5196 = vmul.f32 %v4778, %v5068
    %v5197 = vmul.f32 %v4780, %v5069
    %v5198 = vmul.f32 %v4783, %v5070
    %v5199 = vmul.f32 %v4785, %v5071
    %v5200 = vmul.f32 %v4788, %v5072
    %v5201 = vmul.f32 %v4790, %v5073
    %v5202 = vmul.f32 %v4858, %v5074
    %v5203 = vmul.f32 %v4860, %v5075
    %v5204 = vmul.f32 %v4863, %v5076
    %v5205 = vmul.f32 %v4865, %v5077
    %v5206 = vmul.f32 %v4868, %v5078
    %v5207 = vmul.f32 %v4870, %v5079
    %v5208 = vmul.f32 %v4873, %v5080
    %v5209 = vmul.f32 %v4875, %v5081
    %v5210 = vmul.f32 %v4943, %v5082
    %v5211 = vmul.f32 %v4945, %v5083
    %v5212 = vmul.f32 %v4948, %v5084
    %v5213 = vmul.f32 %v4950, %v5085
    %v5214 = vmul.f32 %v4953, %v5086
    %v5215 = vmul.f32 %v4955, %v5087
    %v5216 = vmul.f32 %v4958, %v5088
    %v5217 = vmul.f32 %v4960, %v5089
    %5218 = vst.msk [vmem:[#allocation10] sm:$0xff] %vm617, %v5090
    %5219 = vst.msk [vmem:[#allocation10 + $0x8] sm:$0xff] %vm617, %v5091
    %5220 = vst.msk [vmem:[#allocation10 + $0x10] sm:$0xff] %vm617, %v5092
    %5221 = vst.msk [vmem:[#allocation10 + $0x18] sm:$0xff] %vm617, %v5093
    %5222 = vst.msk [vmem:[#allocation10 + $0x20] sm:$0xff] %vm617, %v5094
    %5223 = vst.msk [vmem:[#allocation10 + $0x28] sm:$0xff] %vm617, %v5095
    %5224 = vst.msk [vmem:[#allocation10 + $0x30] sm:$0xff] %vm617, %v5096
    %5225 = vst.msk [vmem:[#allocation10 + $0x38] sm:$0xff] %vm617, %v5097
    %5226 = vst.msk [vmem:[#allocation10 + $0x40] sm:$0xff] %vm617, %v5098
    %5227 = vst.msk [vmem:[#allocation10 + $0x48] sm:$0xff] %vm617, %v5099
    %5228 = vst.msk [vmem:[#allocation10 + $0x50] sm:$0xff] %vm617, %v5100
    %5229 = vst.msk [vmem:[#allocation10 + $0x58] sm:$0xff] %vm617, %v5101
    %5230 = vst.msk [vmem:[#allocation10 + $0x60] sm:$0xff] %vm617, %v5102
    %5231 = vst.msk [vmem:[#allocation10 + $0x68] sm:$0xff] %vm617, %v5103
    %5232 = vst.msk [vmem:[#allocation10 + $0x70] sm:$0xff] %vm617, %v5104
    %5233 = vst.msk [vmem:[#allocation10 + $0x78] sm:$0xff] %vm617, %v5105
    %5234 = vst.msk [vmem:[#allocation10 + $0x80] sm:$0xff] %vm617, %v5106
    %5235 = vst.msk [vmem:[#allocation10 + $0x88] sm:$0xff] %vm617, %v5107
    %5236 = vst.msk [vmem:[#allocation10 + $0x90] sm:$0xff] %vm617, %v5108
    %5237 = vst.msk [vmem:[#allocation10 + $0x98] sm:$0xff] %vm617, %v5109
    %5238 = vst.msk [vmem:[#allocation10 + $0xa0] sm:$0xff] %vm617, %v5110
    %5239 = vst.msk [vmem:[#allocation10 + $0xa8] sm:$0xff] %vm617, %v5111
    %5240 = vst.msk [vmem:[#allocation10 + $0xb0] sm:$0xff] %vm617, %v5112
    %5241 = vst.msk [vmem:[#allocation10 + $0xb8] sm:$0xff] %vm617, %v5113
    %5242 = vst.msk [vmem:[#allocation10 + $0xc0] sm:$0xff] %vm617, %v5114
    %5243 = vst.msk [vmem:[#allocation10 + $0xc8] sm:$0xff] %vm617, %v5115
    %5244 = vst.msk [vmem:[#allocation10 + $0xd0] sm:$0xff] %vm617, %v5116
    %5245 = vst.msk [vmem:[#allocation10 + $0xd8] sm:$0xff] %vm617, %v5117
    %5246 = vst.msk [vmem:[#allocation10 + $0xe0] sm:$0xff] %vm617, %v5118
    %5247 = vst.msk [vmem:[#allocation10 + $0xe8] sm:$0xff] %vm617, %v5119
    %5248 = vst.msk [vmem:[#allocation10 + $0xf0] sm:$0xff] %vm617, %v5120
    %5249 = vst.msk [vmem:[#allocation10 + $0xf8] sm:$0xff] %vm617, %v5121
    %5250 = vst.msk [vmem:[#allocation10 + $0x100] sm:$0xff] %vm617, %v5122
    %5251 = vst.msk [vmem:[#allocation10 + $0x108] sm:$0xff] %vm617, %v5123
    %5252 = vst.msk [vmem:[#allocation10 + $0x110] sm:$0xff] %vm617, %v5124
    %5253 = vst.msk [vmem:[#allocation10 + $0x118] sm:$0xff] %vm617, %v5125
    %5254 = vst.msk [vmem:[#allocation10 + $0x120] sm:$0xff] %vm617, %v5126
    %5255 = vst.msk [vmem:[#allocation10 + $0x128] sm:$0xff] %vm617, %v5127
    %5256 = vst.msk [vmem:[#allocation10 + $0x130] sm:$0xff] %vm617, %v5128
    %5257 = vst.msk [vmem:[#allocation10 + $0x138] sm:$0xff] %vm617, %v5129
    %5258 = vst.msk [vmem:[#allocation10 + $0x140] sm:$0xff] %vm617, %v5130
    %5259 = vst.msk [vmem:[#allocation10 + $0x148] sm:$0xff] %vm617, %v5131
    %5260 = vst.msk [vmem:[#allocation10 + $0x150] sm:$0xff] %vm617, %v5132
    %5261 = vst.msk [vmem:[#allocation10 + $0x158] sm:$0xff] %vm617, %v5133
    %5262 = vst.msk [vmem:[#allocation10 + $0x160] sm:$0xff] %vm617, %v5134
    %5263 = vst.msk [vmem:[#allocation10 + $0x168] sm:$0xff] %vm617, %v5135
    %5264 = vst.msk [vmem:[#allocation10 + $0x170] sm:$0xff] %vm617, %v5136
    %5265 = vst.msk [vmem:[#allocation10 + $0x178] sm:$0xff] %vm617, %v5137
    %5266 = vst.msk [vmem:[#allocation10 + $0x180] sm:$0xff] %vm617, %v5138
    %5267 = vst.msk [vmem:[#allocation10 + $0x188] sm:$0xff] %vm617, %v5139
    %5268 = vst.msk [vmem:[#allocation10 + $0x190] sm:$0xff] %vm617, %v5140
    %5269 = vst.msk [vmem:[#allocation10 + $0x198] sm:$0xff] %vm617, %v5141
    %5270 = vst.msk [vmem:[#allocation10 + $0x1a0] sm:$0xff] %vm617, %v5142
    %5271 = vst.msk [vmem:[#allocation10 + $0x1a8] sm:$0xff] %vm617, %v5143
    %5272 = vst.msk [vmem:[#allocation10 + $0x1b0] sm:$0xff] %vm617, %v5144
    %5273 = vst.msk [vmem:[#allocation10 + $0x1b8] sm:$0xff] %vm617, %v5145
    %5274 = vst.msk [vmem:[#allocation10 + $0x1c0] sm:$0xff] %vm617, %v5146
    %5275 = vst.msk [vmem:[#allocation10 + $0x1c8] sm:$0xff] %vm617, %v5147
    %5276 = vst.msk [vmem:[#allocation10 + $0x1d0] sm:$0xff] %vm617, %v5148
    %5277 = vst.msk [vmem:[#allocation10 + $0x1d8] sm:$0xff] %vm617, %v5149
    %5278 = vst.msk [vmem:[#allocation10 + $0x1e0] sm:$0xff] %vm617, %v5150
    %5279 = vst.msk [vmem:[#allocation10 + $0x1e8] sm:$0xff] %vm617, %v5151
    %5280 = vst.msk [vmem:[#allocation10 + $0x1f0] sm:$0xff] %vm617, %v5152
    %5281 = vst.msk [vmem:[#allocation10 + $0x1f8] sm:$0xff] %vm617, %v5153
    %5282 = vst.msk [vmem:[#allocation10 + $0x200] sm:$0xff] %vm617, %v5154
    %5283 = vst.msk [vmem:[#allocation10 + $0x208] sm:$0xff] %vm617, %v5155
    %5284 = vst.msk [vmem:[#allocation10 + $0x210] sm:$0xff] %vm617, %v5156
    %5285 = vst.msk [vmem:[#allocation10 + $0x218] sm:$0xff] %vm617, %v5157
    %5286 = vst.msk [vmem:[#allocation10 + $0x220] sm:$0xff] %vm617, %v5158
    %5287 = vst.msk [vmem:[#allocation10 + $0x228] sm:$0xff] %vm617, %v5159
    %5288 = vst.msk [vmem:[#allocation10 + $0x230] sm:$0xff] %vm617, %v5160
    %5289 = vst.msk [vmem:[#allocation10 + $0x238] sm:$0xff] %vm617, %v5161
    %5290 = vst.msk [vmem:[#allocation10 + $0x240] sm:$0xff] %vm617, %v5162
    %5291 = vst.msk [vmem:[#allocation10 + $0x248] sm:$0xff] %vm617, %v5163
    %5292 = vst.msk [vmem:[#allocation10 + $0x250] sm:$0xff] %vm617, %v5164
    %5293 = vst.msk [vmem:[#allocation10 + $0x258] sm:$0xff] %vm617, %v5165
    %5294 = vst.msk [vmem:[#allocation10 + $0x260] sm:$0xff] %vm617, %v5166
    %5295 = vst.msk [vmem:[#allocation10 + $0x268] sm:$0xff] %vm617, %v5167
    %5296 = vst.msk [vmem:[#allocation10 + $0x270] sm:$0xff] %vm617, %v5168
    %5297 = vst.msk [vmem:[#allocation10 + $0x278] sm:$0xff] %vm617, %v5169
    %5298 = vst.msk [vmem:[#allocation10 + $0x280] sm:$0xff] %vm617, %v5170
    %5299 = vst.msk [vmem:[#allocation10 + $0x288] sm:$0xff] %vm617, %v5171
    %5300 = vst.msk [vmem:[#allocation10 + $0x290] sm:$0xff] %vm617, %v5172
    %5301 = vst.msk [vmem:[#allocation10 + $0x298] sm:$0xff] %vm617, %v5173
    %5302 = vst.msk [vmem:[#allocation10 + $0x2a0] sm:$0xff] %vm617, %v5174
    %5303 = vst.msk [vmem:[#allocation10 + $0x2a8] sm:$0xff] %vm617, %v5175
    %5304 = vst.msk [vmem:[#allocation10 + $0x2b0] sm:$0xff] %vm617, %v5176
    %5305 = vst.msk [vmem:[#allocation10 + $0x2b8] sm:$0xff] %vm617, %v5177
    %5306 = vst.msk [vmem:[#allocation10 + $0x2c0] sm:$0xff] %vm617, %v5178
    %5307 = vst.msk [vmem:[#allocation10 + $0x2c8] sm:$0xff] %vm617, %v5179
    %5308 = vst.msk [vmem:[#allocation10 + $0x2d0] sm:$0xff] %vm617, %v5180
    %5309 = vst.msk [vmem:[#allocation10 + $0x2d8] sm:$0xff] %vm617, %v5181
    %5310 = vst.msk [vmem:[#allocation10 + $0x2e0] sm:$0xff] %vm617, %v5182
    %5311 = vst.msk [vmem:[#allocation10 + $0x2e8] sm:$0xff] %vm617, %v5183
    %5312 = vst.msk [vmem:[#allocation10 + $0x2f0] sm:$0xff] %vm617, %v5184
    %5313 = vst.msk [vmem:[#allocation10 + $0x2f8] sm:$0xff] %vm617, %v5185
    %5314 = vst.msk [vmem:[#allocation10 + $0x300] sm:$0xff] %vm617, %v5186
    %5315 = vst.msk [vmem:[#allocation10 + $0x308] sm:$0xff] %vm617, %v5187
    %5316 = vst.msk [vmem:[#allocation10 + $0x310] sm:$0xff] %vm617, %v5188
    %5317 = vst.msk [vmem:[#allocation10 + $0x318] sm:$0xff] %vm617, %v5189
    %5318 = vst.msk [vmem:[#allocation10 + $0x320] sm:$0xff] %vm617, %v5190
    %5319 = vst.msk [vmem:[#allocation10 + $0x328] sm:$0xff] %vm617, %v5191
    %5320 = vst.msk [vmem:[#allocation10 + $0x330] sm:$0xff] %vm617, %v5192
    %5321 = vst.msk [vmem:[#allocation10 + $0x338] sm:$0xff] %vm617, %v5193
    %5322 = vst.msk [vmem:[#allocation10 + $0x340] sm:$0xff] %vm617, %v5194
    %5323 = vst.msk [vmem:[#allocation10 + $0x348] sm:$0xff] %vm617, %v5195
    %5324 = vst.msk [vmem:[#allocation10 + $0x350] sm:$0xff] %vm617, %v5196
    %5325 = vst.msk [vmem:[#allocation10 + $0x358] sm:$0xff] %vm617, %v5197
    %5326 = vst.msk [vmem:[#allocation10 + $0x360] sm:$0xff] %vm617, %v5198
    %5327 = vst.msk [vmem:[#allocation10 + $0x368] sm:$0xff] %vm617, %v5199
    %5328 = vst.msk [vmem:[#allocation10 + $0x370] sm:$0xff] %vm617, %v5200
    %5329 = vst.msk [vmem:[#allocation10 + $0x378] sm:$0xff] %vm617, %v5201
    %5330 = vst.msk [vmem:[#allocation10 + $0x380] sm:$0xff] %vm617, %v5202
    %5331 = vst.msk [vmem:[#allocation10 + $0x388] sm:$0xff] %vm617, %v5203
    %5332 = vst.msk [vmem:[#allocation10 + $0x390] sm:$0xff] %vm617, %v5204
    %5333 = vst.msk [vmem:[#allocation10 + $0x398] sm:$0xff] %vm617, %v5205
    %5334 = vst.msk [vmem:[#allocation10 + $0x3a0] sm:$0xff] %vm617, %v5206
    %5335 = vst.msk [vmem:[#allocation10 + $0x3a8] sm:$0xff] %vm617, %v5207
    %5336 = vst.msk [vmem:[#allocation10 + $0x3b0] sm:$0xff] %vm617, %v5208
    %5337 = vst.msk [vmem:[#allocation10 + $0x3b8] sm:$0xff] %vm617, %v5209
    %5338 = vst.msk [vmem:[#allocation10 + $0x3c0] sm:$0xff] %vm617, %v5210
    %5339 = vst.msk [vmem:[#allocation10 + $0x3c8] sm:$0xff] %vm617, %v5211
    %5340 = vst.msk [vmem:[#allocation10 + $0x3d0] sm:$0xff] %vm617, %v5212
    %5341 = vst.msk [vmem:[#allocation10 + $0x3d8] sm:$0xff] %vm617, %v5213
    %5342 = vst.msk [vmem:[#allocation10 + $0x3e0] sm:$0xff] %vm617, %v5214
    %5343 = vst.msk [vmem:[#allocation10 + $0x3e8] sm:$0xff] %vm617, %v5215
    %5344 = vst.msk [vmem:[#allocation10 + $0x3f0] sm:$0xff] %vm617, %v5216
    %5345 = vst.msk [vmem:[#allocation10 + $0x3f8] sm:$0xff] %vm617, %v5217
    // Predicated region
    $region26: #{tpu_custom_call.1} parent=1 // pred_check
      _
    $region27: #{tpu_custom_call.1} parent=1 // pred_check_branch
      %5347 = sbr.rel (0) target = $region29
    $region28: #{tpu_custom_call.1} parent=1 // pred_region
      %5349 = vsyncadd [#allocation6], 0
      %s5350 = sshll.u32 [#allocation10], 4
      %s5351 = int_to_ptr.vmem [resolvable:$true] %s5350
      %s5352 = sshll.u32 %s4, 4
      %s5353 = int_to_ptr.hbm [resolvable:$true] %s5352
      %5358 = dma.vmem_to_hbm [thread:$0]  %s5351, 16384, %s5353, [#allocation6], 128, 128, 8
    $region29: #{tpu_custom_call.1} parent=1 // pred_fallthru
      _
    // Predicated region
    $region30: #{tpu_custom_call.1} parent=1 // pred_check
      _
    $region31: #{tpu_custom_call.1} parent=1 // pred_check_branch
      %5360 = sbr.rel (0) target = $region33
    $region32: #{tpu_custom_call.1} parent=1 // pred_region
      %5362 = dma.done [#allocation6], 16384
    $region33: #{tpu_custom_call.1} parent=1 // pred_fallthru
      _
    %5363 = vsyncpa [#allocation5], 1
    %5364 = vsyncpa [#allocation8], 1
    %5365 = vsyncpa [#allocation6], 1

</llo_original>
